<compile_context>
chip_gen: v6e
topology: v6e:2x2x1
jax: 0.10.0
libtpu: 0.0.40
codegen_flags: <defaults>
</compile_context>

<pallas_src>
import functools

import jax
import jax.numpy as jnp
import numpy as np
from jax.experimental import pallas as pl
from jax.experimental.pallas import tpu as pltpu


# ----------------------------------------------------------------------------
# Pallas kernel: one tile of target nodes (all K motifs + MLP).
# ----------------------------------------------------------------------------
def sdr_kernel(mask_ref, asrc_ref, adst_ref, h1x_ref, g_ref, w2_ref, b2_ref,
               out_ref, alpha_scr, *, num_motifs, n_nodes):
    f32, bf16 = jnp.float32, jnp.bfloat16
    K, N = num_motifs, n_nodes
    neg_inf = jnp.float32(-1e30)

    for k in range(K):                                   # static unroll, K small
        # e[i, j] = LeakyReLU(a_dst[i] + a_src[j], 0.2), masked to -1e30 off-edge
        e = adst_ref[k] + asrc_ref[k:k + 1, :]           # [T,1] + [1,N] -> [T,N]
        e = jnp.maximum(e, 0.2 * e)                      # LeakyReLU(0.2)
        e = jnp.where(mask_ref[k] != 0, e, neg_inf)      # f32 select, int8 mask

        # Masked softmax over incoming edges (self-loop keeps denom > 0).
        e_max = jnp.max(e, axis=-1, keepdims=True)
        p = jnp.exp(e - e_max)
        denom = jnp.sum(p, axis=-1, keepdims=True)
        alpha = p * pl.reciprocal(denom, approx=True)    # EUP vrcp

        # Stash alpha_k at lane offset k*N (N % 128 == 0 -> aligned store).
        alpha_scr[:, k * N:(k + 1) * N] = alpha.astype(bf16)

    # One deep-contraction MXU pass replaces 2*K tiny matmuls:
    #   h1 = x@w1x + b1_eff  +  sum_k alpha_k @ (H_k @ w1n_k)
    h1 = h1x_ref[...] + jnp.dot(alpha_scr[...], g_ref[...],
                                preferred_element_type=jnp.float32)
    h1 = jnp.tanh(h1)
    out_ref[...] = jnp.dot(h1.astype(bf16), w2_ref[...],
                           preferred_element_type=jnp.float32) + b2_ref[...]


# ----------------------------------------------------------------------------
# Wrapper-side packing: all tile-invariant math done once, outside the grid.
# ----------------------------------------------------------------------------
def _pack_inputs(x, masks, W, att_src, att_dst, gat_bias, w1, b1, w2, b2):
    f32, bf16 = jnp.float32, jnp.bfloat16
    N, din = x.shape
    K, _, D = W.shape
    dh = w1.shape[1]

    x_bf = x.astype(bf16)

    # Fused per-motif projection H = x @ W_all (one lane-dense matmul).
    wall = jnp.transpose(W, (1, 0, 2)).reshape(din, K * D)                  # [Din, K*D]
    H = jnp.dot(x_bf, wall.astype(bf16), preferred_element_type=f32)        # [N, K*D]

    # Attention logits with att vectors folded into W (hoisted, computed once).
    ws = jnp.einsum('kcd,kd->ck', W, att_src[:, 0, :])                      # [Din, K]
    wd = jnp.einsum('kcd,kd->ck', W, att_dst[:, 0, :])                      # [Din, K]
    a_src = jnp.dot(x_bf, ws.astype(bf16), preferred_element_type=f32).T    # [K, N]
    a_dst = jnp.dot(x_bf, wd.astype(bf16), preferred_element_type=f32).T    # [K, N]
    a_dst = a_dst[:, :, None]                                               # [K, N, 1]

    # Fold w1 into the hoisted pieces: MLP layer 1 split as
    #   h1 = x@w1x + sum_k (alpha_k @ H_k) @ w1n_k + b1_eff
    # with G_k = H_k @ w1n_k precomputed and stacked -> [K*N, Dh].
    w1x = w1[:din]                                                          # [Din, Dh]
    w1n = w1[din:]                                                          # [K*D, Dh]
    G = jnp.einsum('nkd,kdh->knh',
                   H.reshape(N, K, D).astype(bf16),
                   w1n.reshape(K, D, dh).astype(bf16),
                   preferred_element_type=f32).reshape(K * N, dh).astype(bf16)

    # GAT bias only enters via (out_k + bias_k) @ w1n_k -> fold into b1.
    b1_eff = b1 + gat_bias.reshape(1, K * D) @ w1n                          # [1, Dh] f32
    h1x = jnp.dot(x_bf, w1x.astype(bf16), preferred_element_type=f32) + b1_eff

    # int8 mask (half the HBM stream of the previous bf16 additive bias).
    mask_i8 = (masks > 0).astype(jnp.int8)                                  # [K, N, N]

    return (mask_i8, a_src.astype(f32), a_dst.astype(f32), h1x.astype(f32),
            G, w2.astype(bf16), b2.astype(f32))


def sdr_layer_pallas(x, masks, W, att_src, att_dst, gat_bias, w1, b1, w2, b2,
                     *, tile_n=128):
    # tile_n=128 works on every generation; use 256 on v6e/v7x for the 256x256 MXU.
    N, _ = x.shape
    K = masks.shape[0]
    d_out = w2.shape[1]
    assert N % tile_n == 0, "pad the node count to a multiple of tile_n"
    assert N % 128 == 0, "source axis must be lane-aligned"

    mask_i8, a_src, a_dst, h1x, G, w2_bf, b2_f = _pack_inputs(
        x, masks, W, att_src, att_dst, gat_bias, w1, b1, w2, b2)
    dh = G.shape[1]

    grid = (N // tile_n,)
    in_specs = [
        pl.BlockSpec((K, tile_n, N), lambda i: (0, i, 0)),    # mask (streamed, int8)
        pl.BlockSpec((K, N), lambda i: (0, 0)),               # a_src (resident)
        pl.BlockSpec((K, tile_n, 1), lambda i: (0, i, 0)),    # a_dst (streamed)
        pl.BlockSpec((tile_n, dh), lambda i: (i, 0)),         # h1x (streamed)
        pl.BlockSpec((K * N, dh), lambda i: (0, 0)),          # G (resident)
        pl.BlockSpec(w2_bf.shape, lambda i: (0, 0)),          # w2 (resident)
        pl.BlockSpec(b2_f.shape, lambda i: (0, 0)),           # b2 (resident)
    ]

    kernel = functools.partial(sdr_kernel, num_motifs=K, n_nodes=N)
    return pl.pallas_call(
        kernel,
        out_shape=jax.ShapeDtypeStruct((N, d_out), jnp.float32),
        grid=grid,
        in_specs=in_specs,
        out_specs=pl.BlockSpec((tile_n, d_out), lambda i: (i, 0)),
        scratch_shapes=[pltpu.VMEM((tile_n, K * N), jnp.bfloat16)],
        compiler_params=pltpu.CompilerParams(
            dimension_semantics=("parallel",),        # shard tiles across TCs on v7x
            vmem_limit_bytes=32 * 1024 * 1024),
    )(mask_i8, a_src, a_dst, h1x, G, w2_bf, b2_f)


# ----------------------------------------------------------------------------
# References: original f32 math, and a bf16-matched reference for the assert.
# ----------------------------------------------------------------------------
def sdr_layer_ref_f32(x, masks, W, att_src, att_dst, gat_bias, w1, b1, w2, b2):
    feats = [x]
    K = masks.shape[0]
    for k in range(K):
        h = x @ W[k]
        a_src = jnp.sum(h * att_src[k], axis=-1, keepdims=True)
        a_dst = jnp.sum(h * att_dst[k], axis=-1, keepdims=True)
        e = a_dst + a_src.T
        e = jnp.where(e > 0, e, 0.2 * e)
        mask = masks[k]
        e = jnp.where(mask > 0, e, -1e30)
        p = jnp.exp(e - jnp.max(e, axis=-1, keepdims=True)) * mask
        alpha = p / jnp.sum(p, axis=-1, keepdims=True)
        feats.append(alpha @ h + gat_bias[k])
    combined = jnp.concatenate(feats, axis=-1)
    h1 = jnp.tanh(combined @ w1 + b1)
    return h1 @ w2 + b2


def sdr_layer_ref_bf16(x, masks, W, att_src, att_dst, gat_bias, w1, b1, w2, b2):
    # Mirrors the kernel math exactly (same packing, bf16 MXU operands, f32 acc).
    f32, bf16 = jnp.float32, jnp.bfloat16
    mask_i8, a_src, a_dst, h1x, G, w2_bf, b2_f = _pack_inputs(
        x, masks, W, att_src, att_dst, gat_bias, w1, b1, w2, b2)
    K = masks.shape[0]
    alphas = []
    for k in range(K):
        e = a_dst[k] + a_src[k:k + 1, :]
        e = jnp.maximum(e, 0.2 * e)
        e = jnp.where(mask_i8[k] != 0, e, jnp.float32(-1e30))
        p = jnp.exp(e - jnp.max(e, axis=-1, keepdims=True))
        alpha = p / jnp.sum(p, axis=-1, keepdims=True)
        alphas.append(alpha.astype(bf16))
    alpha_all = jnp.concatenate(alphas, axis=-1)
    h1 = h1x + jnp.dot(alpha_all, G, preferred_element_type=f32)
    h1 = jnp.tanh(h1)
    return jnp.dot(h1.astype(bf16), w2_bf, preferred_element_type=f32) + b2_f


# ----------------------------------------------------------------------------
# Driver
# ----------------------------------------------------------------------------
if __name__ == "__main__":
    N = 256           # number of nodes (multiple of the 128-row tile)
    in_dim = 32       # input feature dim
    out_dim = 32      # output feature dim (== in_dim, as SDGNN assumes)
    K = 4             # number of motif edge lists (SDGNN uses 4)
    E = 512           # edges per motif

    key = jax.random.PRNGKey(0)
    keys = jax.random.split(key, 16)

    x = jax.random.normal(keys[0], (N, in_dim), dtype=jnp.float32)

    # deterministic random edge lists -> dense masks with self-loops
    masks = []
    for k in range(K):
        src = jax.random.randint(keys[1 + 2 * k], (E,), 0, N)
        dst = jax.random.randint(keys[2 + 2 * k], (E,), 0, N)
        m = jnp.zeros((N, N), dtype=jnp.float32)
        m = m.at[dst, src].set(1.0)                          # edge j -> i
        m = m.at[jnp.arange(N), jnp.arange(N)].set(1.0)      # add_self_loops=True
        masks.append(m)
    masks = jnp.stack(masks, axis=0)                         # [K, N, N]

    # GATConv parameters, one per motif
    pk = jax.random.split(keys[9], 3 * K + 6)
    glorot = lambda kk, shape: (jax.random.normal(kk, shape, jnp.float32)
                                * jnp.sqrt(2.0 / (shape[-2] + shape[-1])))
    W = jnp.stack([glorot(pk[i], (in_dim, out_dim)) for i in range(K)])           # [K,Din,D]
    att_src = jnp.stack([glorot(pk[K + i], (1, out_dim)) for i in range(K)])      # [K,1,D]
    att_dst = jnp.stack([glorot(pk[2 * K + i], (1, out_dim)) for i in range(K)])  # [K,1,D]
    gat_bias = 0.1 * jax.random.normal(pk[3 * K + 2], (K, 1, out_dim), jnp.float32)

    # MLP: Linear(in_dim*(K+1), out_dim) -> Tanh -> Linear(out_dim, out_dim)
    fan1 = in_dim * (K + 1)
    w1 = jax.random.normal(pk[3 * K], (fan1, out_dim), jnp.float32) * jnp.sqrt(2.0 / fan1)
    b1 = 0.1 * jax.random.normal(pk[3 * K + 3], (1, out_dim), jnp.float32)
    w2 = jax.random.normal(pk[3 * K + 1], (out_dim, out_dim), jnp.float32) * jnp.sqrt(2.0 / out_dim)
    b2 = 0.1 * jax.random.normal(pk[3 * K + 4], (1, out_dim), jnp.float32)

    args = (x, masks, W, att_src, att_dst, gat_bias, w1, b1, w2, b2)

    out = jax.block_until_ready(jax.jit(sdr_layer_pallas)(*args))
    ref_bf16 = jax.block_until_ready(jax.jit(sdr_layer_ref_bf16)(*args))
    ref_f32 = jax.block_until_ready(jax.jit(sdr_layer_ref_f32)(*args))

    # Tight check vs a reference using the same (bf16-operand) math.
    np.testing.assert_allclose(np.asarray(out), np.asarray(ref_bf16),
                               rtol=2e-2, atol=2e-2)
    # Loose semantic check vs the original full-f32 math (bf16 drift bound).
    max_err = float(jnp.max(jnp.abs(out - ref_f32)))
    assert max_err < 0.25, f"bf16 drift vs f32 reference too large: {max_err}"

    print("KERNEL_OK")
</pallas_src>

<mosaic_0001>
module attributes {stable_mosaic.version = 11 : i64} {
  func.func @sdr_kernel(%arg0: i32, %arg1: memref<4x128x256xi8, #tpu.memory_space<vmem>>, %arg2: memref<4x256xf32, #tpu.memory_space<vmem>>, %arg3: memref<4x128x1xf32, #tpu.memory_space<vmem>>, %arg4: memref<128x32xf32, #tpu.memory_space<vmem>>, %arg5: memref<1024x32xbf16, #tpu.memory_space<vmem>>, %arg6: memref<32x32xbf16, #tpu.memory_space<vmem>>, %arg7: memref<1x32xf32, #tpu.memory_space<vmem>>, %arg8: memref<128x32xf32, #tpu.memory_space<vmem>>, %arg9: memref<128x1024xbf16, #tpu.memory_space<vmem>>) attributes {dimension_semantics = [#tpu.dimension_semantics<parallel>], iteration_bounds = array<i64: 2>, scalar_prefetch = 0 : i64, scratch_operands = 1 : i64, tpu.core_type = #tpu.core_type<tc>, window_params = [{transform_indices = @transform_0, window_bounds = array<i64: 4, 128, 256>}, {pipeline_mode = #tpu.pipeline_mode<synchronous>, transform_indices = @transform_1, window_bounds = array<i64: 4, 256>}, {transform_indices = @transform_2, window_bounds = array<i64: 4, 128, 1>}, {transform_indices = @transform_3, window_bounds = array<i64: 128, 32>}, {pipeline_mode = #tpu.pipeline_mode<synchronous>, transform_indices = @transform_4, window_bounds = array<i64: 1024, 32>}, {pipeline_mode = #tpu.pipeline_mode<synchronous>, transform_indices = @transform_5, window_bounds = array<i64: 32, 32>}, {pipeline_mode = #tpu.pipeline_mode<synchronous>, transform_indices = @transform_6, window_bounds = array<i64: 1, 32>}, {transform_indices = @transform_7, window_bounds = array<i64: 128, 32>}]} {
    %c0 = arith.constant 0 : index
    %c0_0 = arith.constant 0 : index
    %c0_1 = arith.constant 0 : index
    %0 = vector.load %arg3[%c0, %c0_0, %c0_1] : memref<4x128x1xf32, #tpu.memory_space<vmem>>, vector<1x128x1xf32>
    %1 = vector.shape_cast %0 : vector<1x128x1xf32> to vector<128x1xf32>
    %c0_2 = arith.constant 0 : index
    %c0_3 = arith.constant 0 : index
    %2 = vector.load %arg2[%c0_2, %c0_3] : memref<4x256xf32, #tpu.memory_space<vmem>>, vector<1x256xf32>
    %3 = vector.broadcast %1 : vector<128x1xf32> to vector<128x256xf32>
    %4 = vector.broadcast %2 : vector<1x256xf32> to vector<128x256xf32>
    %5 = arith.addf %3, %4 : vector<128x256xf32>
    %cst = arith.constant 2.000000e-01 : f32
    %6 = vector.broadcast %cst : f32 to vector<128x256xf32>
    %7 = arith.mulf %6, %5 : vector<128x256xf32>
    %8 = arith.maximumf %5, %7 : vector<128x256xf32>
    %c0_4 = arith.constant 0 : index
    %c0_5 = arith.constant 0 : index
    %c0_6 = arith.constant 0 : index
    %9 = vector.load %arg1[%c0_4, %c0_5, %c0_6] : memref<4x128x256xi8, #tpu.memory_space<vmem>>, vector<1x128x256xi8>
    %10 = vector.shape_cast %9 : vector<1x128x256xi8> to vector<128x256xi8>
    %c0_i8 = arith.constant 0 : i8
    %11 = vector.broadcast %c0_i8 : i8 to vector<128x256xi8>
    %12 = arith.cmpi ne, %10, %11 : vector<128x256xi8>
    %cst_7 = arith.constant -1.000000e+30 : f32
    %13 = vector.broadcast %cst_7 : f32 to vector<128x256xf32>
    %14 = arith.select %12, %8, %13 : vector<128x256xi1>, vector<128x256xf32>
    %cst_8 = arith.constant dense<0xFF800000> : vector<128xf32>
    %15 = vector.multi_reduction <maximumf>, %14, %cst_8 [1] : vector<128x256xf32> to vector<128xf32>
    %16 = vector.shape_cast %15 : vector<128xf32> to vector<128x1xf32>
    %17 = vector.broadcast %16 : vector<128x1xf32> to vector<128x256xf32>
    %18 = arith.subf %14, %17 : vector<128x256xf32>
    %19 = math.exp %18 : vector<128x256xf32>
    %cst_9 = arith.constant dense<0.000000e+00> : vector<128xf32>
    %20 = vector.multi_reduction <add>, %19, %cst_9 [1] : vector<128x256xf32> to vector<128xf32>
    %21 = vector.shape_cast %20 : vector<128xf32> to vector<128x1xf32>
    %22 = tpu.reciprocal %21 {approx = true} : vector<128x1xf32> -> vector<128x1xf32>
    %23 = vector.broadcast %22 : vector<128x1xf32> to vector<128x256xf32>
    %24 = arith.mulf %19, %23 : vector<128x256xf32>
    %25 = arith.truncf %24 : vector<128x256xf32> to vector<128x256xbf16>
    %c0_10 = arith.constant 0 : index
    %c0_11 = arith.constant 0 : index
    %26 = vector.load %arg9[%c0_10, %c0_11] : memref<128x1024xbf16, #tpu.memory_space<vmem>>, vector<128x256xbf16>
    tpu.vector_store %arg9[%c0_10, %c0_11], %25 {strides = array<i32>} : memref<128x1024xbf16, #tpu.memory_space<vmem>>, vector<128x256xbf16>,
    %c1 = arith.constant 1 : index
    %c0_12 = arith.constant 0 : index
    %c0_13 = arith.constant 0 : index
    %27 = vector.load %arg3[%c1, %c0_12, %c0_13] : memref<4x128x1xf32, #tpu.memory_space<vmem>>, vector<1x128x1xf32>
    %28 = vector.shape_cast %27 : vector<1x128x1xf32> to vector<128x1xf32>
    %c1_14 = arith.constant 1 : index
    %c0_15 = arith.constant 0 : index
    %29 = vector.load %arg2[%c1_14, %c0_15] : memref<4x256xf32, #tpu.memory_space<vmem>>, vector<1x256xf32>
    %30 = vector.broadcast %28 : vector<128x1xf32> to vector<128x256xf32>
    %31 = vector.broadcast %29 : vector<1x256xf32> to vector<128x256xf32>
    %32 = arith.addf %30, %31 : vector<128x256xf32>
    %cst_16 = arith.constant 2.000000e-01 : f32
    %33 = vector.broadcast %cst_16 : f32 to vector<128x256xf32>
    %34 = arith.mulf %33, %32 : vector<128x256xf32>
    %35 = arith.maximumf %32, %34 : vector<128x256xf32>
    %c1_17 = arith.constant 1 : index
    %c0_18 = arith.constant 0 : index
    %c0_19 = arith.constant 0 : index
    %36 = vector.load %arg1[%c1_17, %c0_18, %c0_19] : memref<4x128x256xi8, #tpu.memory_space<vmem>>, vector<1x128x256xi8>
    %37 = vector.shape_cast %36 : vector<1x128x256xi8> to vector<128x256xi8>
    %c0_i8_20 = arith.constant 0 : i8
    %38 = vector.broadcast %c0_i8_20 : i8 to vector<128x256xi8>
    %39 = arith.cmpi ne, %37, %38 : vector<128x256xi8>
    %cst_21 = arith.constant -1.000000e+30 : f32
    %40 = vector.broadcast %cst_21 : f32 to vector<128x256xf32>
    %41 = arith.select %39, %35, %40 : vector<128x256xi1>, vector<128x256xf32>
    %cst_22 = arith.constant dense<0xFF800000> : vector<128xf32>
    %42 = vector.multi_reduction <maximumf>, %41, %cst_22 [1] : vector<128x256xf32> to vector<128xf32>
    %43 = vector.shape_cast %42 : vector<128xf32> to vector<128x1xf32>
    %44 = vector.broadcast %43 : vector<128x1xf32> to vector<128x256xf32>
    %45 = arith.subf %41, %44 : vector<128x256xf32>
    %46 = math.exp %45 : vector<128x256xf32>
    %cst_23 = arith.constant dense<0.000000e+00> : vector<128xf32>
    %47 = vector.multi_reduction <add>, %46, %cst_23 [1] : vector<128x256xf32> to vector<128xf32>
    %48 = vector.shape_cast %47 : vector<128xf32> to vector<128x1xf32>
    %49 = tpu.reciprocal %48 {approx = true} : vector<128x1xf32> -> vector<128x1xf32>
    %50 = vector.broadcast %49 : vector<128x1xf32> to vector<128x256xf32>
    %51 = arith.mulf %46, %50 : vector<128x256xf32>
    %52 = arith.truncf %51 : vector<128x256xf32> to vector<128x256xbf16>
    %c0_24 = arith.constant 0 : index
    %c256 = arith.constant 256 : index
    %53 = vector.load %arg9[%c0_24, %c256] : memref<128x1024xbf16, #tpu.memory_space<vmem>>, vector<128x256xbf16>
    tpu.vector_store %arg9[%c0_24, %c256], %52 {strides = array<i32>} : memref<128x1024xbf16, #tpu.memory_space<vmem>>, vector<128x256xbf16>,
    %c2 = arith.constant 2 : index
    %c0_25 = arith.constant 0 : index
    %c0_26 = arith.constant 0 : index
    %54 = vector.load %arg3[%c2, %c0_25, %c0_26] : memref<4x128x1xf32, #tpu.memory_space<vmem>>, vector<1x128x1xf32>
    %55 = vector.shape_cast %54 : vector<1x128x1xf32> to vector<128x1xf32>
    %c2_27 = arith.constant 2 : index
    %c0_28 = arith.constant 0 : index
    %56 = vector.load %arg2[%c2_27, %c0_28] : memref<4x256xf32, #tpu.memory_space<vmem>>, vector<1x256xf32>
    %57 = vector.broadcast %55 : vector<128x1xf32> to vector<128x256xf32>
    %58 = vector.broadcast %56 : vector<1x256xf32> to vector<128x256xf32>
    %59 = arith.addf %57, %58 : vector<128x256xf32>
    %cst_29 = arith.constant 2.000000e-01 : f32
    %60 = vector.broadcast %cst_29 : f32 to vector<128x256xf32>
    %61 = arith.mulf %60, %59 : vector<128x256xf32>
    %62 = arith.maximumf %59, %61 : vector<128x256xf32>
    %c2_30 = arith.constant 2 : index
    %c0_31 = arith.constant 0 : index
    %c0_32 = arith.constant 0 : index
    %63 = vector.load %arg1[%c2_30, %c0_31, %c0_32] : memref<4x128x256xi8, #tpu.memory_space<vmem>>, vector<1x128x256xi8>
    %64 = vector.shape_cast %63 : vector<1x128x256xi8> to vector<128x256xi8>
    %c0_i8_33 = arith.constant 0 : i8
    %65 = vector.broadcast %c0_i8_33 : i8 to vector<128x256xi8>
    %66 = arith.cmpi ne, %64, %65 : vector<128x256xi8>
    %cst_34 = arith.constant -1.000000e+30 : f32
    %67 = vector.broadcast %cst_34 : f32 to vector<128x256xf32>
    %68 = arith.select %66, %62, %67 : vector<128x256xi1>, vector<128x256xf32>
    %cst_35 = arith.constant dense<0xFF800000> : vector<128xf32>
    %69 = vector.multi_reduction <maximumf>, %68, %cst_35 [1] : vector<128x256xf32> to vector<128xf32>
    %70 = vector.shape_cast %69 : vector<128xf32> to vector<128x1xf32>
    %71 = vector.broadcast %70 : vector<128x1xf32> to vector<128x256xf32>
    %72 = arith.subf %68, %71 : vector<128x256xf32>
    %73 = math.exp %72 : vector<128x256xf32>
    %cst_36 = arith.constant dense<0.000000e+00> : vector<128xf32>
    %74 = vector.multi_reduction <add>, %73, %cst_36 [1] : vector<128x256xf32> to vector<128xf32>
    %75 = vector.shape_cast %74 : vector<128xf32> to vector<128x1xf32>
    %76 = tpu.reciprocal %75 {approx = true} : vector<128x1xf32> -> vector<128x1xf32>
    %77 = vector.broadcast %76 : vector<128x1xf32> to vector<128x256xf32>
    %78 = arith.mulf %73, %77 : vector<128x256xf32>
    %79 = arith.truncf %78 : vector<128x256xf32> to vector<128x256xbf16>
    %c0_37 = arith.constant 0 : index
    %c512 = arith.constant 512 : index
    %80 = vector.load %arg9[%c0_37, %c512] : memref<128x1024xbf16, #tpu.memory_space<vmem>>, vector<128x256xbf16>
    tpu.vector_store %arg9[%c0_37, %c512], %79 {strides = array<i32>} : memref<128x1024xbf16, #tpu.memory_space<vmem>>, vector<128x256xbf16>,
    %c3 = arith.constant 3 : index
    %c0_38 = arith.constant 0 : index
    %c0_39 = arith.constant 0 : index
    %81 = vector.load %arg3[%c3, %c0_38, %c0_39] : memref<4x128x1xf32, #tpu.memory_space<vmem>>, vector<1x128x1xf32>
    %82 = vector.shape_cast %81 : vector<1x128x1xf32> to vector<128x1xf32>
    %c3_40 = arith.constant 3 : index
    %c0_41 = arith.constant 0 : index
    %83 = vector.load %arg2[%c3_40, %c0_41] : memref<4x256xf32, #tpu.memory_space<vmem>>, vector<1x256xf32>
    %84 = vector.broadcast %82 : vector<128x1xf32> to vector<128x256xf32>
    %85 = vector.broadcast %83 : vector<1x256xf32> to vector<128x256xf32>
    %86 = arith.addf %84, %85 : vector<128x256xf32>
    %cst_42 = arith.constant 2.000000e-01 : f32
    %87 = vector.broadcast %cst_42 : f32 to vector<128x256xf32>
    %88 = arith.mulf %87, %86 : vector<128x256xf32>
    %89 = arith.maximumf %86, %88 : vector<128x256xf32>
    %c3_43 = arith.constant 3 : index
    %c0_44 = arith.constant 0 : index
    %c0_45 = arith.constant 0 : index
    %90 = vector.load %arg1[%c3_43, %c0_44, %c0_45] : memref<4x128x256xi8, #tpu.memory_space<vmem>>, vector<1x128x256xi8>
    %91 = vector.shape_cast %90 : vector<1x128x256xi8> to vector<128x256xi8>
    %c0_i8_46 = arith.constant 0 : i8
    %92 = vector.broadcast %c0_i8_46 : i8 to vector<128x256xi8>
    %93 = arith.cmpi ne, %91, %92 : vector<128x256xi8>
    %cst_47 = arith.constant -1.000000e+30 : f32
    %94 = vector.broadcast %cst_47 : f32 to vector<128x256xf32>
    %95 = arith.select %93, %89, %94 : vector<128x256xi1>, vector<128x256xf32>
    %cst_48 = arith.constant dense<0xFF800000> : vector<128xf32>
    %96 = vector.multi_reduction <maximumf>, %95, %cst_48 [1] : vector<128x256xf32> to vector<128xf32>
    %97 = vector.shape_cast %96 : vector<128xf32> to vector<128x1xf32>
    %98 = vector.broadcast %97 : vector<128x1xf32> to vector<128x256xf32>
    %99 = arith.subf %95, %98 : vector<128x256xf32>
    %100 = math.exp %99 : vector<128x256xf32>
    %cst_49 = arith.constant dense<0.000000e+00> : vector<128xf32>
    %101 = vector.multi_reduction <add>, %100, %cst_49 [1] : vector<128x256xf32> to vector<128xf32>
    %102 = vector.shape_cast %101 : vector<128xf32> to vector<128x1xf32>
    %103 = tpu.reciprocal %102 {approx = true} : vector<128x1xf32> -> vector<128x1xf32>
    %104 = vector.broadcast %103 : vector<128x1xf32> to vector<128x256xf32>
    %105 = arith.mulf %100, %104 : vector<128x256xf32>
    %106 = arith.truncf %105 : vector<128x256xf32> to vector<128x256xbf16>
    %c0_50 = arith.constant 0 : index
    %c768 = arith.constant 768 : index
    %107 = vector.load %arg9[%c0_50, %c768] : memref<128x1024xbf16, #tpu.memory_space<vmem>>, vector<128x256xbf16>
    tpu.vector_store %arg9[%c0_50, %c768], %106 {strides = array<i32>} : memref<128x1024xbf16, #tpu.memory_space<vmem>>, vector<128x256xbf16>,
    %c0_51 = arith.constant 0 : index
    %c0_52 = arith.constant 0 : index
    %108 = vector.load %arg4[%c0_51, %c0_52] : memref<128x32xf32, #tpu.memory_space<vmem>>, vector<128x32xf32>
    %c0_53 = arith.constant 0 : index
    %c0_54 = arith.constant 0 : index
    %109 = vector.load %arg9[%c0_53, %c0_54] : memref<128x1024xbf16, #tpu.memory_space<vmem>>, vector<128x1024xbf16>
    %c0_55 = arith.constant 0 : index
    %c0_56 = arith.constant 0 : index
    %110 = vector.load %arg5[%c0_55, %c0_56] : memref<1024x32xbf16, #tpu.memory_space<vmem>>, vector<1024x32xbf16>
    %cst_57 = arith.constant dense<0.000000e+00> : vector<128x32xf32>
    %111 = tpu.matmul %109, %110, %cst_57 {dimension_numbers = #tpu.dot_dimension_numbers<[1], [0], [0], [1], [0, 0, 1, 1], [], []>} : vector<128x1024xbf16>, vector<1024x32xbf16>, vector<128x32xf32> -> vector<128x32xf32>
    %112 = arith.addf %108, %111 : vector<128x32xf32>
    %113 = math.tanh %112 : vector<128x32xf32>
    %114 = arith.truncf %113 : vector<128x32xf32> to vector<128x32xbf16>
    %c0_58 = arith.constant 0 : index
    %c0_59 = arith.constant 0 : index
    %115 = vector.load %arg6[%c0_58, %c0_59] : memref<32x32xbf16, #tpu.memory_space<vmem>>, vector<32x32xbf16>
    %cst_60 = arith.constant dense<0.000000e+00> : vector<128x32xf32>
    %116 = tpu.matmul %114, %115, %cst_60 {dimension_numbers = #tpu.dot_dimension_numbers<[1], [0], [0], [1], [0, 0, 1, 1], [], []>} : vector<128x32xbf16>, vector<32x32xbf16>, vector<128x32xf32> -> vector<128x32xf32>
    %c0_61 = arith.constant 0 : index
    %c0_62 = arith.constant 0 : index
    %117 = vector.load %arg7[%c0_61, %c0_62] : memref<1x32xf32, #tpu.memory_space<vmem>>, vector<1x32xf32>
    %118 = vector.broadcast %117 : vector<1x32xf32> to vector<128x32xf32>
    %119 = arith.addf %116, %118 : vector<128x32xf32>
    %c0_63 = arith.constant 0 : index
    %c0_64 = arith.constant 0 : index
    %120 = vector.load %arg8[%c0_63, %c0_64] : memref<128x32xf32, #tpu.memory_space<vmem>>, vector<128x32xf32>
    tpu.vector_store %arg8[%c0_63, %c0_64], %119 {strides = array<i32>} : memref<128x32xf32, #tpu.memory_space<vmem>>, vector<128x32xf32>,
    return
  }
  func.func @transform_0(%arg0: i32) -> (i32, i32, i32) {
    %c0_i32 = arith.constant 0 : i32
    %c0_i32_0 = arith.constant 0 : i32
    %c0_i32_1 = arith.constant 0 : i32
    return %c0_i32, %arg0, %c0_i32_0 : i32, i32, i32
  }
  func.func @transform_1(%arg0: i32) -> (i32, i32) {
    %c0_i32 = arith.constant 0 : i32
    %c0_i32_0 = arith.constant 0 : i32
    %c0_i32_1 = arith.constant 0 : i32
    return %c0_i32, %c0_i32_0 : i32, i32
  }
  func.func @transform_2(%arg0: i32) -> (i32, i32, i32) {
    %c0_i32 = arith.constant 0 : i32
    %c0_i32_0 = arith.constant 0 : i32
    %c0_i32_1 = arith.constant 0 : i32
    return %c0_i32, %arg0, %c0_i32_0 : i32, i32, i32
  }
  func.func @transform_3(%arg0: i32) -> (i32, i32) {
    %c0_i32 = arith.constant 0 : i32
    %c0_i32_0 = arith.constant 0 : i32
    return %arg0, %c0_i32 : i32, i32
  }
  func.func @transform_4(%arg0: i32) -> (i32, i32) {
    %c0_i32 = arith.constant 0 : i32
    %c0_i32_0 = arith.constant 0 : i32
    %c0_i32_1 = arith.constant 0 : i32
    return %c0_i32, %c0_i32_0 : i32, i32
  }
  func.func @transform_5(%arg0: i32) -> (i32, i32) {
    %c0_i32 = arith.constant 0 : i32
    %c0_i32_0 = arith.constant 0 : i32
    %c0_i32_1 = arith.constant 0 : i32
    return %c0_i32, %c0_i32_0 : i32, i32
  }
  func.func @transform_6(%arg0: i32) -> (i32, i32) {
    %c0_i32 = arith.constant 0 : i32
    %c0_i32_0 = arith.constant 0 : i32
    %c0_i32_1 = arith.constant 0 : i32
    return %c0_i32, %c0_i32_0 : i32, i32
  }
  func.func @transform_7(%arg0: i32) -> (i32, i32) {
    %c0_i32 = arith.constant 0 : i32
    %c0_i32_0 = arith.constant 0 : i32
    return %arg0, %c0_i32 : i32, i32
  }
}

</mosaic_0001>

<llo_original>
// kernel: sdr_layer_pallas.1
$region0: #{sdr_layer_pallas.1}
  #allocation0 [shape = 'u32[]', space=smem, size = 0x4, offset = 0x4, fixed_abs, tag = 'smem constant byte address 0x4 - core index']
  #allocation1 [shape = 'u32[144,128]{1,0:T(1,128)}', space=vmem, size = 0x12000, scoped, tag = 'internal scratch']
  #allocation2 [shape = 'bf16[128,1024]{1,0:T(8,128)(2,1)}', space=vmem, size = 0x40000, scoped, tag = 'scratch operand']
  %s0 = inlined_call_operand.vmem [shape: s8[4,256,256], index: 0, kind: input, shape index: {}]
  %s1 = inlined_call_operand.vmem [shape: f32[4,256], index: 1, kind: input, shape index: {}]
  %s2 = inlined_call_operand.vmem [shape: f32[4,256,1], index: 2, kind: input, shape index: {}]
  %s3 = inlined_call_operand.vmem [shape: f32[256,32], index: 3, kind: input, shape index: {}]
  %s4 = inlined_call_operand.vmem [shape: bf16[1024,32], index: 4, kind: input, shape index: {}]
  %s5 = inlined_call_operand.vmem [shape: bf16[32,32], index: 5, kind: input, shape index: {}]
  %s6 = inlined_call_operand.vmem [shape: f32[1,32], index: 6, kind: input, shape index: {}]
  %s7 = inlined_call_operand.vmem [shape: f32[256,32], index: 7, kind: output, shape index: {}]
  %s8 = sld [smem:[#allocation0]]
  $region122: #{sdr_layer_pallas.1} parent=0
    _
  %s10 = ssub.s32 1, %s8
  %s11 = scalar_select 0, %s10, %s8
  $region1: #{sdr_layer_pallas.1} parent=0
    #allocation3 [shape = 'u8[262144]{0}', space=vmem, size = 0x40000, scoped, tag = 'input window, operand 0']
    #allocation4 [shape = 'u8[524288]{0}', space=vmem, size = 0x80000, scoped, tag = 'input window, operand 2']
    loop: start=0, step=1, limit=4
    $region2: #{sdr_layer_pallas.1} parent=1 // loop_pre_header
      _
    $region3: #{sdr_layer_pallas.1} parent=1 // loop_header
      %s13 = sphi 0, %s17
      %p14 = scmp.ge.s32.totalorder %s13, 4
      %s23 = sphi 0, %s25
      %s26 = sphi 0, %s23
      %s27 = sphi 0, %s26
      %s43 = sphi 0, %s27
      %s47 = sphi 0, %s47
      %s49 = sphi 0, %s47
      %s50 = sphi 0, %s49
      %s64 = sphi 0, %s50
      %s70 = sphi 0, %s72
      %s73 = sphi 0, %s70
      %s74 = sphi 0, %s73
      %s90 = sphi 0, %s74
      %s96 = sphi 0, %s98
      %s99 = sphi 0, %s96
      %s100 = sphi 0, %s99
      %s116 = sphi 0, %s100
      %s120 = sphi 0, %s120
      %s122 = sphi 0, %s120
      %s123 = sphi 0, %s122
      %s137 = sphi 0, %s123
      %s141 = sphi 0, %s141
      %s143 = sphi 0, %s141
      %s144 = sphi 0, %s143
      %s158 = sphi 0, %s144
      %s162 = sphi 0, %s162
      %s164 = sphi 0, %s162
      %s165 = sphi 0, %s164
      %s179 = sphi 0, %s165
      %s185 = sphi 0, %s187
      %s188 = sphi 0, %s185
      %s189 = sphi 0, %s188
      %s205 = sphi 0, %s189
    $region4: #{sdr_layer_pallas.1} parent=1 // loop_header_branch
      %16 = sbr.rel (%p14) target = $region8
    $region5: #{sdr_layer_pallas.1} parent=1 // loop_body
      %s18 = ssub.s32 %s13, 1
      %s19 = ssub.s32 %s13, 2
      %s20 = sadd.s32 %s13, 1
      %s21 = ssub.s32 %s13, %s20
      %p22 = scmp.eq.s32.totalorder %s21, 0
      %s24 = sadd.s32 %s23, 1
      %s25 = scalar_select %p22, %s23, %s24
      %p28 = pneg %p22
      %p29 = scmp.eq.s32.totalorder %s13, 1
      %p30 = por %p28, %p29
      %p31 = scmp.ne.s32.totalorder %s23, %s26
      %p32 = scmp.eq.s32.totalorder %s13, 0
      %p33 = por %p31, %p32
      %p34 = scmp.ne.s32.totalorder %s23, %s26
      %p35 = scmp.eq.s32.totalorder %s18, 1
      %p36 = por %p34, %p35
      %p37 = scmp.ne.s32.totalorder %s26, %s27
      %p38 = scmp.eq.s32.totalorder %s18, 0
      %p39 = por %p37, %p38
      %p40 = scmp.ne.s32.totalorder %s26, %s27
      %p41 = scmp.eq.s32.totalorder %s19, 1
      %p42 = por %p40, %p41
      %p44 = scmp.ne.s32.totalorder %s27, %s43
      %p45 = scmp.eq.s32.totalorder %s19, 0
      %p46 = por %p44, %p45
      %s48 = sadd.s32 %s47, 1
      %p51 = scmp.eq.s32.totalorder %s13, 1
      %p52 = scmp.ne.s32.totalorder %s47, %s49
      %p53 = scmp.eq.s32.totalorder %s13, 0
      %p54 = por %p52, %p53
      %p55 = scmp.ne.s32.totalorder %s47, %s49
      %p56 = scmp.eq.s32.totalorder %s18, 1
      %p57 = por %p55, %p56
      %p58 = scmp.ne.s32.totalorder %s49, %s50
      %p59 = scmp.eq.s32.totalorder %s18, 0
      %p60 = por %p58, %p59
      %p61 = scmp.ne.s32.totalorder %s49, %s50
      %p62 = scmp.eq.s32.totalorder %s19, 1
      %p63 = por %p61, %p62
      %p65 = scmp.ne.s32.totalorder %s50, %s64
      %p66 = scmp.eq.s32.totalorder %s19, 0
      %p67 = por %p65, %p66
      %s68 = ssub.s32 %s13, %s20
      %p69 = scmp.eq.s32.totalorder %s68, 0
      %s71 = sadd.s32 %s70, 1
      %s72 = scalar_select %p69, %s70, %s71
      %p75 = pneg %p69
      %p76 = scmp.eq.s32.totalorder %s13, 1
      %p77 = por %p75, %p76
      %p78 = scmp.ne.s32.totalorder %s70, %s73
      %p79 = scmp.eq.s32.totalorder %s13, 0
      %p80 = por %p78, %p79
      %p81 = scmp.ne.s32.totalorder %s70, %s73
      %p82 = scmp.eq.s32.totalorder %s18, 1
      %p83 = por %p81, %p82
      %p84 = scmp.ne.s32.totalorder %s73, %s74
      %p85 = scmp.eq.s32.totalorder %s18, 0
      %p86 = por %p84, %p85
      %p87 = scmp.ne.s32.totalorder %s73, %s74
      %p88 = scmp.eq.s32.totalorder %s19, 1
      %p89 = por %p87, %p88
      %p91 = scmp.ne.s32.totalorder %s74, %s90
      %p92 = scmp.eq.s32.totalorder %s19, 0
      %p93 = por %p91, %p92
      %s94 = ssub.s32 %s13, %s20
      %p95 = scmp.eq.s32.totalorder %s94, 0
      %s97 = sadd.s32 %s96, 1
      %s98 = scalar_select %p95, %s96, %s97
      %p101 = pneg %p95
      %p102 = scmp.eq.s32.totalorder %s13, 1
      %p103 = por %p101, %p102
      %p104 = scmp.ne.s32.totalorder %s96, %s99
      %p105 = scmp.eq.s32.totalorder %s13, 0
      %p106 = por %p104, %p105
      %p107 = scmp.ne.s32.totalorder %s96, %s99
      %p108 = scmp.eq.s32.totalorder %s18, 1
      %p109 = por %p107, %p108
      %p110 = scmp.ne.s32.totalorder %s99, %s100
      %p111 = scmp.eq.s32.totalorder %s18, 0
      %p112 = por %p110, %p111
      %p113 = scmp.ne.s32.totalorder %s99, %s100
      %p114 = scmp.eq.s32.totalorder %s19, 1
      %p115 = por %p113, %p114
      %p117 = scmp.ne.s32.totalorder %s100, %s116
      %p118 = scmp.eq.s32.totalorder %s19, 0
      %p119 = por %p117, %p118
      %s121 = sadd.s32 %s120, 1
      %p124 = scmp.eq.s32.totalorder %s13, 1
      %p125 = scmp.ne.s32.totalorder %s120, %s122
      %p126 = scmp.eq.s32.totalorder %s13, 0
      %p127 = por %p125, %p126
      %p128 = scmp.ne.s32.totalorder %s120, %s122
      %p129 = scmp.eq.s32.totalorder %s18, 1
      %p130 = por %p128, %p129
      %p131 = scmp.ne.s32.totalorder %s122, %s123
      %p132 = scmp.eq.s32.totalorder %s18, 0
      %p133 = por %p131, %p132
      %p134 = scmp.ne.s32.totalorder %s122, %s123
      %p135 = scmp.eq.s32.totalorder %s19, 1
      %p136 = por %p134, %p135
      %p138 = scmp.ne.s32.totalorder %s123, %s137
      %p139 = scmp.eq.s32.totalorder %s19, 0
      %p140 = por %p138, %p139
      %s142 = sadd.s32 %s141, 1
      %p145 = scmp.eq.s32.totalorder %s13, 1
      %p146 = scmp.ne.s32.totalorder %s141, %s143
      %p147 = scmp.eq.s32.totalorder %s13, 0
      %p148 = por %p146, %p147
      %p149 = scmp.ne.s32.totalorder %s141, %s143
      %p150 = scmp.eq.s32.totalorder %s18, 1
      %p151 = por %p149, %p150
      %p152 = scmp.ne.s32.totalorder %s143, %s144
      %p153 = scmp.eq.s32.totalorder %s18, 0
      %p154 = por %p152, %p153
      %p155 = scmp.ne.s32.totalorder %s143, %s144
      %p156 = scmp.eq.s32.totalorder %s19, 1
      %p157 = por %p155, %p156
      %p159 = scmp.ne.s32.totalorder %s144, %s158
      %p160 = scmp.eq.s32.totalorder %s19, 0
      %p161 = por %p159, %p160
      %s163 = sadd.s32 %s162, 1
      %p166 = scmp.eq.s32.totalorder %s13, 1
      %p167 = scmp.ne.s32.totalorder %s162, %s164
      %p168 = scmp.eq.s32.totalorder %s13, 0
      %p169 = por %p167, %p168
      %p170 = scmp.ne.s32.totalorder %s162, %s164
      %p171 = scmp.eq.s32.totalorder %s18, 1
      %p172 = por %p170, %p171
      %p173 = scmp.ne.s32.totalorder %s164, %s165
      %p174 = scmp.eq.s32.totalorder %s18, 0
      %p175 = por %p173, %p174
      %p176 = scmp.ne.s32.totalorder %s164, %s165
      %p177 = scmp.eq.s32.totalorder %s19, 1
      %p178 = por %p176, %p177
      %p180 = scmp.ne.s32.totalorder %s165, %s179
      %p181 = scmp.eq.s32.totalorder %s19, 0
      %p182 = por %p180, %p181
      %s183 = ssub.s32 %s13, %s20
      %p184 = scmp.eq.s32.totalorder %s183, 0
      %s186 = sadd.s32 %s185, 1
      %s187 = scalar_select %p184, %s185, %s186
      %p190 = pneg %p184
      %p191 = scmp.eq.s32.totalorder %s13, 1
      %p192 = por %p190, %p191
      %p193 = scmp.ne.s32.totalorder %s185, %s188
      %p194 = scmp.eq.s32.totalorder %s13, 0
      %p195 = por %p193, %p194
      %p196 = scmp.ne.s32.totalorder %s185, %s188
      %p197 = scmp.eq.s32.totalorder %s18, 1
      %p198 = por %p196, %p197
      %p199 = scmp.ne.s32.totalorder %s188, %s189
      %p200 = scmp.eq.s32.totalorder %s18, 0
      %p201 = por %p199, %p200
      %p202 = scmp.ne.s32.totalorder %s188, %s189
      %p203 = scmp.eq.s32.totalorder %s19, 1
      %p204 = por %p202, %p203
      %p206 = scmp.ne.s32.totalorder %s189, %s205
      %p207 = scmp.eq.s32.totalorder %s19, 0
      %p208 = por %p206, %p207
      %p209 = scmp.le.s32.totalorder 1, %s13
      %p210 = scmp.lt.s32.totalorder %s13, 3
      %p211 = pnand %p209, %p210
      %p212 = pneg %p211
      // Predicated region
      $region9: #{sdr_layer_pallas.1} parent=5 // pred_check
        _
      $region10: #{sdr_layer_pallas.1} parent=5 // pred_check_branch
        %214 = sbr.rel (%p211) target = $region12
      $region11: #{sdr_layer_pallas.1} parent=5 // pred_region
        %s215 = ssub.s32 %s13, 1
        // Predicated region
        $region13: #{sdr_layer_pallas.1} parent=11 // pred_check
          %p216 = pneg %p60
        $region14: #{sdr_layer_pallas.1} parent=11 // pred_check_branch
          %218 = sbr.rel (%p216) target = $region16
        $region15: #{sdr_layer_pallas.1} parent=11 // pred_region
          _
        $region16: #{sdr_layer_pallas.1} parent=11 // pred_fallthru
          _
        // Predicated region
        $region17: #{sdr_layer_pallas.1} parent=11 // pred_check
          %p219 = pneg %p133
        $region18: #{sdr_layer_pallas.1} parent=11 // pred_check_branch
          %221 = sbr.rel (%p219) target = $region20
        $region19: #{sdr_layer_pallas.1} parent=11 // pred_region
          _
        $region20: #{sdr_layer_pallas.1} parent=11 // pred_fallthru
          _
        // Predicated region
        $region21: #{sdr_layer_pallas.1} parent=11 // pred_check
          %p222 = pneg %p154
        $region22: #{sdr_layer_pallas.1} parent=11 // pred_check_branch
          %224 = sbr.rel (%p222) target = $region24
        $region23: #{sdr_layer_pallas.1} parent=11 // pred_region
          _
        $region24: #{sdr_layer_pallas.1} parent=11 // pred_fallthru
          _
        // Predicated region
        $region25: #{sdr_layer_pallas.1} parent=11 // pred_check
          %p225 = pneg %p175
        $region26: #{sdr_layer_pallas.1} parent=11 // pred_check_branch
          %227 = sbr.rel (%p225) target = $region28
        $region27: #{sdr_layer_pallas.1} parent=11 // pred_region
          _
        $region28: #{sdr_layer_pallas.1} parent=11 // pred_fallthru
          _
      $region12: #{sdr_layer_pallas.1} parent=5 // pred_fallthru
        _
      %p228 = scmp.lt.s32.totalorder %s13, 2
      // Predicated region
      $region29: #{sdr_layer_pallas.1} parent=5 // pred_check
        %p229 = pneg %p228
      $region30: #{sdr_layer_pallas.1} parent=5 // pred_check_branch
        %231 = sbr.rel (%p229) target = $region32
      $region31: #{sdr_layer_pallas.1} parent=5 // pred_region
        // Predicated region
        $region33: #{sdr_layer_pallas.1} parent=31 // pred_check
          %p232 = pneg %p33
        $region34: #{sdr_layer_pallas.1} parent=31 // pred_check_branch
          %234 = sbr.rel (%p232) target = $region36
        $region35: #{sdr_layer_pallas.1} parent=31 // pred_region
          %s235 = sand.u32 %s23, 1
          %s236 = sand.u32 %s23, 1
          %s237 = smul.addr %s236, 256
          %s238 = scalar_lea.vmem [#allocation3], %s237
          %s239 = smul.u32 4, %s13
          %s240 = smul.addr %s239, 2
          %s241 = smul.addr %s240, 8
          %s242 = scalar_lea.vmem %s0, %s241
          // Predicated region
          $region37: #{sdr_layer_pallas.1} parent=35 // pred_check
            _
          $region38: #{sdr_layer_pallas.1} parent=35 // pred_check_branch
            %244 = sbr.rel (0) target = $region40
          $region39: #{sdr_layer_pallas.1} parent=35 // pred_region
            // Predicated region
            $region41: #{sdr_layer_pallas.1} parent=39 // pred_check
              _
            $region42: #{sdr_layer_pallas.1} parent=39 // pred_check_branch
              %246 = sbr.rel (0) target = $region44
            $region43: #{sdr_layer_pallas.1} parent=39 // pred_region
              loop: start=0, step=1, limit=1
              $region45: #{sdr_layer_pallas.1} parent=43 // loop_pre_header
                _
              $region46: #{sdr_layer_pallas.1} parent=43 // loop_header
                %s248 = sphi 0, %s252
                %p249 = scmp.ge.s32.totalorder %s248, 1
                %s253 = sphi %s242, %s242
                %s254 = sphi %s238, %s238
              $region47: #{sdr_layer_pallas.1} parent=43 // loop_header_branch
                %251 = sbr.rel (%p249) target = $region51
              $region48: #{sdr_layer_pallas.1} parent=43 // loop_body
                %v255 = vld [vmem:[%s253] sm:$0xff]
                %256 = vst [vmem:[%s254] sm:$0xff] %v255
                %v257 = vld [vmem:[%s253 + $0x8] sm:$0xff]
                %258 = vst [vmem:[%s254 + $0x8] sm:$0xff] %v257
                %v259 = vld [vmem:[%s253 + $0x10] sm:$0xff]
                %260 = vst [vmem:[%s254 + $0x10] sm:$0xff] %v259
                %v261 = vld [vmem:[%s253 + $0x18] sm:$0xff]
                %262 = vst [vmem:[%s254 + $0x18] sm:$0xff] %v261
                %v263 = vld [vmem:[%s253 + $0x20] sm:$0xff]
                %264 = vst [vmem:[%s254 + $0x20] sm:$0xff] %v263
                %v265 = vld [vmem:[%s253 + $0x28] sm:$0xff]
                %266 = vst [vmem:[%s254 + $0x28] sm:$0xff] %v265
                %v267 = vld [vmem:[%s253 + $0x30] sm:$0xff]
                %268 = vst [vmem:[%s254 + $0x30] sm:$0xff] %v267
                %v269 = vld [vmem:[%s253 + $0x38] sm:$0xff]
                %270 = vst [vmem:[%s254 + $0x38] sm:$0xff] %v269
                %v271 = vld [vmem:[%s253 + $0x80] sm:$0xff]
                %272 = vst [vmem:[%s254 + $0x40] sm:$0xff] %v271
                %v273 = vld [vmem:[%s253 + $0x88] sm:$0xff]
                %274 = vst [vmem:[%s254 + $0x48] sm:$0xff] %v273
                %v275 = vld [vmem:[%s253 + $0x90] sm:$0xff]
                %276 = vst [vmem:[%s254 + $0x50] sm:$0xff] %v275
                %v277 = vld [vmem:[%s253 + $0x98] sm:$0xff]
                %278 = vst [vmem:[%s254 + $0x58] sm:$0xff] %v277
                %v279 = vld [vmem:[%s253 + $0xa0] sm:$0xff]
                %280 = vst [vmem:[%s254 + $0x60] sm:$0xff] %v279
                %v281 = vld [vmem:[%s253 + $0xa8] sm:$0xff]
                %282 = vst [vmem:[%s254 + $0x68] sm:$0xff] %v281
                %v283 = vld [vmem:[%s253 + $0xb0] sm:$0xff]
                %284 = vst [vmem:[%s254 + $0x70] sm:$0xff] %v283
                %v285 = vld [vmem:[%s253 + $0xb8] sm:$0xff]
                %286 = vst [vmem:[%s254 + $0x78] sm:$0xff] %v285
                %v287 = vld [vmem:[%s253 + $0x100] sm:$0xff]
                %288 = vst [vmem:[%s254 + $0x80] sm:$0xff] %v287
                %v289 = vld [vmem:[%s253 + $0x108] sm:$0xff]
                %290 = vst [vmem:[%s254 + $0x88] sm:$0xff] %v289
                %v291 = vld [vmem:[%s253 + $0x110] sm:$0xff]
                %292 = vst [vmem:[%s254 + $0x90] sm:$0xff] %v291
                %v293 = vld [vmem:[%s253 + $0x118] sm:$0xff]
                %294 = vst [vmem:[%s254 + $0x98] sm:$0xff] %v293
                %v295 = vld [vmem:[%s253 + $0x120] sm:$0xff]
                %296 = vst [vmem:[%s254 + $0xa0] sm:$0xff] %v295
                %v297 = vld [vmem:[%s253 + $0x128] sm:$0xff]
                %298 = vst [vmem:[%s254 + $0xa8] sm:$0xff] %v297
                %v299 = vld [vmem:[%s253 + $0x130] sm:$0xff]
                %300 = vst [vmem:[%s254 + $0xb0] sm:$0xff] %v299
                %v301 = vld [vmem:[%s253 + $0x138] sm:$0xff]
                %302 = vst [vmem:[%s254 + $0xb8] sm:$0xff] %v301
                %v303 = vld [vmem:[%s253 + $0x180] sm:$0xff]
                %304 = vst [vmem:[%s254 + $0xc0] sm:$0xff] %v303
                %v305 = vld [vmem:[%s253 + $0x188] sm:$0xff]
                %306 = vst [vmem:[%s254 + $0xc8] sm:$0xff] %v305
                %v307 = vld [vmem:[%s253 + $0x190] sm:$0xff]
                %308 = vst [vmem:[%s254 + $0xd0] sm:$0xff] %v307
                %v309 = vld [vmem:[%s253 + $0x198] sm:$0xff]
                %310 = vst [vmem:[%s254 + $0xd8] sm:$0xff] %v309
                %v311 = vld [vmem:[%s253 + $0x1a0] sm:$0xff]
                %312 = vst [vmem:[%s254 + $0xe0] sm:$0xff] %v311
                %v313 = vld [vmem:[%s253 + $0x1a8] sm:$0xff]
                %314 = vst [vmem:[%s254 + $0xe8] sm:$0xff] %v313
                %v315 = vld [vmem:[%s253 + $0x1b0] sm:$0xff]
                %316 = vst [vmem:[%s254 + $0xf0] sm:$0xff] %v315
                %v317 = vld [vmem:[%s253 + $0x1b8] sm:$0xff]
                %318 = vst [vmem:[%s254 + $0xf8] sm:$0xff] %v317
              $region49: #{sdr_layer_pallas.1} parent=43 // loop_footer
                %s252 = sadd.s32 1, %s248
              $region50: #{sdr_layer_pallas.1} parent=43 // loop_footer_branch
                %247 = sbr.rel target = $region46
              $region51: #{sdr_layer_pallas.1} parent=43 // loop_exit
                _
            $region44: #{sdr_layer_pallas.1} parent=39 // pred_fallthru
              _
            // Predicated region
            $region52: #{sdr_layer_pallas.1} parent=39 // pred_check
              _
            $region53: #{sdr_layer_pallas.1} parent=39 // pred_check_branch
              %320 = sbr.rel target = $region55
            $region54: #{sdr_layer_pallas.1} parent=39 // pred_region
              _
            $region55: #{sdr_layer_pallas.1} parent=39 // pred_fallthru
              _
          $region40: #{sdr_layer_pallas.1} parent=35 // pred_fallthru
            _
          %321 = vnop
        $region36: #{sdr_layer_pallas.1} parent=31 // pred_fallthru
          _
        // Predicated region
        $region56: #{sdr_layer_pallas.1} parent=31 // pred_check
          %p322 = pneg %p80
        $region57: #{sdr_layer_pallas.1} parent=31 // pred_check_branch
          %324 = sbr.rel (%p322) target = $region59
        $region58: #{sdr_layer_pallas.1} parent=31 // pred_region
          %s325 = sand.u32 %s70, 1
          %s326 = sand.u32 %s70, 1
          %s327 = smul.addr %s326, 512
          %s328 = scalar_lea.vmem [#allocation4], %s327
          %s329 = smul.u32 16, %s13
          %s330 = smul.addr %s329, 8
          %s331 = scalar_lea.vmem %s2, %s330
          // Predicated region
          $region60: #{sdr_layer_pallas.1} parent=58 // pred_check
            _
          $region61: #{sdr_layer_pallas.1} parent=58 // pred_check_branch
            %333 = sbr.rel (0) target = $region63
          $region62: #{sdr_layer_pallas.1} parent=58 // pred_region
            // Predicated region
            $region64: #{sdr_layer_pallas.1} parent=62 // pred_check
              _
            $region65: #{sdr_layer_pallas.1} parent=62 // pred_check_branch
              %335 = sbr.rel (0) target = $region67
            $region66: #{sdr_layer_pallas.1} parent=62 // pred_region
              // Predicated region
              $region79: #{sdr_layer_pallas.1} parent=66 // pred_check
                _
              $region80: #{sdr_layer_pallas.1} parent=66 // pred_check_branch
                %477 = sbr.rel (0) target = $region82
              $region81: #{sdr_layer_pallas.1} parent=66 // pred_region
                loop: start=0, step=1, limit=1
                $region83: #{sdr_layer_pallas.1} parent=81 // loop_pre_header
                  _
                $region84: #{sdr_layer_pallas.1} parent=81 // loop_header
                  %s479 = sphi 0, %s483
                  %p480 = scmp.ge.s32.totalorder %s479, 1
                  %s484 = sphi %s331, %s331
                  %s485 = sphi %s328, %s328
                $region85: #{sdr_layer_pallas.1} parent=81 // loop_header_branch
                  %482 = sbr.rel (%p480) target = $region89
                $region86: #{sdr_layer_pallas.1} parent=81 // loop_body
                  %v486 = vld [vmem:[%s484] sm:$0xff]
                  %487 = vst [vmem:[%s485] sm:$0xff] %v486
                  %v488 = vld [vmem:[%s484 + $0x8] sm:$0xff]
                  %489 = vst [vmem:[%s485 + $0x8] sm:$0xff] %v488
                  %v490 = vld [vmem:[%s484 + $0x10] sm:$0xff]
                  %491 = vst [vmem:[%s485 + $0x10] sm:$0xff] %v490
                  %v492 = vld [vmem:[%s484 + $0x18] sm:$0xff]
                  %493 = vst [vmem:[%s485 + $0x18] sm:$0xff] %v492
                  %v494 = vld [vmem:[%s484 + $0x20] sm:$0xff]
                  %495 = vst [vmem:[%s485 + $0x20] sm:$0xff] %v494
                  %v496 = vld [vmem:[%s484 + $0x28] sm:$0xff]
                  %497 = vst [vmem:[%s485 + $0x28] sm:$0xff] %v496
                  %v498 = vld [vmem:[%s484 + $0x30] sm:$0xff]
                  %499 = vst [vmem:[%s485 + $0x30] sm:$0xff] %v498
                  %v500 = vld [vmem:[%s484 + $0x38] sm:$0xff]
                  %501 = vst [vmem:[%s485 + $0x38] sm:$0xff] %v500
                  %v502 = vld [vmem:[%s484 + $0x40] sm:$0xff]
                  %503 = vst [vmem:[%s485 + $0x40] sm:$0xff] %v502
                  %v504 = vld [vmem:[%s484 + $0x48] sm:$0xff]
                  %505 = vst [vmem:[%s485 + $0x48] sm:$0xff] %v504
                  %v506 = vld [vmem:[%s484 + $0x50] sm:$0xff]
                  %507 = vst [vmem:[%s485 + $0x50] sm:$0xff] %v506
                  %v508 = vld [vmem:[%s484 + $0x58] sm:$0xff]
                  %509 = vst [vmem:[%s485 + $0x58] sm:$0xff] %v508
                  %v510 = vld [vmem:[%s484 + $0x60] sm:$0xff]
                  %511 = vst [vmem:[%s485 + $0x60] sm:$0xff] %v510
                  %v512 = vld [vmem:[%s484 + $0x68] sm:$0xff]
                  %513 = vst [vmem:[%s485 + $0x68] sm:$0xff] %v512
                  %v514 = vld [vmem:[%s484 + $0x70] sm:$0xff]
                  %515 = vst [vmem:[%s485 + $0x70] sm:$0xff] %v514
                  %v516 = vld [vmem:[%s484 + $0x78] sm:$0xff]
                  %517 = vst [vmem:[%s485 + $0x78] sm:$0xff] %v516
                  %v518 = vld [vmem:[%s484 + $0x100] sm:$0xff]
                  %519 = vst [vmem:[%s485 + $0x80] sm:$0xff] %v518
                  %v520 = vld [vmem:[%s484 + $0x108] sm:$0xff]
                  %521 = vst [vmem:[%s485 + $0x88] sm:$0xff] %v520
                  %v522 = vld [vmem:[%s484 + $0x110] sm:$0xff]
                  %523 = vst [vmem:[%s485 + $0x90] sm:$0xff] %v522
                  %v524 = vld [vmem:[%s484 + $0x118] sm:$0xff]
                  %525 = vst [vmem:[%s485 + $0x98] sm:$0xff] %v524
                  %v526 = vld [vmem:[%s484 + $0x120] sm:$0xff]
                  %527 = vst [vmem:[%s485 + $0xa0] sm:$0xff] %v526
                  %v528 = vld [vmem:[%s484 + $0x128] sm:$0xff]
                  %529 = vst [vmem:[%s485 + $0xa8] sm:$0xff] %v528
                  %v530 = vld [vmem:[%s484 + $0x130] sm:$0xff]
                  %531 = vst [vmem:[%s485 + $0xb0] sm:$0xff] %v530
                  %v532 = vld [vmem:[%s484 + $0x138] sm:$0xff]
                  %533 = vst [vmem:[%s485 + $0xb8] sm:$0xff] %v532
                  %v534 = vld [vmem:[%s484 + $0x140] sm:$0xff]
                  %535 = vst [vmem:[%s485 + $0xc0] sm:$0xff] %v534
                  %v536 = vld [vmem:[%s484 + $0x148] sm:$0xff]
                  %537 = vst [vmem:[%s485 + $0xc8] sm:$0xff] %v536
                  %v538 = vld [vmem:[%s484 + $0x150] sm:$0xff]
                  %539 = vst [vmem:[%s485 + $0xd0] sm:$0xff] %v538
                  %v540 = vld [vmem:[%s484 + $0x158] sm:$0xff]
                  %541 = vst [vmem:[%s485 + $0xd8] sm:$0xff] %v540
                  %v542 = vld [vmem:[%s484 + $0x160] sm:$0xff]
                  %543 = vst [vmem:[%s485 + $0xe0] sm:$0xff] %v542
                  %v544 = vld [vmem:[%s484 + $0x168] sm:$0xff]
                  %545 = vst [vmem:[%s485 + $0xe8] sm:$0xff] %v544
                  %v546 = vld [vmem:[%s484 + $0x170] sm:$0xff]
                  %547 = vst [vmem:[%s485 + $0xf0] sm:$0xff] %v546
                  %v548 = vld [vmem:[%s484 + $0x178] sm:$0xff]
                  %549 = vst [vmem:[%s485 + $0xf8] sm:$0xff] %v548
                  %v550 = vld [vmem:[%s484 + $0x200] sm:$0xff]
                  %551 = vst [vmem:[%s485 + $0x100] sm:$0xff] %v550
                  %v552 = vld [vmem:[%s484 + $0x208] sm:$0xff]
                  %553 = vst [vmem:[%s485 + $0x108] sm:$0xff] %v552
                  %v554 = vld [vmem:[%s484 + $0x210] sm:$0xff]
                  %555 = vst [vmem:[%s485 + $0x110] sm:$0xff] %v554
                  %v556 = vld [vmem:[%s484 + $0x218] sm:$0xff]
                  %557 = vst [vmem:[%s485 + $0x118] sm:$0xff] %v556
                  %v558 = vld [vmem:[%s484 + $0x220] sm:$0xff]
                  %559 = vst [vmem:[%s485 + $0x120] sm:$0xff] %v558
                  %v560 = vld [vmem:[%s484 + $0x228] sm:$0xff]
                  %561 = vst [vmem:[%s485 + $0x128] sm:$0xff] %v560
                  %v562 = vld [vmem:[%s484 + $0x230] sm:$0xff]
                  %563 = vst [vmem:[%s485 + $0x130] sm:$0xff] %v562
                  %v564 = vld [vmem:[%s484 + $0x238] sm:$0xff]
                  %565 = vst [vmem:[%s485 + $0x138] sm:$0xff] %v564
                  %v566 = vld [vmem:[%s484 + $0x240] sm:$0xff]
                  %567 = vst [vmem:[%s485 + $0x140] sm:$0xff] %v566
                  %v568 = vld [vmem:[%s484 + $0x248] sm:$0xff]
                  %569 = vst [vmem:[%s485 + $0x148] sm:$0xff] %v568
                  %v570 = vld [vmem:[%s484 + $0x250] sm:$0xff]
                  %571 = vst [vmem:[%s485 + $0x150] sm:$0xff] %v570
                  %v572 = vld [vmem:[%s484 + $0x258] sm:$0xff]
                  %573 = vst [vmem:[%s485 + $0x158] sm:$0xff] %v572
                  %v574 = vld [vmem:[%s484 + $0x260] sm:$0xff]
                  %575 = vst [vmem:[%s485 + $0x160] sm:$0xff] %v574
                  %v576 = vld [vmem:[%s484 + $0x268] sm:$0xff]
                  %577 = vst [vmem:[%s485 + $0x168] sm:$0xff] %v576
                  %v578 = vld [vmem:[%s484 + $0x270] sm:$0xff]
                  %579 = vst [vmem:[%s485 + $0x170] sm:$0xff] %v578
                  %v580 = vld [vmem:[%s484 + $0x278] sm:$0xff]
                  %581 = vst [vmem:[%s485 + $0x178] sm:$0xff] %v580
                  %v582 = vld [vmem:[%s484 + $0x300] sm:$0xff]
                  %583 = vst [vmem:[%s485 + $0x180] sm:$0xff] %v582
                  %v584 = vld [vmem:[%s484 + $0x308] sm:$0xff]
                  %585 = vst [vmem:[%s485 + $0x188] sm:$0xff] %v584
                  %v586 = vld [vmem:[%s484 + $0x310] sm:$0xff]
                  %587 = vst [vmem:[%s485 + $0x190] sm:$0xff] %v586
                  %v588 = vld [vmem:[%s484 + $0x318] sm:$0xff]
                  %589 = vst [vmem:[%s485 + $0x198] sm:$0xff] %v588
                  %v590 = vld [vmem:[%s484 + $0x320] sm:$0xff]
                  %591 = vst [vmem:[%s485 + $0x1a0] sm:$0xff] %v590
                  %v592 = vld [vmem:[%s484 + $0x328] sm:$0xff]
                  %593 = vst [vmem:[%s485 + $0x1a8] sm:$0xff] %v592
                  %v594 = vld [vmem:[%s484 + $0x330] sm:$0xff]
                  %595 = vst [vmem:[%s485 + $0x1b0] sm:$0xff] %v594
                  %v596 = vld [vmem:[%s484 + $0x338] sm:$0xff]
                  %597 = vst [vmem:[%s485 + $0x1b8] sm:$0xff] %v596
                  %v598 = vld [vmem:[%s484 + $0x340] sm:$0xff]
                  %599 = vst [vmem:[%s485 + $0x1c0] sm:$0xff] %v598
                  %v600 = vld [vmem:[%s484 + $0x348] sm:$0xff]
                  %601 = vst [vmem:[%s485 + $0x1c8] sm:$0xff] %v600
                  %v602 = vld [vmem:[%s484 + $0x350] sm:$0xff]
                  %603 = vst [vmem:[%s485 + $0x1d0] sm:$0xff] %v602
                  %v604 = vld [vmem:[%s484 + $0x358] sm:$0xff]
                  %605 = vst [vmem:[%s485 + $0x1d8] sm:$0xff] %v604
                  %v606 = vld [vmem:[%s484 + $0x360] sm:$0xff]
                  %607 = vst [vmem:[%s485 + $0x1e0] sm:$0xff] %v606
                  %v608 = vld [vmem:[%s484 + $0x368] sm:$0xff]
                  %609 = vst [vmem:[%s485 + $0x1e8] sm:$0xff] %v608
                  %v610 = vld [vmem:[%s484 + $0x370] sm:$0xff]
                  %611 = vst [vmem:[%s485 + $0x1f0] sm:$0xff] %v610
                  %v612 = vld [vmem:[%s484 + $0x378] sm:$0xff]
                  %613 = vst [vmem:[%s485 + $0x1f8] sm:$0xff] %v612
                $region87: #{sdr_layer_pallas.1} parent=81 // loop_footer
                  %s483 = sadd.s32 1, %s479
                $region88: #{sdr_layer_pallas.1} parent=81 // loop_footer_branch
                  %478 = sbr.rel target = $region84
                $region89: #{sdr_layer_pallas.1} parent=81 // loop_exit
                  _
              $region82: #{sdr_layer_pallas.1} parent=66 // pred_fallthru
                _
              // Predicated region
              $region90: #{sdr_layer_pallas.1} parent=66 // pred_check
                _
              $region91: #{sdr_layer_pallas.1} parent=66 // pred_check_branch
                %615 = sbr.rel target = $region93
              $region92: #{sdr_layer_pallas.1} parent=66 // pred_region
                _
              $region93: #{sdr_layer_pallas.1} parent=66 // pred_fallthru
                _
            $region67: #{sdr_layer_pallas.1} parent=62 // pred_fallthru
              _
            // Predicated region
            $region68: #{sdr_layer_pallas.1} parent=62 // pred_check
              _
            $region69: #{sdr_layer_pallas.1} parent=62 // pred_check_branch
              %337 = sbr.rel target = $region71
            $region70: #{sdr_layer_pallas.1} parent=62 // pred_region
              %s339 = ssub.s32 256, 1
              loop: start=0, step=1, limit=1
              $region72: #{sdr_layer_pallas.1} parent=70 // loop_pre_header
                _
              $region73: #{sdr_layer_pallas.1} parent=70 // loop_header
                %s341 = sphi 0, %s345
                %p342 = scmp.ge.s32.totalorder %s341, 1
                %s346 = sphi %s331, %s331
                %s347 = sphi %s328, %s328
              $region74: #{sdr_layer_pallas.1} parent=70 // loop_header_branch
                %344 = sbr.rel (%p342) target = $region78
              $region75: #{sdr_layer_pallas.1} parent=70 // loop_body
                %v348 = vld [vmem:[%s346] sm:%s339]
                %349 = vst [vmem:[%s347] sm:%s339] %v348
                %v350 = vld [vmem:[%s346 + $0x8] sm:%s339]
                %351 = vst [vmem:[%s347 + $0x8] sm:%s339] %v350
                %v352 = vld [vmem:[%s346 + $0x10] sm:%s339]
                %353 = vst [vmem:[%s347 + $0x10] sm:%s339] %v352
                %v354 = vld [vmem:[%s346 + $0x18] sm:%s339]
                %355 = vst [vmem:[%s347 + $0x18] sm:%s339] %v354
                %v356 = vld [vmem:[%s346 + $0x20] sm:%s339]
                %357 = vst [vmem:[%s347 + $0x20] sm:%s339] %v356
                %v358 = vld [vmem:[%s346 + $0x28] sm:%s339]
                %359 = vst [vmem:[%s347 + $0x28] sm:%s339] %v358
                %v360 = vld [vmem:[%s346 + $0x30] sm:%s339]
                %361 = vst [vmem:[%s347 + $0x30] sm:%s339] %v360
                %v362 = vld [vmem:[%s346 + $0x38] sm:%s339]
                %363 = vst [vmem:[%s347 + $0x38] sm:%s339] %v362
                %v364 = vld [vmem:[%s346 + $0x40] sm:%s339]
                %365 = vst [vmem:[%s347 + $0x40] sm:%s339] %v364
                %v366 = vld [vmem:[%s346 + $0x48] sm:%s339]
                %367 = vst [vmem:[%s347 + $0x48] sm:%s339] %v366
                %v368 = vld [vmem:[%s346 + $0x50] sm:%s339]
                %369 = vst [vmem:[%s347 + $0x50] sm:%s339] %v368
                %v370 = vld [vmem:[%s346 + $0x58] sm:%s339]
                %371 = vst [vmem:[%s347 + $0x58] sm:%s339] %v370
                %v372 = vld [vmem:[%s346 + $0x60] sm:%s339]
                %373 = vst [vmem:[%s347 + $0x60] sm:%s339] %v372
                %v374 = vld [vmem:[%s346 + $0x68] sm:%s339]
                %375 = vst [vmem:[%s347 + $0x68] sm:%s339] %v374
                %v376 = vld [vmem:[%s346 + $0x70] sm:%s339]
                %377 = vst [vmem:[%s347 + $0x70] sm:%s339] %v376
                %v378 = vld [vmem:[%s346 + $0x78] sm:%s339]
                %379 = vst [vmem:[%s347 + $0x78] sm:%s339] %v378
                %v380 = vld [vmem:[%s346 + $0x100] sm:%s339]
                %381 = vst [vmem:[%s347 + $0x80] sm:%s339] %v380
                %v382 = vld [vmem:[%s346 + $0x108] sm:%s339]
                %383 = vst [vmem:[%s347 + $0x88] sm:%s339] %v382
                %v384 = vld [vmem:[%s346 + $0x110] sm:%s339]
                %385 = vst [vmem:[%s347 + $0x90] sm:%s339] %v384
                %v386 = vld [vmem:[%s346 + $0x118] sm:%s339]
                %387 = vst [vmem:[%s347 + $0x98] sm:%s339] %v386
                %v388 = vld [vmem:[%s346 + $0x120] sm:%s339]
                %389 = vst [vmem:[%s347 + $0xa0] sm:%s339] %v388
                %v390 = vld [vmem:[%s346 + $0x128] sm:%s339]
                %391 = vst [vmem:[%s347 + $0xa8] sm:%s339] %v390
                %v392 = vld [vmem:[%s346 + $0x130] sm:%s339]
                %393 = vst [vmem:[%s347 + $0xb0] sm:%s339] %v392
                %v394 = vld [vmem:[%s346 + $0x138] sm:%s339]
                %395 = vst [vmem:[%s347 + $0xb8] sm:%s339] %v394
                %v396 = vld [vmem:[%s346 + $0x140] sm:%s339]
                %397 = vst [vmem:[%s347 + $0xc0] sm:%s339] %v396
                %v398 = vld [vmem:[%s346 + $0x148] sm:%s339]
                %399 = vst [vmem:[%s347 + $0xc8] sm:%s339] %v398
                %v400 = vld [vmem:[%s346 + $0x150] sm:%s339]
                %401 = vst [vmem:[%s347 + $0xd0] sm:%s339] %v400
                %v402 = vld [vmem:[%s346 + $0x158] sm:%s339]
                %403 = vst [vmem:[%s347 + $0xd8] sm:%s339] %v402
                %v404 = vld [vmem:[%s346 + $0x160] sm:%s339]
                %405 = vst [vmem:[%s347 + $0xe0] sm:%s339] %v404
                %v406 = vld [vmem:[%s346 + $0x168] sm:%s339]
                %407 = vst [vmem:[%s347 + $0xe8] sm:%s339] %v406
                %v408 = vld [vmem:[%s346 + $0x170] sm:%s339]
                %409 = vst [vmem:[%s347 + $0xf0] sm:%s339] %v408
                %v410 = vld [vmem:[%s346 + $0x178] sm:%s339]
                %411 = vst [vmem:[%s347 + $0xf8] sm:%s339] %v410
                %v412 = vld [vmem:[%s346 + $0x200] sm:%s339]
                %413 = vst [vmem:[%s347 + $0x100] sm:%s339] %v412
                %v414 = vld [vmem:[%s346 + $0x208] sm:%s339]
                %415 = vst [vmem:[%s347 + $0x108] sm:%s339] %v414
                %v416 = vld [vmem:[%s346 + $0x210] sm:%s339]
                %417 = vst [vmem:[%s347 + $0x110] sm:%s339] %v416
                %v418 = vld [vmem:[%s346 + $0x218] sm:%s339]
                %419 = vst [vmem:[%s347 + $0x118] sm:%s339] %v418
                %v420 = vld [vmem:[%s346 + $0x220] sm:%s339]
                %421 = vst [vmem:[%s347 + $0x120] sm:%s339] %v420
                %v422 = vld [vmem:[%s346 + $0x228] sm:%s339]
                %423 = vst [vmem:[%s347 + $0x128] sm:%s339] %v422
                %v424 = vld [vmem:[%s346 + $0x230] sm:%s339]
                %425 = vst [vmem:[%s347 + $0x130] sm:%s339] %v424
                %v426 = vld [vmem:[%s346 + $0x238] sm:%s339]
                %427 = vst [vmem:[%s347 + $0x138] sm:%s339] %v426
                %v428 = vld [vmem:[%s346 + $0x240] sm:%s339]
                %429 = vst [vmem:[%s347 + $0x140] sm:%s339] %v428
                %v430 = vld [vmem:[%s346 + $0x248] sm:%s339]
                %431 = vst [vmem:[%s347 + $0x148] sm:%s339] %v430
                %v432 = vld [vmem:[%s346 + $0x250] sm:%s339]
                %433 = vst [vmem:[%s347 + $0x150] sm:%s339] %v432
                %v434 = vld [vmem:[%s346 + $0x258] sm:%s339]
                %435 = vst [vmem:[%s347 + $0x158] sm:%s339] %v434
                %v436 = vld [vmem:[%s346 + $0x260] sm:%s339]
                %437 = vst [vmem:[%s347 + $0x160] sm:%s339] %v436
                %v438 = vld [vmem:[%s346 + $0x268] sm:%s339]
                %439 = vst [vmem:[%s347 + $0x168] sm:%s339] %v438
                %v440 = vld [vmem:[%s346 + $0x270] sm:%s339]
                %441 = vst [vmem:[%s347 + $0x170] sm:%s339] %v440
                %v442 = vld [vmem:[%s346 + $0x278] sm:%s339]
                %443 = vst [vmem:[%s347 + $0x178] sm:%s339] %v442
                %v444 = vld [vmem:[%s346 + $0x300] sm:%s339]
                %445 = vst [vmem:[%s347 + $0x180] sm:%s339] %v444
                %v446 = vld [vmem:[%s346 + $0x308] sm:%s339]
                %447 = vst [vmem:[%s347 + $0x188] sm:%s339] %v446
                %v448 = vld [vmem:[%s346 + $0x310] sm:%s339]
                %449 = vst [vmem:[%s347 + $0x190] sm:%s339] %v448
                %v450 = vld [vmem:[%s346 + $0x318] sm:%s339]
                %451 = vst [vmem:[%s347 + $0x198] sm:%s339] %v450
                %v452 = vld [vmem:[%s346 + $0x320] sm:%s339]
                %453 = vst [vmem:[%s347 + $0x1a0] sm:%s339] %v452
                %v454 = vld [vmem:[%s346 + $0x328] sm:%s339]
                %455 = vst [vmem:[%s347 + $0x1a8] sm:%s339] %v454
                %v456 = vld [vmem:[%s346 + $0x330] sm:%s339]
                %457 = vst [vmem:[%s347 + $0x1b0] sm:%s339] %v456
                %v458 = vld [vmem:[%s346 + $0x338] sm:%s339]
                %459 = vst [vmem:[%s347 + $0x1b8] sm:%s339] %v458
                %v460 = vld [vmem:[%s346 + $0x340] sm:%s339]
                %461 = vst [vmem:[%s347 + $0x1c0] sm:%s339] %v460
                %v462 = vld [vmem:[%s346 + $0x348] sm:%s339]
                %463 = vst [vmem:[%s347 + $0x1c8] sm:%s339] %v462
                %v464 = vld [vmem:[%s346 + $0x350] sm:%s339]
                %465 = vst [vmem:[%s347 + $0x1d0] sm:%s339] %v464
                %v466 = vld [vmem:[%s346 + $0x358] sm:%s339]
                %467 = vst [vmem:[%s347 + $0x1d8] sm:%s339] %v466
                %v468 = vld [vmem:[%s346 + $0x360] sm:%s339]
                %469 = vst [vmem:[%s347 + $0x1e0] sm:%s339] %v468
                %v470 = vld [vmem:[%s346 + $0x368] sm:%s339]
                %471 = vst [vmem:[%s347 + $0x1e8] sm:%s339] %v470
                %v472 = vld [vmem:[%s346 + $0x370] sm:%s339]
                %473 = vst [vmem:[%s347 + $0x1f0] sm:%s339] %v472
                %v474 = vld [vmem:[%s346 + $0x378] sm:%s339]
                %475 = vst [vmem:[%s347 + $0x1f8] sm:%s339] %v474
              $region76: #{sdr_layer_pallas.1} parent=70 // loop_footer
                %s345 = sadd.s32 1, %s341
              $region77: #{sdr_layer_pallas.1} parent=70 // loop_footer_branch
                %340 = sbr.rel target = $region73
              $region78: #{sdr_layer_pallas.1} parent=70 // loop_exit
                _
            $region71: #{sdr_layer_pallas.1} parent=62 // pred_fallthru
              _
          $region63: #{sdr_layer_pallas.1} parent=58 // pred_fallthru
            _
          %616 = vnop
        $region59: #{sdr_layer_pallas.1} parent=31 // pred_fallthru
          _
        // Predicated region
        $region94: #{sdr_layer_pallas.1} parent=31 // pred_check
          %p617 = pneg %p106
        $region95: #{sdr_layer_pallas.1} parent=31 // pred_check_branch
          %619 = sbr.rel (%p617) target = $region97
        $region96: #{sdr_layer_pallas.1} parent=31 // pred_region
          %s620 = smul.u32 16, %s13
          %p621 = scmp.lt.s32.totalorder %s620, 31
          %s622 = scalar_select %p621, %s620, 31
          %s623 = smul.addr %s622, 8
          %s624 = scalar_lea.vmem %s3, %s623
          %s625 = smul.u32 16, %s13
        $region97: #{sdr_layer_pallas.1} parent=31 // pred_fallthru
          _
      $region32: #{sdr_layer_pallas.1} parent=5 // pred_fallthru
        _
      %p626 = scmp.le.s32.totalorder 1, %s13
      %p627 = scmp.lt.s32.totalorder %s13, 3
      %p628 = pnand %p626, %p627
      %p629 = pneg %p628
      // Predicated region
      $region98: #{sdr_layer_pallas.1} parent=5 // pred_check
        _
      $region99: #{sdr_layer_pallas.1} parent=5 // pred_check_branch
        %631 = sbr.rel (%p628) target = $region101
      $region100: #{sdr_layer_pallas.1} parent=5 // pred_region
        %s632 = ssub.s32 %s13, 1
        %s633 = sand.u32 %s26, 1
        %s634 = sand.u32 %s26, 1
        %s635 = smul.addr %s634, 256
        %s636 = scalar_lea.vmem [#allocation3], %s635
        // Predicated region
        $region102: #{sdr_layer_pallas.1} parent=100 // pred_check
          %p637 = pneg %p39
        $region103: #{sdr_layer_pallas.1} parent=100 // pred_check_branch
          %639 = sbr.rel (%p637) target = $region105
        $region104: #{sdr_layer_pallas.1} parent=100 // pred_region
          _
        $region105: #{sdr_layer_pallas.1} parent=100 // pred_fallthru
          _
        %s640 = sand.u32 %s73, 1
        %s641 = sand.u32 %s73, 1
        %s642 = smul.addr %s641, 512
        %s643 = scalar_lea.vmem [#allocation4], %s642
        // Predicated region
        $region106: #{sdr_layer_pallas.1} parent=100 // pred_check
          %p644 = pneg %p86
        $region107: #{sdr_layer_pallas.1} parent=100 // pred_check_branch
          %646 = sbr.rel (%p644) target = $region109
        $region108: #{sdr_layer_pallas.1} parent=100 // pred_region
          _
        $region109: #{sdr_layer_pallas.1} parent=100 // pred_fallthru
          _
        %s647 = sand.u32 %s26, 1
        %s648 = sand.u32 %s26, 1
        %s649 = smul.addr %s648, 256
        %s650 = scalar_lea.vmem [#allocation3], %s649
        %p651 = pneg %p39
        %p652 = pneg %p36
        %p653 = pneg %p60
        %p654 = pneg %p57
        %s655 = sand.u32 %s73, 1
        %s656 = sand.u32 %s73, 1
        %s657 = smul.addr %s656, 512
        %s658 = scalar_lea.vmem [#allocation4], %s657
        %p659 = pneg %p86
        %p660 = pneg %p83
        %s661 = smul.u32 16, %s18
        %p662 = scmp.lt.s32.totalorder %s661, 31
        %s663 = scalar_select %p662, %s661, 31
        %s664 = smul.addr %s663, 8
        %s665 = scalar_lea.vmem %s3, %s664
        %p666 = pneg %p112
        %p667 = pneg %p109
        %p668 = pneg %p133
        %p669 = pneg %p130
        %p670 = pneg %p154
        %p671 = pneg %p151
        %p672 = pneg %p175
        %p673 = pneg %p172
        %p674 = pneg %p201
        %p675 = pneg %p198
        %s676 = smul.u32 16, %s18
        %p677 = scmp.lt.s32.totalorder %s676, 31
        %s678 = scalar_select %p677, %s676, 31
        %s679 = smul.addr %s678, 8
        %s680 = scalar_lea.vmem %s7, %s679
        %s681 = smul.u32 4, %s18
        %s682 = smul.u32 16, %s18
        %s683 = smul.u32 16, %s18
        %p684 = scmp.lt.s32.totalorder %s683, 31
        %s685 = scalar_select %p684, %s683, 31
        %s686 = smul.addr %s685, 8
        %s687 = scalar_lea.vmem %s3, %s686
        %s688 = smul.u32 16, %s18
        %s689 = smul.u32 16, %s18
        %p690 = scmp.lt.s32.totalorder %s689, 31
        %s691 = scalar_select %p690, %s689, 31
        %s692 = smul.addr %s691, 8
        %s693 = scalar_lea.vmem %s7, %s692
        %s694 = smul.u32 16, %s18
        %v698 = vld [vmem:[%s643] sm:$0xff]
        %v699 = vld [vmem:[%s643 + $0x8] sm:$0xff]
        %v700 = vld [vmem:[%s643 + $0x10] sm:$0xff]
        %v701 = vld [vmem:[%s643 + $0x18] sm:$0xff]
        %v702 = vld [vmem:[%s643 + $0x20] sm:$0xff]
        %v703 = vld [vmem:[%s643 + $0x28] sm:$0xff]
        %v704 = vld [vmem:[%s643 + $0x30] sm:$0xff]
        %v705 = vld [vmem:[%s643 + $0x38] sm:$0xff]
        %v706 = vld [vmem:[%s643 + $0x40] sm:$0xff]
        %v707 = vld [vmem:[%s643 + $0x48] sm:$0xff]
        %v708 = vld [vmem:[%s643 + $0x50] sm:$0xff]
        %v709 = vld [vmem:[%s643 + $0x58] sm:$0xff]
        %v710 = vld [vmem:[%s643 + $0x60] sm:$0xff]
        %v711 = vld [vmem:[%s643 + $0x68] sm:$0xff]
        %v712 = vld [vmem:[%s643 + $0x70] sm:$0xff]
        %v713 = vld [vmem:[%s643 + $0x78] sm:$0xff]
        %v714 = vld [vmem:[%s1] ss:$4 sm:$0x3]
        %716 = vset.pattern.permute.xlu0 0
        %717 = vperm.xlu0 %716, %v698
        %v718 = vpop.permute.xlu0 %717
        %721 = vset.pattern.permute.xlu0 0
        %722 = vperm.xlu0 %721, %v699
        %v723 = vpop.permute.xlu0 %722
        %726 = vset.pattern.permute.xlu0 0
        %727 = vperm.xlu0 %726, %v700
        %v728 = vpop.permute.xlu0 %727
        %731 = vset.pattern.permute.xlu0 0
        %732 = vperm.xlu0 %731, %v701
        %v733 = vpop.permute.xlu0 %732
        %736 = vset.pattern.permute.xlu0 0
        %737 = vperm.xlu0 %736, %v702
        %v738 = vpop.permute.xlu0 %737
        %741 = vset.pattern.permute.xlu0 0
        %742 = vperm.xlu0 %741, %v703
        %v743 = vpop.permute.xlu0 %742
        %746 = vset.pattern.permute.xlu0 0
        %747 = vperm.xlu0 %746, %v704
        %v748 = vpop.permute.xlu0 %747
        %751 = vset.pattern.permute.xlu0 0
        %752 = vperm.xlu0 %751, %v705
        %v753 = vpop.permute.xlu0 %752
        %756 = vset.pattern.permute.xlu0 0
        %757 = vperm.xlu0 %756, %v706
        %v758 = vpop.permute.xlu0 %757
        %761 = vset.pattern.permute.xlu0 0
        %762 = vperm.xlu0 %761, %v707
        %v763 = vpop.permute.xlu0 %762
        %766 = vset.pattern.permute.xlu0 0
        %767 = vperm.xlu0 %766, %v708
        %v768 = vpop.permute.xlu0 %767
        %771 = vset.pattern.permute.xlu0 0
        %772 = vperm.xlu0 %771, %v709
        %v773 = vpop.permute.xlu0 %772
        %776 = vset.pattern.permute.xlu0 0
        %777 = vperm.xlu0 %776, %v710
        %v778 = vpop.permute.xlu0 %777
        %781 = vset.pattern.permute.xlu0 0
        %782 = vperm.xlu0 %781, %v711
        %v783 = vpop.permute.xlu0 %782
        %786 = vset.pattern.permute.xlu0 0
        %787 = vperm.xlu0 %786, %v712
        %v788 = vpop.permute.xlu0 %787
        %791 = vset.pattern.permute.xlu0 0
        %792 = vperm.xlu0 %791, %v713
        %v793 = vpop.permute.xlu0 %792
        %v796 = vlaneseq
        %v797 = vshrl.u32 %v796, 7
        %v798 = vsub.s32 0, %v797
        %v799 = vrot.slane %v714, %v798
        %v800 = vlaneseq
        %v801 = vshrl.u32 %v800, 7
        %v802 = vsub.s32 1, %v801
        %v803 = vrot.slane %v714, %v802
        %v806 = vadd.f32 %v718, %v799
        %v807 = vadd.f32 %v718, %v803
        %v808 = vadd.f32 %v723, %v799
        %v809 = vadd.f32 %v723, %v803
        %v810 = vadd.f32 %v728, %v799
        %v811 = vadd.f32 %v728, %v803
        %v812 = vadd.f32 %v733, %v799
        %v813 = vadd.f32 %v733, %v803
        %v814 = vadd.f32 %v738, %v799
        %v815 = vadd.f32 %v738, %v803
        %v816 = vadd.f32 %v743, %v799
        %v817 = vadd.f32 %v743, %v803
        %v818 = vadd.f32 %v748, %v799
        %v819 = vadd.f32 %v748, %v803
        %v820 = vadd.f32 %v753, %v799
        %v821 = vadd.f32 %v753, %v803
        %v822 = vadd.f32 %v758, %v799
        %v823 = vadd.f32 %v758, %v803
        %v824 = vadd.f32 %v763, %v799
        %v825 = vadd.f32 %v763, %v803
        %v826 = vadd.f32 %v768, %v799
        %v827 = vadd.f32 %v768, %v803
        %v828 = vadd.f32 %v773, %v799
        %v829 = vadd.f32 %v773, %v803
        %v830 = vadd.f32 %v778, %v799
        %v831 = vadd.f32 %v778, %v803
        %v832 = vadd.f32 %v783, %v799
        %v833 = vadd.f32 %v783, %v803
        %v834 = vadd.f32 %v788, %v799
        %v835 = vadd.f32 %v788, %v803
        %v836 = vadd.f32 %v793, %v799
        %v837 = vadd.f32 %v793, %v803
        %v838 = vmul.f32 %v806, 0.2
        %v839 = vmul.f32 %v807, 0.2
        %v840 = vmul.f32 %v808, 0.2
        %v841 = vmul.f32 %v809, 0.2
        %v842 = vmul.f32 %v810, 0.2
        %v843 = vmul.f32 %v811, 0.2
        %v844 = vmul.f32 %v812, 0.2
        %v845 = vmul.f32 %v813, 0.2
        %v846 = vmul.f32 %v814, 0.2
        %v847 = vmul.f32 %v815, 0.2
        %v848 = vmul.f32 %v816, 0.2
        %v849 = vmul.f32 %v817, 0.2
        %v850 = vmul.f32 %v818, 0.2
        %v851 = vmul.f32 %v819, 0.2
        %v852 = vmul.f32 %v820, 0.2
        %v853 = vmul.f32 %v821, 0.2
        %v854 = vmul.f32 %v822, 0.2
        %v855 = vmul.f32 %v823, 0.2
        %v856 = vmul.f32 %v824, 0.2
        %v857 = vmul.f32 %v825, 0.2
        %v858 = vmul.f32 %v826, 0.2
        %v859 = vmul.f32 %v827, 0.2
        %v860 = vmul.f32 %v828, 0.2
        %v861 = vmul.f32 %v829, 0.2
        %v862 = vmul.f32 %v830, 0.2
        %v863 = vmul.f32 %v831, 0.2
        %v864 = vmul.f32 %v832, 0.2
        %v865 = vmul.f32 %v833, 0.2
        %v866 = vmul.f32 %v834, 0.2
        %v867 = vmul.f32 %v835, 0.2
        %v868 = vmul.f32 %v836, 0.2
        %v869 = vmul.f32 %v837, 0.2
        %v870 = vmax.f32 %v806, %v838
        %v871 = vmax.f32 %v807, %v839
        %v872 = vmax.f32 %v808, %v840
        %v873 = vmax.f32 %v809, %v841
        %v874 = vmax.f32 %v810, %v842
        %v875 = vmax.f32 %v811, %v843
        %v876 = vmax.f32 %v812, %v844
        %v877 = vmax.f32 %v813, %v845
        %v878 = vmax.f32 %v814, %v846
        %v879 = vmax.f32 %v815, %v847
        %v880 = vmax.f32 %v816, %v848
        %v881 = vmax.f32 %v817, %v849
        %v882 = vmax.f32 %v818, %v850
        %v883 = vmax.f32 %v819, %v851
        %v884 = vmax.f32 %v820, %v852
        %v885 = vmax.f32 %v821, %v853
        %v886 = vmax.f32 %v822, %v854
        %v887 = vmax.f32 %v823, %v855
        %v888 = vmax.f32 %v824, %v856
        %v889 = vmax.f32 %v825, %v857
        %v890 = vmax.f32 %v826, %v858
        %v891 = vmax.f32 %v827, %v859
        %v892 = vmax.f32 %v828, %v860
        %v893 = vmax.f32 %v829, %v861
        %v894 = vmax.f32 %v830, %v862
        %v895 = vmax.f32 %v831, %v863
        %v896 = vmax.f32 %v832, %v864
        %v897 = vmax.f32 %v833, %v865
        %v898 = vmax.f32 %v834, %v866
        %v899 = vmax.f32 %v835, %v867
        %v900 = vmax.f32 %v836, %v868
        %v901 = vmax.f32 %v837, %v869
        %v902 = vld [vmem:[%s636] sm:$0xff]
        %v903 = vld [vmem:[%s636 + $0x8] sm:$0xff]
        %v904 = vld [vmem:[%s636 + $0x10] sm:$0xff]
        %v905 = vld [vmem:[%s636 + $0x18] sm:$0xff]
        %v906 = vld [vmem:[%s636 + $0x20] sm:$0xff]
        %v907 = vld [vmem:[%s636 + $0x28] sm:$0xff]
        %v908 = vld [vmem:[%s636 + $0x30] sm:$0xff]
        %v909 = vld [vmem:[%s636 + $0x38] sm:$0xff]
        %vm910 = vnez %v902
        %vm911 = vnez %v903
        %vm912 = vnez %v904
        %vm913 = vnez %v905
        %vm914 = vnez %v906
        %vm915 = vnez %v907
        %vm916 = vnez %v908
        %vm917 = vnez %v909
        %v918 = vsel %vm910, 16843009, 0
        %v919 = vsel %vm911, 16843009, 0
        %v920 = vsel %vm912, 16843009, 0
        %v921 = vsel %vm913, 16843009, 0
        %v922 = vsel %vm914, 16843009, 0
        %v923 = vsel %vm915, 16843009, 0
        %v924 = vsel %vm916, 16843009, 0
        %v925 = vsel %vm917, 16843009, 0
        %v926 = vunpack.c.0.s8 %v918
        %v927 = vunpack.c.0.s8 %v919
        %v928 = vunpack.c.1.s8 %v918
        %v929 = vunpack.c.1.s8 %v919
        %v930 = vunpack.c.2.s8 %v918
        %v931 = vunpack.c.2.s8 %v919
        %v932 = vunpack.c.3.s8 %v918
        %v933 = vunpack.c.3.s8 %v919
        %v934 = vunpack.c.0.s8 %v920
        %v935 = vunpack.c.0.s8 %v921
        %v936 = vunpack.c.1.s8 %v920
        %v937 = vunpack.c.1.s8 %v921
        %v938 = vunpack.c.2.s8 %v920
        %v939 = vunpack.c.2.s8 %v921
        %v940 = vunpack.c.3.s8 %v920
        %v941 = vunpack.c.3.s8 %v921
        %v942 = vunpack.c.0.s8 %v922
        %v943 = vunpack.c.0.s8 %v923
        %v944 = vunpack.c.1.s8 %v922
        %v945 = vunpack.c.1.s8 %v923
        %v946 = vunpack.c.2.s8 %v922
        %v947 = vunpack.c.2.s8 %v923
        %v948 = vunpack.c.3.s8 %v922
        %v949 = vunpack.c.3.s8 %v923
        %v950 = vunpack.c.0.s8 %v924
        %v951 = vunpack.c.0.s8 %v925
        %v952 = vunpack.c.1.s8 %v924
        %v953 = vunpack.c.1.s8 %v925
        %v954 = vunpack.c.2.s8 %v924
        %v955 = vunpack.c.2.s8 %v925
        %v956 = vunpack.c.3.s8 %v924
        %v957 = vunpack.c.3.s8 %v925
        %v958 = vpack.c.b16 %v927, %v926
        %v959 = vpack.c.b8 %v958, %v958
        %v960 = vpack.c.b16 %v929, %v928
        %v961 = vpack.c.b8 %v960, %v960
        %v962 = vpack.c.b16 %v931, %v930
        %v963 = vpack.c.b8 %v962, %v962
        %v964 = vpack.c.b16 %v933, %v932
        %v965 = vpack.c.b8 %v964, %v964
        %v966 = vpack.c.b16 %v935, %v934
        %v967 = vpack.c.b8 %v966, %v966
        %v968 = vpack.c.b16 %v937, %v936
        %v969 = vpack.c.b8 %v968, %v968
        %v970 = vpack.c.b16 %v939, %v938
        %v971 = vpack.c.b8 %v970, %v970
        %v972 = vpack.c.b16 %v941, %v940
        %v973 = vpack.c.b8 %v972, %v972
        %v974 = vpack.c.b16 %v943, %v942
        %v975 = vpack.c.b8 %v974, %v974
        %v976 = vpack.c.b16 %v945, %v944
        %v977 = vpack.c.b8 %v976, %v976
        %v978 = vpack.c.b16 %v947, %v946
        %v979 = vpack.c.b8 %v978, %v978
        %v980 = vpack.c.b16 %v949, %v948
        %v981 = vpack.c.b8 %v980, %v980
        %v982 = vpack.c.b16 %v951, %v950
        %v983 = vpack.c.b8 %v982, %v982
        %v984 = vpack.c.b16 %v953, %v952
        %v985 = vpack.c.b8 %v984, %v984
        %v986 = vpack.c.b16 %v955, %v954
        %v987 = vpack.c.b8 %v986, %v986
        %v988 = vpack.c.b16 %v957, %v956
        %v989 = vpack.c.b8 %v988, %v988
        %vm990 = vnez %v959
        %vm991 = vnez %v961
        %vm992 = vnez %v963
        %vm993 = vnez %v965
        %vm994 = vnez %v967
        %vm995 = vnez %v969
        %vm996 = vnez %v971
        %vm997 = vnez %v973
        %vm998 = vnez %v975
        %vm999 = vnez %v977
        %vm1000 = vnez %v979
        %vm1001 = vnez %v981
        %vm1002 = vnez %v983
        %vm1003 = vnez %v985
        %vm1004 = vnez %v987
        %vm1005 = vnez %v989
        %v1006 = vsel %vm990, 16843009, 0
        %v1007 = vsel %vm991, 16843009, 0
        %v1008 = vsel %vm992, 16843009, 0
        %v1009 = vsel %vm993, 16843009, 0
        %v1010 = vsel %vm994, 16843009, 0
        %v1011 = vsel %vm995, 16843009, 0
        %v1012 = vsel %vm996, 16843009, 0
        %v1013 = vsel %vm997, 16843009, 0
        %v1014 = vsel %vm998, 16843009, 0
        %v1015 = vsel %vm999, 16843009, 0
        %v1016 = vsel %vm1000, 16843009, 0
        %v1017 = vsel %vm1001, 16843009, 0
        %v1018 = vsel %vm1002, 16843009, 0
        %v1019 = vsel %vm1003, 16843009, 0
        %v1020 = vsel %vm1004, 16843009, 0
        %v1021 = vsel %vm1005, 16843009, 0
        %v1022 = vunpack.c.0.s8 %v1006
        %v1023 = vunpack.c.1.s8 %v1006
        %v1024 = vunpack.c.0.s8 %v1007
        %v1025 = vunpack.c.1.s8 %v1007
        %v1026 = vunpack.c.0.s8 %v1008
        %v1027 = vunpack.c.1.s8 %v1008
        %v1028 = vunpack.c.0.s8 %v1009
        %v1029 = vunpack.c.1.s8 %v1009
        %v1030 = vunpack.c.0.s8 %v1010
        %v1031 = vunpack.c.1.s8 %v1010
        %v1032 = vunpack.c.0.s8 %v1011
        %v1033 = vunpack.c.1.s8 %v1011
        %v1034 = vunpack.c.0.s8 %v1012
        %v1035 = vunpack.c.1.s8 %v1012
        %v1036 = vunpack.c.0.s8 %v1013
        %v1037 = vunpack.c.1.s8 %v1013
        %v1038 = vunpack.c.0.s8 %v1014
        %v1039 = vunpack.c.1.s8 %v1014
        %v1040 = vunpack.c.0.s8 %v1015
        %v1041 = vunpack.c.1.s8 %v1015
        %v1042 = vunpack.c.0.s8 %v1016
        %v1043 = vunpack.c.1.s8 %v1016
        %v1044 = vunpack.c.0.s8 %v1017
        %v1045 = vunpack.c.1.s8 %v1017
        %v1046 = vunpack.c.0.s8 %v1018
        %v1047 = vunpack.c.1.s8 %v1018
        %v1048 = vunpack.c.0.s8 %v1019
        %v1049 = vunpack.c.1.s8 %v1019
        %v1050 = vunpack.c.0.s8 %v1020
        %v1051 = vunpack.c.1.s8 %v1020
        %v1052 = vunpack.c.0.s8 %v1021
        %v1053 = vunpack.c.1.s8 %v1021
        %vm1054 = vcmp.ne.s32.totalorder %v1022, 0
        %vm1055 = vcmp.ne.s32.totalorder %v1023, 0
        %vm1056 = vcmp.ne.s32.totalorder %v1024, 0
        %vm1057 = vcmp.ne.s32.totalorder %v1025, 0
        %vm1058 = vcmp.ne.s32.totalorder %v1026, 0
        %vm1059 = vcmp.ne.s32.totalorder %v1027, 0
        %vm1060 = vcmp.ne.s32.totalorder %v1028, 0
        %vm1061 = vcmp.ne.s32.totalorder %v1029, 0
        %vm1062 = vcmp.ne.s32.totalorder %v1030, 0
        %vm1063 = vcmp.ne.s32.totalorder %v1031, 0
        %vm1064 = vcmp.ne.s32.totalorder %v1032, 0
        %vm1065 = vcmp.ne.s32.totalorder %v1033, 0
        %vm1066 = vcmp.ne.s32.totalorder %v1034, 0
        %vm1067 = vcmp.ne.s32.totalorder %v1035, 0
        %vm1068 = vcmp.ne.s32.totalorder %v1036, 0
        %vm1069 = vcmp.ne.s32.totalorder %v1037, 0
        %vm1070 = vcmp.ne.s32.totalorder %v1038, 0
        %vm1071 = vcmp.ne.s32.totalorder %v1039, 0
        %vm1072 = vcmp.ne.s32.totalorder %v1040, 0
        %vm1073 = vcmp.ne.s32.totalorder %v1041, 0
        %vm1074 = vcmp.ne.s32.totalorder %v1042, 0
        %vm1075 = vcmp.ne.s32.totalorder %v1043, 0
        %vm1076 = vcmp.ne.s32.totalorder %v1044, 0
        %vm1077 = vcmp.ne.s32.totalorder %v1045, 0
        %vm1078 = vcmp.ne.s32.totalorder %v1046, 0
        %vm1079 = vcmp.ne.s32.totalorder %v1047, 0
        %vm1080 = vcmp.ne.s32.totalorder %v1048, 0
        %vm1081 = vcmp.ne.s32.totalorder %v1049, 0
        %vm1082 = vcmp.ne.s32.totalorder %v1050, 0
        %vm1083 = vcmp.ne.s32.totalorder %v1051, 0
        %vm1084 = vcmp.ne.s32.totalorder %v1052, 0
        %vm1085 = vcmp.ne.s32.totalorder %v1053, 0
        %v1086 = vsel %vm1054, %v870, -1e+30
        %v1087 = vsel %vm1055, %v871, -1e+30
        %v1088 = vsel %vm1056, %v872, -1e+30
        %v1089 = vsel %vm1057, %v873, -1e+30
        %v1090 = vsel %vm1058, %v874, -1e+30
        %v1091 = vsel %vm1059, %v875, -1e+30
        %v1092 = vsel %vm1060, %v876, -1e+30
        %v1093 = vsel %vm1061, %v877, -1e+30
        %v1094 = vsel %vm1062, %v878, -1e+30
        %v1095 = vsel %vm1063, %v879, -1e+30
        %v1096 = vsel %vm1064, %v880, -1e+30
        %v1097 = vsel %vm1065, %v881, -1e+30
        %v1098 = vsel %vm1066, %v882, -1e+30
        %v1099 = vsel %vm1067, %v883, -1e+30
        %v1100 = vsel %vm1068, %v884, -1e+30
        %v1101 = vsel %vm1069, %v885, -1e+30
        %v1102 = vsel %vm1070, %v886, -1e+30
        %v1103 = vsel %vm1071, %v887, -1e+30
        %v1104 = vsel %vm1072, %v888, -1e+30
        %v1105 = vsel %vm1073, %v889, -1e+30
        %v1106 = vsel %vm1074, %v890, -1e+30
        %v1107 = vsel %vm1075, %v891, -1e+30
        %v1108 = vsel %vm1076, %v892, -1e+30
        %v1109 = vsel %vm1077, %v893, -1e+30
        %v1110 = vsel %vm1078, %v894, -1e+30
        %v1111 = vsel %vm1079, %v895, -1e+30
        %v1112 = vsel %vm1080, %v896, -1e+30
        %v1113 = vsel %vm1081, %v897, -1e+30
        %v1114 = vsel %vm1082, %v898, -1e+30
        %v1115 = vsel %vm1083, %v899, -1e+30
        %v1116 = vsel %vm1084, %v900, -1e+30
        %v1117 = vsel %vm1085, %v901, -1e+30
        %v1118 = vmax.f32 %v1086, %v1087
        %1119 = vmax.xlane.f32.xlu0 %v1118
        %v1120 = vpop.xlane.xlu0 %1119
        %v1121 = vmax.f32 %v1088, %v1089
        %1122 = vmax.xlane.f32.xlu0 %v1121
        %v1123 = vpop.xlane.xlu0 %1122
        %v1124 = vmax.f32 %v1090, %v1091
        %1125 = vmax.xlane.f32.xlu0 %v1124
        %v1126 = vpop.xlane.xlu0 %1125
        %v1127 = vmax.f32 %v1092, %v1093
        %1128 = vmax.xlane.f32.xlu0 %v1127
        %v1129 = vpop.xlane.xlu0 %1128
        %v1130 = vmax.f32 %v1094, %v1095
        %1131 = vmax.xlane.f32.xlu0 %v1130
        %v1132 = vpop.xlane.xlu0 %1131
        %v1133 = vmax.f32 %v1096, %v1097
        %1134 = vmax.xlane.f32.xlu0 %v1133
        %v1135 = vpop.xlane.xlu0 %1134
        %v1136 = vmax.f32 %v1098, %v1099
        %1137 = vmax.xlane.f32.xlu0 %v1136
        %v1138 = vpop.xlane.xlu0 %1137
        %v1139 = vmax.f32 %v1100, %v1101
        %1140 = vmax.xlane.f32.xlu0 %v1139
        %v1141 = vpop.xlane.xlu0 %1140
        %v1142 = vmax.f32 %v1102, %v1103
        %1143 = vmax.xlane.f32.xlu0 %v1142
        %v1144 = vpop.xlane.xlu0 %1143
        %v1145 = vmax.f32 %v1104, %v1105
        %1146 = vmax.xlane.f32.xlu0 %v1145
        %v1147 = vpop.xlane.xlu0 %1146
        %v1148 = vmax.f32 %v1106, %v1107
        %1149 = vmax.xlane.f32.xlu0 %v1148
        %v1150 = vpop.xlane.xlu0 %1149
        %v1151 = vmax.f32 %v1108, %v1109
        %1152 = vmax.xlane.f32.xlu0 %v1151
        %v1153 = vpop.xlane.xlu0 %1152
        %v1154 = vmax.f32 %v1110, %v1111
        %1155 = vmax.xlane.f32.xlu0 %v1154
        %v1156 = vpop.xlane.xlu0 %1155
        %v1157 = vmax.f32 %v1112, %v1113
        %1158 = vmax.xlane.f32.xlu0 %v1157
        %v1159 = vpop.xlane.xlu0 %1158
        %v1160 = vmax.f32 %v1114, %v1115
        %1161 = vmax.xlane.f32.xlu0 %v1160
        %v1162 = vpop.xlane.xlu0 %1161
        %v1163 = vmax.f32 %v1116, %v1117
        %1164 = vmax.xlane.f32.xlu0 %v1163
        %v1165 = vpop.xlane.xlu0 %1164
        %v1166 = vsub.f32 %v1086, %v1120
        %v1167 = vsub.f32 %v1087, %v1120
        %v1168 = vsub.f32 %v1088, %v1123
        %v1169 = vsub.f32 %v1089, %v1123
        %v1170 = vsub.f32 %v1090, %v1126
        %v1171 = vsub.f32 %v1091, %v1126
        %v1172 = vsub.f32 %v1092, %v1129
        %v1173 = vsub.f32 %v1093, %v1129
        %v1174 = vsub.f32 %v1094, %v1132
        %v1175 = vsub.f32 %v1095, %v1132
        %v1176 = vsub.f32 %v1096, %v1135
        %v1177 = vsub.f32 %v1097, %v1135
        %v1178 = vsub.f32 %v1098, %v1138
        %v1179 = vsub.f32 %v1099, %v1138
        %v1180 = vsub.f32 %v1100, %v1141
        %v1181 = vsub.f32 %v1101, %v1141
        %v1182 = vsub.f32 %v1102, %v1144
        %v1183 = vsub.f32 %v1103, %v1144
        %v1184 = vsub.f32 %v1104, %v1147
        %v1185 = vsub.f32 %v1105, %v1147
        %v1186 = vsub.f32 %v1106, %v1150
        %v1187 = vsub.f32 %v1107, %v1150
        %v1188 = vsub.f32 %v1108, %v1153
        %v1189 = vsub.f32 %v1109, %v1153
        %v1190 = vsub.f32 %v1110, %v1156
        %v1191 = vsub.f32 %v1111, %v1156
        %v1192 = vsub.f32 %v1112, %v1159
        %v1193 = vsub.f32 %v1113, %v1159
        %v1194 = vsub.f32 %v1114, %v1162
        %v1195 = vsub.f32 %v1115, %v1162
        %v1196 = vsub.f32 %v1116, %v1165
        %v1197 = vsub.f32 %v1117, %v1165
        %v1198 = vmul.f32 %v1166, 1.442695
        %v1199 = vpow.pop %v1198
        %v1200 = vmul.f32 %v1167, 1.442695
        %v1201 = vpow.pop %v1200
        %v1202 = vmul.f32 %v1168, 1.442695
        %v1203 = vpow.pop %v1202
        %v1204 = vmul.f32 %v1169, 1.442695
        %v1205 = vpow.pop %v1204
        %v1206 = vmul.f32 %v1170, 1.442695
        %v1207 = vpow.pop %v1206
        %v1208 = vmul.f32 %v1171, 1.442695
        %v1209 = vpow.pop %v1208
        %v1210 = vmul.f32 %v1172, 1.442695
        %v1211 = vpow.pop %v1210
        %v1212 = vmul.f32 %v1173, 1.442695
        %v1213 = vpow.pop %v1212
        %v1214 = vmul.f32 %v1174, 1.442695
        %v1215 = vpow.pop %v1214
        %v1216 = vmul.f32 %v1175, 1.442695
        %v1217 = vpow.pop %v1216
        %v1218 = vmul.f32 %v1176, 1.442695
        %v1219 = vpow.pop %v1218
        %v1220 = vmul.f32 %v1177, 1.442695
        %v1221 = vpow.pop %v1220
        %v1222 = vmul.f32 %v1178, 1.442695
        %v1223 = vpow.pop %v1222
        %v1224 = vmul.f32 %v1179, 1.442695
        %v1225 = vpow.pop %v1224
        %v1226 = vmul.f32 %v1180, 1.442695
        %v1227 = vpow.pop %v1226
        %v1228 = vmul.f32 %v1181, 1.442695
        %v1229 = vpow.pop %v1228
        %v1230 = vmul.f32 %v1182, 1.442695
        %v1231 = vpow.pop %v1230
        %v1232 = vmul.f32 %v1183, 1.442695
        %v1233 = vpow.pop %v1232
        %v1234 = vmul.f32 %v1184, 1.442695
        %v1235 = vpow.pop %v1234
        %v1236 = vmul.f32 %v1185, 1.442695
        %v1237 = vpow.pop %v1236
        %v1238 = vmul.f32 %v1186, 1.442695
        %v1239 = vpow.pop %v1238
        %v1240 = vmul.f32 %v1187, 1.442695
        %v1241 = vpow.pop %v1240
        %v1242 = vmul.f32 %v1188, 1.442695
        %v1243 = vpow.pop %v1242
        %v1244 = vmul.f32 %v1189, 1.442695
        %v1245 = vpow.pop %v1244
        %v1246 = vmul.f32 %v1190, 1.442695
        %v1247 = vpow.pop %v1246
        %v1248 = vmul.f32 %v1191, 1.442695
        %v1249 = vpow.pop %v1248
        %v1250 = vmul.f32 %v1192, 1.442695
        %v1251 = vpow.pop %v1250
        %v1252 = vmul.f32 %v1193, 1.442695
        %v1253 = vpow.pop %v1252
        %v1254 = vmul.f32 %v1194, 1.442695
        %v1255 = vpow.pop %v1254
        %v1256 = vmul.f32 %v1195, 1.442695
        %v1257 = vpow.pop %v1256
        %v1258 = vmul.f32 %v1196, 1.442695
        %v1259 = vpow.pop %v1258
        %v1260 = vmul.f32 %v1197, 1.442695
        %v1261 = vpow.pop %v1260
        %v1262 = vadd.f32 %v1199, %v1201
        %1263 = vadd.xlane.f32.xlu0 %v1262
        %v1264 = vpop.xlane.xlu0 %1263
        %v1265 = vadd.f32 %v1203, %v1205
        %1266 = vadd.xlane.f32.xlu0 %v1265
        %v1267 = vpop.xlane.xlu0 %1266
        %v1268 = vadd.f32 %v1207, %v1209
        %1269 = vadd.xlane.f32.xlu0 %v1268
        %v1270 = vpop.xlane.xlu0 %1269
        %v1271 = vadd.f32 %v1211, %v1213
        %1272 = vadd.xlane.f32.xlu0 %v1271
        %v1273 = vpop.xlane.xlu0 %1272
        %v1274 = vadd.f32 %v1215, %v1217
        %1275 = vadd.xlane.f32.xlu0 %v1274
        %v1276 = vpop.xlane.xlu0 %1275
        %v1277 = vadd.f32 %v1219, %v1221
        %1278 = vadd.xlane.f32.xlu0 %v1277
        %v1279 = vpop.xlane.xlu0 %1278
        %v1280 = vadd.f32 %v1223, %v1225
        %1281 = vadd.xlane.f32.xlu0 %v1280
        %v1282 = vpop.xlane.xlu0 %1281
        %v1283 = vadd.f32 %v1227, %v1229
        %1284 = vadd.xlane.f32.xlu0 %v1283
        %v1285 = vpop.xlane.xlu0 %1284
        %v1286 = vadd.f32 %v1231, %v1233
        %1287 = vadd.xlane.f32.xlu0 %v1286
        %v1288 = vpop.xlane.xlu0 %1287
        %v1289 = vadd.f32 %v1235, %v1237
        %1290 = vadd.xlane.f32.xlu0 %v1289
        %v1291 = vpop.xlane.xlu0 %1290
        %v1292 = vadd.f32 %v1239, %v1241
        %1293 = vadd.xlane.f32.xlu0 %v1292
        %v1294 = vpop.xlane.xlu0 %1293
        %v1295 = vadd.f32 %v1243, %v1245
        %1296 = vadd.xlane.f32.xlu0 %v1295
        %v1297 = vpop.xlane.xlu0 %1296
        %v1298 = vadd.f32 %v1247, %v1249
        %1299 = vadd.xlane.f32.xlu0 %v1298
        %v1300 = vpop.xlane.xlu0 %1299
        %v1301 = vadd.f32 %v1251, %v1253
        %1302 = vadd.xlane.f32.xlu0 %v1301
        %v1303 = vpop.xlane.xlu0 %1302
        %v1304 = vadd.f32 %v1255, %v1257
        %1305 = vadd.xlane.f32.xlu0 %v1304
        %v1306 = vpop.xlane.xlu0 %1305
        %v1307 = vadd.f32 %v1259, %v1261
        %1308 = vadd.xlane.f32.xlu0 %v1307
        %v1309 = vpop.xlane.xlu0 %1308
        %v1310 = vrcp.pop %v1264
        %v1311 = vrcp.pop %v1267
        %v1312 = vrcp.pop %v1270
        %v1313 = vrcp.pop %v1273
        %v1314 = vrcp.pop %v1276
        %v1315 = vrcp.pop %v1279
        %v1316 = vrcp.pop %v1282
        %v1317 = vrcp.pop %v1285
        %v1318 = vrcp.pop %v1288
        %v1319 = vrcp.pop %v1291
        %v1320 = vrcp.pop %v1294
        %v1321 = vrcp.pop %v1297
        %v1322 = vrcp.pop %v1300
        %v1323 = vrcp.pop %v1303
        %v1324 = vrcp.pop %v1306
        %v1325 = vrcp.pop %v1309
        %v1326 = vmul.f32 %v1199, %v1310
        %v1327 = vmul.f32 %v1201, %v1310
        %v1328 = vmul.f32 %v1203, %v1311
        %v1329 = vmul.f32 %v1205, %v1311
        %v1330 = vmul.f32 %v1207, %v1312
        %v1331 = vmul.f32 %v1209, %v1312
        %v1332 = vmul.f32 %v1211, %v1313
        %v1333 = vmul.f32 %v1213, %v1313
        %v1334 = vmul.f32 %v1215, %v1314
        %v1335 = vmul.f32 %v1217, %v1314
        %v1336 = vmul.f32 %v1219, %v1315
        %v1337 = vmul.f32 %v1221, %v1315
        %v1338 = vmul.f32 %v1223, %v1316
        %v1339 = vmul.f32 %v1225, %v1316
        %v1340 = vmul.f32 %v1227, %v1317
        %v1341 = vmul.f32 %v1229, %v1317
        %v1342 = vmul.f32 %v1231, %v1318
        %v1343 = vmul.f32 %v1233, %v1318
        %v1344 = vmul.f32 %v1235, %v1319
        %v1345 = vmul.f32 %v1237, %v1319
        %v1346 = vmul.f32 %v1239, %v1320
        %v1347 = vmul.f32 %v1241, %v1320
        %v1348 = vmul.f32 %v1243, %v1321
        %v1349 = vmul.f32 %v1245, %v1321
        %v1350 = vmul.f32 %v1247, %v1322
        %v1351 = vmul.f32 %v1249, %v1322
        %v1352 = vmul.f32 %v1251, %v1323
        %v1353 = vmul.f32 %v1253, %v1323
        %v1354 = vmul.f32 %v1255, %v1324
        %v1355 = vmul.f32 %v1257, %v1324
        %v1356 = vmul.f32 %v1259, %v1325
        %v1357 = vmul.f32 %v1261, %v1325
        %v1358 = vpack.c.bf16 %v1328, %v1326
        %v1359 = vpack.c.bf16 %v1329, %v1327
        %v1360 = vpack.c.bf16 %v1332, %v1330
        %v1361 = vpack.c.bf16 %v1333, %v1331
        %v1362 = vpack.c.bf16 %v1336, %v1334
        %v1363 = vpack.c.bf16 %v1337, %v1335
        %v1364 = vpack.c.bf16 %v1340, %v1338
        %v1365 = vpack.c.bf16 %v1341, %v1339
        %v1366 = vpack.c.bf16 %v1344, %v1342
        %v1367 = vpack.c.bf16 %v1345, %v1343
        %v1368 = vpack.c.bf16 %v1348, %v1346
        %v1369 = vpack.c.bf16 %v1349, %v1347
        %v1370 = vpack.c.bf16 %v1352, %v1350
        %v1371 = vpack.c.bf16 %v1353, %v1351
        %v1372 = vpack.c.bf16 %v1356, %v1354
        %v1373 = vpack.c.bf16 %v1357, %v1355
        %v1390 = vunpack.c.l.b16 %v1358
        %v1391 = vunpack.c.l.b16 %v1359
        %v1392 = vunpack.c.h.b16 %v1358
        %v1393 = vunpack.c.h.b16 %v1359
        %v1394 = vunpack.c.l.b16 %v1360
        %v1395 = vunpack.c.l.b16 %v1361
        %v1396 = vunpack.c.h.b16 %v1360
        %v1397 = vunpack.c.h.b16 %v1361
        %v1398 = vunpack.c.l.b16 %v1362
        %v1399 = vunpack.c.l.b16 %v1363
        %v1400 = vunpack.c.h.b16 %v1362
        %v1401 = vunpack.c.h.b16 %v1363
        %v1402 = vunpack.c.l.b16 %v1364
        %v1403 = vunpack.c.l.b16 %v1365
        %v1404 = vunpack.c.h.b16 %v1364
        %v1405 = vunpack.c.h.b16 %v1365
        %v1406 = vunpack.c.l.b16 %v1366
        %v1407 = vunpack.c.l.b16 %v1367
        %v1408 = vunpack.c.h.b16 %v1366
        %v1409 = vunpack.c.h.b16 %v1367
        %v1410 = vunpack.c.l.b16 %v1368
        %v1411 = vunpack.c.l.b16 %v1369
        %v1412 = vunpack.c.h.b16 %v1368
        %v1413 = vunpack.c.h.b16 %v1369
        %v1414 = vunpack.c.l.b16 %v1370
        %v1415 = vunpack.c.l.b16 %v1371
        %v1416 = vunpack.c.h.b16 %v1370
        %v1417 = vunpack.c.h.b16 %v1371
        %v1418 = vunpack.c.l.b16 %v1372
        %v1419 = vunpack.c.l.b16 %v1373
        %v1420 = vunpack.c.h.b16 %v1372
        %v1421 = vunpack.c.h.b16 %v1373
        %v1422 = vpack.c.b16 %v1391, %v1390
        %v1423 = vpack.c.b16 %v1393, %v1392
        %v1424 = vpack.c.b16 %v1395, %v1394
        %v1425 = vpack.c.b16 %v1397, %v1396
        %v1426 = vpack.c.b16 %v1399, %v1398
        %v1427 = vpack.c.b16 %v1401, %v1400
        %v1428 = vpack.c.b16 %v1403, %v1402
        %v1429 = vpack.c.b16 %v1405, %v1404
        %v1430 = vpack.c.b16 %v1407, %v1406
        %v1431 = vpack.c.b16 %v1409, %v1408
        %v1432 = vpack.c.b16 %v1411, %v1410
        %v1433 = vpack.c.b16 %v1413, %v1412
        %v1434 = vpack.c.b16 %v1415, %v1414
        %v1435 = vpack.c.b16 %v1417, %v1416
        %v1436 = vpack.c.b16 %v1419, %v1418
        %v1437 = vpack.c.b16 %v1421, %v1420
        %1454 = vst [vmem:[#allocation2] sm:$0xff] %v1422
        %1455 = vst [vmem:[#allocation2 + $0x20] sm:$0xff] %v1423
        %1456 = vst [vmem:[#allocation2 + $0x40] sm:$0xff] %v1424
        %1457 = vst [vmem:[#allocation2 + $0x60] sm:$0xff] %v1425
        %1458 = vst [vmem:[#allocation2 + $0x80] sm:$0xff] %v1426
        %1459 = vst [vmem:[#allocation2 + $0xa0] sm:$0xff] %v1427
        %1460 = vst [vmem:[#allocation2 + $0xc0] sm:$0xff] %v1428
        %1461 = vst [vmem:[#allocation2 + $0xe0] sm:$0xff] %v1429
        %1462 = vst [vmem:[#allocation2 + $0x100] sm:$0xff] %v1430
        %1463 = vst [vmem:[#allocation2 + $0x120] sm:$0xff] %v1431
        %1464 = vst [vmem:[#allocation2 + $0x140] sm:$0xff] %v1432
        %1465 = vst [vmem:[#allocation2 + $0x160] sm:$0xff] %v1433
        %1466 = vst [vmem:[#allocation2 + $0x180] sm:$0xff] %v1434
        %1467 = vst [vmem:[#allocation2 + $0x1a0] sm:$0xff] %v1435
        %1468 = vst [vmem:[#allocation2 + $0x1c0] sm:$0xff] %v1436
        %1469 = vst [vmem:[#allocation2 + $0x1e0] sm:$0xff] %v1437
        %s1470 = scalar_lea.vmem %s643, 128 [#allocation4]
        %v1471 = vld [vmem:[%s1470] sm:$0xff]
        %v1472 = vld [vmem:[%s1470 + $0x8] sm:$0xff]
        %v1473 = vld [vmem:[%s1470 + $0x10] sm:$0xff]
        %v1474 = vld [vmem:[%s1470 + $0x18] sm:$0xff]
        %v1475 = vld [vmem:[%s1470 + $0x20] sm:$0xff]
        %v1476 = vld [vmem:[%s1470 + $0x28] sm:$0xff]
        %v1477 = vld [vmem:[%s1470 + $0x30] sm:$0xff]
        %v1478 = vld [vmem:[%s1470 + $0x38] sm:$0xff]
        %v1479 = vld [vmem:[%s1470 + $0x40] sm:$0xff]
        %v1480 = vld [vmem:[%s1470 + $0x48] sm:$0xff]
        %v1481 = vld [vmem:[%s1470 + $0x50] sm:$0xff]
        %v1482 = vld [vmem:[%s1470 + $0x58] sm:$0xff]
        %v1483 = vld [vmem:[%s1470 + $0x60] sm:$0xff]
        %v1484 = vld [vmem:[%s1470 + $0x68] sm:$0xff]
        %v1485 = vld [vmem:[%s1470 + $0x70] sm:$0xff]
        %v1486 = vld [vmem:[%s1470 + $0x78] sm:$0xff]
        %s1487 = scalar_lea.vmem %s1, 1
        %v1488 = vld [vmem:[%s1487] ss:$4 sm:$0x3]
        %1490 = vset.pattern.permute.xlu0 0
        %1491 = vperm.xlu0 %1490, %v1471
        %v1492 = vpop.permute.xlu0 %1491
        %1495 = vset.pattern.permute.xlu0 0
        %1496 = vperm.xlu0 %1495, %v1472
        %v1497 = vpop.permute.xlu0 %1496
        %1500 = vset.pattern.permute.xlu0 0
        %1501 = vperm.xlu0 %1500, %v1473
        %v1502 = vpop.permute.xlu0 %1501
        %1505 = vset.pattern.permute.xlu0 0
        %1506 = vperm.xlu0 %1505, %v1474
        %v1507 = vpop.permute.xlu0 %1506
        %1510 = vset.pattern.permute.xlu0 0
        %1511 = vperm.xlu0 %1510, %v1475
        %v1512 = vpop.permute.xlu0 %1511
        %1515 = vset.pattern.permute.xlu0 0
        %1516 = vperm.xlu0 %1515, %v1476
        %v1517 = vpop.permute.xlu0 %1516
        %1520 = vset.pattern.permute.xlu0 0
        %1521 = vperm.xlu0 %1520, %v1477
        %v1522 = vpop.permute.xlu0 %1521
        %1525 = vset.pattern.permute.xlu0 0
        %1526 = vperm.xlu0 %1525, %v1478
        %v1527 = vpop.permute.xlu0 %1526
        %1530 = vset.pattern.permute.xlu0 0
        %1531 = vperm.xlu0 %1530, %v1479
        %v1532 = vpop.permute.xlu0 %1531
        %1535 = vset.pattern.permute.xlu0 0
        %1536 = vperm.xlu0 %1535, %v1480
        %v1537 = vpop.permute.xlu0 %1536
        %1540 = vset.pattern.permute.xlu0 0
        %1541 = vperm.xlu0 %1540, %v1481
        %v1542 = vpop.permute.xlu0 %1541
        %1545 = vset.pattern.permute.xlu0 0
        %1546 = vperm.xlu0 %1545, %v1482
        %v1547 = vpop.permute.xlu0 %1546
        %1550 = vset.pattern.permute.xlu0 0
        %1551 = vperm.xlu0 %1550, %v1483
        %v1552 = vpop.permute.xlu0 %1551
        %1555 = vset.pattern.permute.xlu0 0
        %1556 = vperm.xlu0 %1555, %v1484
        %v1557 = vpop.permute.xlu0 %1556
        %1560 = vset.pattern.permute.xlu0 0
        %1561 = vperm.xlu0 %1560, %v1485
        %v1562 = vpop.permute.xlu0 %1561
        %1565 = vset.pattern.permute.xlu0 0
        %1566 = vperm.xlu0 %1565, %v1486
        %v1567 = vpop.permute.xlu0 %1566
        %v1570 = vlaneseq
        %v1571 = vshrl.u32 %v1570, 7
        %v1572 = vsub.s32 0, %v1571
        %v1573 = vrot.slane %v1488, %v1572
        %v1574 = vlaneseq
        %v1575 = vshrl.u32 %v1574, 7
        %v1576 = vsub.s32 1, %v1575
        %v1577 = vrot.slane %v1488, %v1576
        %v1580 = vadd.f32 %v1492, %v1573
        %v1581 = vadd.f32 %v1492, %v1577
        %v1582 = vadd.f32 %v1497, %v1573
        %v1583 = vadd.f32 %v1497, %v1577
        %v1584 = vadd.f32 %v1502, %v1573
        %v1585 = vadd.f32 %v1502, %v1577
        %v1586 = vadd.f32 %v1507, %v1573
        %v1587 = vadd.f32 %v1507, %v1577
        %v1588 = vadd.f32 %v1512, %v1573
        %v1589 = vadd.f32 %v1512, %v1577
        %v1590 = vadd.f32 %v1517, %v1573
        %v1591 = vadd.f32 %v1517, %v1577
        %v1592 = vadd.f32 %v1522, %v1573
        %v1593 = vadd.f32 %v1522, %v1577
        %v1594 = vadd.f32 %v1527, %v1573
        %v1595 = vadd.f32 %v1527, %v1577
        %v1596 = vadd.f32 %v1532, %v1573
        %v1597 = vadd.f32 %v1532, %v1577
        %v1598 = vadd.f32 %v1537, %v1573
        %v1599 = vadd.f32 %v1537, %v1577
        %v1600 = vadd.f32 %v1542, %v1573
        %v1601 = vadd.f32 %v1542, %v1577
        %v1602 = vadd.f32 %v1547, %v1573
        %v1603 = vadd.f32 %v1547, %v1577
        %v1604 = vadd.f32 %v1552, %v1573
        %v1605 = vadd.f32 %v1552, %v1577
        %v1606 = vadd.f32 %v1557, %v1573
        %v1607 = vadd.f32 %v1557, %v1577
        %v1608 = vadd.f32 %v1562, %v1573
        %v1609 = vadd.f32 %v1562, %v1577
        %v1610 = vadd.f32 %v1567, %v1573
        %v1611 = vadd.f32 %v1567, %v1577
        %v1612 = vmul.f32 %v1580, 0.2
        %v1613 = vmul.f32 %v1581, 0.2
        %v1614 = vmul.f32 %v1582, 0.2
        %v1615 = vmul.f32 %v1583, 0.2
        %v1616 = vmul.f32 %v1584, 0.2
        %v1617 = vmul.f32 %v1585, 0.2
        %v1618 = vmul.f32 %v1586, 0.2
        %v1619 = vmul.f32 %v1587, 0.2
        %v1620 = vmul.f32 %v1588, 0.2
        %v1621 = vmul.f32 %v1589, 0.2
        %v1622 = vmul.f32 %v1590, 0.2
        %v1623 = vmul.f32 %v1591, 0.2
        %v1624 = vmul.f32 %v1592, 0.2
        %v1625 = vmul.f32 %v1593, 0.2
        %v1626 = vmul.f32 %v1594, 0.2
        %v1627 = vmul.f32 %v1595, 0.2
        %v1628 = vmul.f32 %v1596, 0.2
        %v1629 = vmul.f32 %v1597, 0.2
        %v1630 = vmul.f32 %v1598, 0.2
        %v1631 = vmul.f32 %v1599, 0.2
        %v1632 = vmul.f32 %v1600, 0.2
        %v1633 = vmul.f32 %v1601, 0.2
        %v1634 = vmul.f32 %v1602, 0.2
        %v1635 = vmul.f32 %v1603, 0.2
        %v1636 = vmul.f32 %v1604, 0.2
        %v1637 = vmul.f32 %v1605, 0.2
        %v1638 = vmul.f32 %v1606, 0.2
        %v1639 = vmul.f32 %v1607, 0.2
        %v1640 = vmul.f32 %v1608, 0.2
        %v1641 = vmul.f32 %v1609, 0.2
        %v1642 = vmul.f32 %v1610, 0.2
        %v1643 = vmul.f32 %v1611, 0.2
        %v1644 = vmax.f32 %v1580, %v1612
        %v1645 = vmax.f32 %v1581, %v1613
        %v1646 = vmax.f32 %v1582, %v1614
        %v1647 = vmax.f32 %v1583, %v1615
        %v1648 = vmax.f32 %v1584, %v1616
        %v1649 = vmax.f32 %v1585, %v1617
        %v1650 = vmax.f32 %v1586, %v1618
        %v1651 = vmax.f32 %v1587, %v1619
        %v1652 = vmax.f32 %v1588, %v1620
        %v1653 = vmax.f32 %v1589, %v1621
        %v1654 = vmax.f32 %v1590, %v1622
        %v1655 = vmax.f32 %v1591, %v1623
        %v1656 = vmax.f32 %v1592, %v1624
        %v1657 = vmax.f32 %v1593, %v1625
        %v1658 = vmax.f32 %v1594, %v1626
        %v1659 = vmax.f32 %v1595, %v1627
        %v1660 = vmax.f32 %v1596, %v1628
        %v1661 = vmax.f32 %v1597, %v1629
        %v1662 = vmax.f32 %v1598, %v1630
        %v1663 = vmax.f32 %v1599, %v1631
        %v1664 = vmax.f32 %v1600, %v1632
        %v1665 = vmax.f32 %v1601, %v1633
        %v1666 = vmax.f32 %v1602, %v1634
        %v1667 = vmax.f32 %v1603, %v1635
        %v1668 = vmax.f32 %v1604, %v1636
        %v1669 = vmax.f32 %v1605, %v1637
        %v1670 = vmax.f32 %v1606, %v1638
        %v1671 = vmax.f32 %v1607, %v1639
        %v1672 = vmax.f32 %v1608, %v1640
        %v1673 = vmax.f32 %v1609, %v1641
        %v1674 = vmax.f32 %v1610, %v1642
        %v1675 = vmax.f32 %v1611, %v1643
        %s1676 = scalar_lea.vmem %s636, 64 [#allocation3]
        %v1677 = vld [vmem:[%s1676] sm:$0xff]
        %v1678 = vld [vmem:[%s1676 + $0x8] sm:$0xff]
        %v1679 = vld [vmem:[%s1676 + $0x10] sm:$0xff]
        %v1680 = vld [vmem:[%s1676 + $0x18] sm:$0xff]
        %v1681 = vld [vmem:[%s1676 + $0x20] sm:$0xff]
        %v1682 = vld [vmem:[%s1676 + $0x28] sm:$0xff]
        %v1683 = vld [vmem:[%s1676 + $0x30] sm:$0xff]
        %v1684 = vld [vmem:[%s1676 + $0x38] sm:$0xff]
        %vm1685 = vnez %v1677
        %vm1686 = vnez %v1678
        %vm1687 = vnez %v1679
        %vm1688 = vnez %v1680
        %vm1689 = vnez %v1681
        %vm1690 = vnez %v1682
        %vm1691 = vnez %v1683
        %vm1692 = vnez %v1684
        %v1693 = vsel %vm1685, 16843009, 0
        %v1694 = vsel %vm1686, 16843009, 0
        %v1695 = vsel %vm1687, 16843009, 0
        %v1696 = vsel %vm1688, 16843009, 0
        %v1697 = vsel %vm1689, 16843009, 0
        %v1698 = vsel %vm1690, 16843009, 0
        %v1699 = vsel %vm1691, 16843009, 0
        %v1700 = vsel %vm1692, 16843009, 0
        %v1701 = vunpack.c.0.s8 %v1693
        %v1702 = vunpack.c.0.s8 %v1694
        %v1703 = vunpack.c.1.s8 %v1693
        %v1704 = vunpack.c.1.s8 %v1694
        %v1705 = vunpack.c.2.s8 %v1693
        %v1706 = vunpack.c.2.s8 %v1694
        %v1707 = vunpack.c.3.s8 %v1693
        %v1708 = vunpack.c.3.s8 %v1694
        %v1709 = vunpack.c.0.s8 %v1695
        %v1710 = vunpack.c.0.s8 %v1696
        %v1711 = vunpack.c.1.s8 %v1695
        %v1712 = vunpack.c.1.s8 %v1696
        %v1713 = vunpack.c.2.s8 %v1695
        %v1714 = vunpack.c.2.s8 %v1696
        %v1715 = vunpack.c.3.s8 %v1695
        %v1716 = vunpack.c.3.s8 %v1696
        %v1717 = vunpack.c.0.s8 %v1697
        %v1718 = vunpack.c.0.s8 %v1698
        %v1719 = vunpack.c.1.s8 %v1697
        %v1720 = vunpack.c.1.s8 %v1698
        %v1721 = vunpack.c.2.s8 %v1697
        %v1722 = vunpack.c.2.s8 %v1698
        %v1723 = vunpack.c.3.s8 %v1697
        %v1724 = vunpack.c.3.s8 %v1698
        %v1725 = vunpack.c.0.s8 %v1699
        %v1726 = vunpack.c.0.s8 %v1700
        %v1727 = vunpack.c.1.s8 %v1699
        %v1728 = vunpack.c.1.s8 %v1700
        %v1729 = vunpack.c.2.s8 %v1699
        %v1730 = vunpack.c.2.s8 %v1700
        %v1731 = vunpack.c.3.s8 %v1699
        %v1732 = vunpack.c.3.s8 %v1700
        %v1733 = vpack.c.b16 %v1702, %v1701
        %v1734 = vpack.c.b8 %v1733, %v1733
        %v1735 = vpack.c.b16 %v1704, %v1703
        %v1736 = vpack.c.b8 %v1735, %v1735
        %v1737 = vpack.c.b16 %v1706, %v1705
        %v1738 = vpack.c.b8 %v1737, %v1737
        %v1739 = vpack.c.b16 %v1708, %v1707
        %v1740 = vpack.c.b8 %v1739, %v1739
        %v1741 = vpack.c.b16 %v1710, %v1709
        %v1742 = vpack.c.b8 %v1741, %v1741
        %v1743 = vpack.c.b16 %v1712, %v1711
        %v1744 = vpack.c.b8 %v1743, %v1743
        %v1745 = vpack.c.b16 %v1714, %v1713
        %v1746 = vpack.c.b8 %v1745, %v1745
        %v1747 = vpack.c.b16 %v1716, %v1715
        %v1748 = vpack.c.b8 %v1747, %v1747
        %v1749 = vpack.c.b16 %v1718, %v1717
        %v1750 = vpack.c.b8 %v1749, %v1749
        %v1751 = vpack.c.b16 %v1720, %v1719
        %v1752 = vpack.c.b8 %v1751, %v1751
        %v1753 = vpack.c.b16 %v1722, %v1721
        %v1754 = vpack.c.b8 %v1753, %v1753
        %v1755 = vpack.c.b16 %v1724, %v1723
        %v1756 = vpack.c.b8 %v1755, %v1755
        %v1757 = vpack.c.b16 %v1726, %v1725
        %v1758 = vpack.c.b8 %v1757, %v1757
        %v1759 = vpack.c.b16 %v1728, %v1727
        %v1760 = vpack.c.b8 %v1759, %v1759
        %v1761 = vpack.c.b16 %v1730, %v1729
        %v1762 = vpack.c.b8 %v1761, %v1761
        %v1763 = vpack.c.b16 %v1732, %v1731
        %v1764 = vpack.c.b8 %v1763, %v1763
        %vm1765 = vnez %v1734
        %vm1766 = vnez %v1736
        %vm1767 = vnez %v1738
        %vm1768 = vnez %v1740
        %vm1769 = vnez %v1742
        %vm1770 = vnez %v1744
        %vm1771 = vnez %v1746
        %vm1772 = vnez %v1748
        %vm1773 = vnez %v1750
        %vm1774 = vnez %v1752
        %vm1775 = vnez %v1754
        %vm1776 = vnez %v1756
        %vm1777 = vnez %v1758
        %vm1778 = vnez %v1760
        %vm1779 = vnez %v1762
        %vm1780 = vnez %v1764
        %v1781 = vsel %vm1765, 16843009, 0
        %v1782 = vsel %vm1766, 16843009, 0
        %v1783 = vsel %vm1767, 16843009, 0
        %v1784 = vsel %vm1768, 16843009, 0
        %v1785 = vsel %vm1769, 16843009, 0
        %v1786 = vsel %vm1770, 16843009, 0
        %v1787 = vsel %vm1771, 16843009, 0
        %v1788 = vsel %vm1772, 16843009, 0
        %v1789 = vsel %vm1773, 16843009, 0
        %v1790 = vsel %vm1774, 16843009, 0
        %v1791 = vsel %vm1775, 16843009, 0
        %v1792 = vsel %vm1776, 16843009, 0
        %v1793 = vsel %vm1777, 16843009, 0
        %v1794 = vsel %vm1778, 16843009, 0
        %v1795 = vsel %vm1779, 16843009, 0
        %v1796 = vsel %vm1780, 16843009, 0
        %v1797 = vunpack.c.0.s8 %v1781
        %v1798 = vunpack.c.1.s8 %v1781
        %v1799 = vunpack.c.0.s8 %v1782
        %v1800 = vunpack.c.1.s8 %v1782
        %v1801 = vunpack.c.0.s8 %v1783
        %v1802 = vunpack.c.1.s8 %v1783
        %v1803 = vunpack.c.0.s8 %v1784
        %v1804 = vunpack.c.1.s8 %v1784
        %v1805 = vunpack.c.0.s8 %v1785
        %v1806 = vunpack.c.1.s8 %v1785
        %v1807 = vunpack.c.0.s8 %v1786
        %v1808 = vunpack.c.1.s8 %v1786
        %v1809 = vunpack.c.0.s8 %v1787
        %v1810 = vunpack.c.1.s8 %v1787
        %v1811 = vunpack.c.0.s8 %v1788
        %v1812 = vunpack.c.1.s8 %v1788
        %v1813 = vunpack.c.0.s8 %v1789
        %v1814 = vunpack.c.1.s8 %v1789
        %v1815 = vunpack.c.0.s8 %v1790
        %v1816 = vunpack.c.1.s8 %v1790
        %v1817 = vunpack.c.0.s8 %v1791
        %v1818 = vunpack.c.1.s8 %v1791
        %v1819 = vunpack.c.0.s8 %v1792
        %v1820 = vunpack.c.1.s8 %v1792
        %v1821 = vunpack.c.0.s8 %v1793
        %v1822 = vunpack.c.1.s8 %v1793
        %v1823 = vunpack.c.0.s8 %v1794
        %v1824 = vunpack.c.1.s8 %v1794
        %v1825 = vunpack.c.0.s8 %v1795
        %v1826 = vunpack.c.1.s8 %v1795
        %v1827 = vunpack.c.0.s8 %v1796
        %v1828 = vunpack.c.1.s8 %v1796
        %vm1829 = vcmp.ne.s32.totalorder %v1797, 0
        %vm1830 = vcmp.ne.s32.totalorder %v1798, 0
        %vm1831 = vcmp.ne.s32.totalorder %v1799, 0
        %vm1832 = vcmp.ne.s32.totalorder %v1800, 0
        %vm1833 = vcmp.ne.s32.totalorder %v1801, 0
        %vm1834 = vcmp.ne.s32.totalorder %v1802, 0
        %vm1835 = vcmp.ne.s32.totalorder %v1803, 0
        %vm1836 = vcmp.ne.s32.totalorder %v1804, 0
        %vm1837 = vcmp.ne.s32.totalorder %v1805, 0
        %vm1838 = vcmp.ne.s32.totalorder %v1806, 0
        %vm1839 = vcmp.ne.s32.totalorder %v1807, 0
        %vm1840 = vcmp.ne.s32.totalorder %v1808, 0
        %vm1841 = vcmp.ne.s32.totalorder %v1809, 0
        %vm1842 = vcmp.ne.s32.totalorder %v1810, 0
        %vm1843 = vcmp.ne.s32.totalorder %v1811, 0
        %vm1844 = vcmp.ne.s32.totalorder %v1812, 0
        %vm1845 = vcmp.ne.s32.totalorder %v1813, 0
        %vm1846 = vcmp.ne.s32.totalorder %v1814, 0
        %vm1847 = vcmp.ne.s32.totalorder %v1815, 0
        %vm1848 = vcmp.ne.s32.totalorder %v1816, 0
        %vm1849 = vcmp.ne.s32.totalorder %v1817, 0
        %vm1850 = vcmp.ne.s32.totalorder %v1818, 0
        %vm1851 = vcmp.ne.s32.totalorder %v1819, 0
        %vm1852 = vcmp.ne.s32.totalorder %v1820, 0
        %vm1853 = vcmp.ne.s32.totalorder %v1821, 0
        %vm1854 = vcmp.ne.s32.totalorder %v1822, 0
        %vm1855 = vcmp.ne.s32.totalorder %v1823, 0
        %vm1856 = vcmp.ne.s32.totalorder %v1824, 0
        %vm1857 = vcmp.ne.s32.totalorder %v1825, 0
        %vm1858 = vcmp.ne.s32.totalorder %v1826, 0
        %vm1859 = vcmp.ne.s32.totalorder %v1827, 0
        %vm1860 = vcmp.ne.s32.totalorder %v1828, 0
        %v1861 = vsel %vm1829, %v1644, -1e+30
        %v1862 = vsel %vm1830, %v1645, -1e+30
        %v1863 = vsel %vm1831, %v1646, -1e+30
        %v1864 = vsel %vm1832, %v1647, -1e+30
        %v1865 = vsel %vm1833, %v1648, -1e+30
        %v1866 = vsel %vm1834, %v1649, -1e+30
        %v1867 = vsel %vm1835, %v1650, -1e+30
        %v1868 = vsel %vm1836, %v1651, -1e+30
        %v1869 = vsel %vm1837, %v1652, -1e+30
        %v1870 = vsel %vm1838, %v1653, -1e+30
        %v1871 = vsel %vm1839, %v1654, -1e+30
        %v1872 = vsel %vm1840, %v1655, -1e+30
        %v1873 = vsel %vm1841, %v1656, -1e+30
        %v1874 = vsel %vm1842, %v1657, -1e+30
        %v1875 = vsel %vm1843, %v1658, -1e+30
        %v1876 = vsel %vm1844, %v1659, -1e+30
        %v1877 = vsel %vm1845, %v1660, -1e+30
        %v1878 = vsel %vm1846, %v1661, -1e+30
        %v1879 = vsel %vm1847, %v1662, -1e+30
        %v1880 = vsel %vm1848, %v1663, -1e+30
        %v1881 = vsel %vm1849, %v1664, -1e+30
        %v1882 = vsel %vm1850, %v1665, -1e+30
        %v1883 = vsel %vm1851, %v1666, -1e+30
        %v1884 = vsel %vm1852, %v1667, -1e+30
        %v1885 = vsel %vm1853, %v1668, -1e+30
        %v1886 = vsel %vm1854, %v1669, -1e+30
        %v1887 = vsel %vm1855, %v1670, -1e+30
        %v1888 = vsel %vm1856, %v1671, -1e+30
        %v1889 = vsel %vm1857, %v1672, -1e+30
        %v1890 = vsel %vm1858, %v1673, -1e+30
        %v1891 = vsel %vm1859, %v1674, -1e+30
        %v1892 = vsel %vm1860, %v1675, -1e+30
        %v1893 = vmax.f32 %v1861, %v1862
        %1894 = vmax.xlane.f32.xlu0 %v1893
        %v1895 = vpop.xlane.xlu0 %1894
        %v1896 = vmax.f32 %v1863, %v1864
        %1897 = vmax.xlane.f32.xlu0 %v1896
        %v1898 = vpop.xlane.xlu0 %1897
        %v1899 = vmax.f32 %v1865, %v1866
        %1900 = vmax.xlane.f32.xlu0 %v1899
        %v1901 = vpop.xlane.xlu0 %1900
        %v1902 = vmax.f32 %v1867, %v1868
        %1903 = vmax.xlane.f32.xlu0 %v1902
        %v1904 = vpop.xlane.xlu0 %1903
        %v1905 = vmax.f32 %v1869, %v1870
        %1906 = vmax.xlane.f32.xlu0 %v1905
        %v1907 = vpop.xlane.xlu0 %1906
        %v1908 = vmax.f32 %v1871, %v1872
        %1909 = vmax.xlane.f32.xlu0 %v1908
        %v1910 = vpop.xlane.xlu0 %1909
        %v1911 = vmax.f32 %v1873, %v1874
        %1912 = vmax.xlane.f32.xlu0 %v1911
        %v1913 = vpop.xlane.xlu0 %1912
        %v1914 = vmax.f32 %v1875, %v1876
        %1915 = vmax.xlane.f32.xlu0 %v1914
        %v1916 = vpop.xlane.xlu0 %1915
        %v1917 = vmax.f32 %v1877, %v1878
        %1918 = vmax.xlane.f32.xlu0 %v1917
        %v1919 = vpop.xlane.xlu0 %1918
        %v1920 = vmax.f32 %v1879, %v1880
        %1921 = vmax.xlane.f32.xlu0 %v1920
        %v1922 = vpop.xlane.xlu0 %1921
        %v1923 = vmax.f32 %v1881, %v1882
        %1924 = vmax.xlane.f32.xlu0 %v1923
        %v1925 = vpop.xlane.xlu0 %1924
        %v1926 = vmax.f32 %v1883, %v1884
        %1927 = vmax.xlane.f32.xlu0 %v1926
        %v1928 = vpop.xlane.xlu0 %1927
        %v1929 = vmax.f32 %v1885, %v1886
        %1930 = vmax.xlane.f32.xlu0 %v1929
        %v1931 = vpop.xlane.xlu0 %1930
        %v1932 = vmax.f32 %v1887, %v1888
        %1933 = vmax.xlane.f32.xlu0 %v1932
        %v1934 = vpop.xlane.xlu0 %1933
        %v1935 = vmax.f32 %v1889, %v1890
        %1936 = vmax.xlane.f32.xlu0 %v1935
        %v1937 = vpop.xlane.xlu0 %1936
        %v1938 = vmax.f32 %v1891, %v1892
        %1939 = vmax.xlane.f32.xlu0 %v1938
        %v1940 = vpop.xlane.xlu0 %1939
        %v1941 = vsub.f32 %v1861, %v1895
        %v1942 = vsub.f32 %v1862, %v1895
        %v1943 = vsub.f32 %v1863, %v1898
        %v1944 = vsub.f32 %v1864, %v1898
        %v1945 = vsub.f32 %v1865, %v1901
        %v1946 = vsub.f32 %v1866, %v1901
        %v1947 = vsub.f32 %v1867, %v1904
        %v1948 = vsub.f32 %v1868, %v1904
        %v1949 = vsub.f32 %v1869, %v1907
        %v1950 = vsub.f32 %v1870, %v1907
        %v1951 = vsub.f32 %v1871, %v1910
        %v1952 = vsub.f32 %v1872, %v1910
        %v1953 = vsub.f32 %v1873, %v1913
        %v1954 = vsub.f32 %v1874, %v1913
        %v1955 = vsub.f32 %v1875, %v1916
        %v1956 = vsub.f32 %v1876, %v1916
        %v1957 = vsub.f32 %v1877, %v1919
        %v1958 = vsub.f32 %v1878, %v1919
        %v1959 = vsub.f32 %v1879, %v1922
        %v1960 = vsub.f32 %v1880, %v1922
        %v1961 = vsub.f32 %v1881, %v1925
        %v1962 = vsub.f32 %v1882, %v1925
        %v1963 = vsub.f32 %v1883, %v1928
        %v1964 = vsub.f32 %v1884, %v1928
        %v1965 = vsub.f32 %v1885, %v1931
        %v1966 = vsub.f32 %v1886, %v1931
        %v1967 = vsub.f32 %v1887, %v1934
        %v1968 = vsub.f32 %v1888, %v1934
        %v1969 = vsub.f32 %v1889, %v1937
        %v1970 = vsub.f32 %v1890, %v1937
        %v1971 = vsub.f32 %v1891, %v1940
        %v1972 = vsub.f32 %v1892, %v1940
        %v1973 = vmul.f32 %v1941, 1.442695
        %v1974 = vpow.pop %v1973
        %v1975 = vmul.f32 %v1942, 1.442695
        %v1976 = vpow.pop %v1975
        %v1977 = vmul.f32 %v1943, 1.442695
        %v1978 = vpow.pop %v1977
        %v1979 = vmul.f32 %v1944, 1.442695
        %v1980 = vpow.pop %v1979
        %v1981 = vmul.f32 %v1945, 1.442695
        %v1982 = vpow.pop %v1981
        %v1983 = vmul.f32 %v1946, 1.442695
        %v1984 = vpow.pop %v1983
        %v1985 = vmul.f32 %v1947, 1.442695
        %v1986 = vpow.pop %v1985
        %v1987 = vmul.f32 %v1948, 1.442695
        %v1988 = vpow.pop %v1987
        %v1989 = vmul.f32 %v1949, 1.442695
        %v1990 = vpow.pop %v1989
        %v1991 = vmul.f32 %v1950, 1.442695
        %v1992 = vpow.pop %v1991
        %v1993 = vmul.f32 %v1951, 1.442695
        %v1994 = vpow.pop %v1993
        %v1995 = vmul.f32 %v1952, 1.442695
        %v1996 = vpow.pop %v1995
        %v1997 = vmul.f32 %v1953, 1.442695
        %v1998 = vpow.pop %v1997
        %v1999 = vmul.f32 %v1954, 1.442695
        %v2000 = vpow.pop %v1999
        %v2001 = vmul.f32 %v1955, 1.442695
        %v2002 = vpow.pop %v2001
        %v2003 = vmul.f32 %v1956, 1.442695
        %v2004 = vpow.pop %v2003
        %v2005 = vmul.f32 %v1957, 1.442695
        %v2006 = vpow.pop %v2005
        %v2007 = vmul.f32 %v1958, 1.442695
        %v2008 = vpow.pop %v2007
        %v2009 = vmul.f32 %v1959, 1.442695
        %v2010 = vpow.pop %v2009
        %v2011 = vmul.f32 %v1960, 1.442695
        %v2012 = vpow.pop %v2011
        %v2013 = vmul.f32 %v1961, 1.442695
        %v2014 = vpow.pop %v2013
        %v2015 = vmul.f32 %v1962, 1.442695
        %v2016 = vpow.pop %v2015
        %v2017 = vmul.f32 %v1963, 1.442695
        %v2018 = vpow.pop %v2017
        %v2019 = vmul.f32 %v1964, 1.442695
        %v2020 = vpow.pop %v2019
        %v2021 = vmul.f32 %v1965, 1.442695
        %v2022 = vpow.pop %v2021
        %v2023 = vmul.f32 %v1966, 1.442695
        %v2024 = vpow.pop %v2023
        %v2025 = vmul.f32 %v1967, 1.442695
        %v2026 = vpow.pop %v2025
        %v2027 = vmul.f32 %v1968, 1.442695
        %v2028 = vpow.pop %v2027
        %v2029 = vmul.f32 %v1969, 1.442695
        %v2030 = vpow.pop %v2029
        %v2031 = vmul.f32 %v1970, 1.442695
        %v2032 = vpow.pop %v2031
        %v2033 = vmul.f32 %v1971, 1.442695
        %v2034 = vpow.pop %v2033
        %v2035 = vmul.f32 %v1972, 1.442695
        %v2036 = vpow.pop %v2035
        %v2037 = vadd.f32 %v1974, %v1976
        %2038 = vadd.xlane.f32.xlu0 %v2037
        %v2039 = vpop.xlane.xlu0 %2038
        %v2040 = vadd.f32 %v1978, %v1980
        %2041 = vadd.xlane.f32.xlu0 %v2040
        %v2042 = vpop.xlane.xlu0 %2041
        %v2043 = vadd.f32 %v1982, %v1984
        %2044 = vadd.xlane.f32.xlu0 %v2043
        %v2045 = vpop.xlane.xlu0 %2044
        %v2046 = vadd.f32 %v1986, %v1988
        %2047 = vadd.xlane.f32.xlu0 %v2046
        %v2048 = vpop.xlane.xlu0 %2047
        %v2049 = vadd.f32 %v1990, %v1992
        %2050 = vadd.xlane.f32.xlu0 %v2049
        %v2051 = vpop.xlane.xlu0 %2050
        %v2052 = vadd.f32 %v1994, %v1996
        %2053 = vadd.xlane.f32.xlu0 %v2052
        %v2054 = vpop.xlane.xlu0 %2053
        %v2055 = vadd.f32 %v1998, %v2000
        %2056 = vadd.xlane.f32.xlu0 %v2055
        %v2057 = vpop.xlane.xlu0 %2056
        %v2058 = vadd.f32 %v2002, %v2004
        %2059 = vadd.xlane.f32.xlu0 %v2058
        %v2060 = vpop.xlane.xlu0 %2059
        %v2061 = vadd.f32 %v2006, %v2008
        %2062 = vadd.xlane.f32.xlu0 %v2061
        %v2063 = vpop.xlane.xlu0 %2062
        %v2064 = vadd.f32 %v2010, %v2012
        %2065 = vadd.xlane.f32.xlu0 %v2064
        %v2066 = vpop.xlane.xlu0 %2065
        %v2067 = vadd.f32 %v2014, %v2016
        %2068 = vadd.xlane.f32.xlu0 %v2067
        %v2069 = vpop.xlane.xlu0 %2068
        %v2070 = vadd.f32 %v2018, %v2020
        %2071 = vadd.xlane.f32.xlu0 %v2070
        %v2072 = vpop.xlane.xlu0 %2071
        %v2073 = vadd.f32 %v2022, %v2024
        %2074 = vadd.xlane.f32.xlu0 %v2073
        %v2075 = vpop.xlane.xlu0 %2074
        %v2076 = vadd.f32 %v2026, %v2028
        %2077 = vadd.xlane.f32.xlu0 %v2076
        %v2078 = vpop.xlane.xlu0 %2077
        %v2079 = vadd.f32 %v2030, %v2032
        %2080 = vadd.xlane.f32.xlu0 %v2079
        %v2081 = vpop.xlane.xlu0 %2080
        %v2082 = vadd.f32 %v2034, %v2036
        %2083 = vadd.xlane.f32.xlu0 %v2082
        %v2084 = vpop.xlane.xlu0 %2083
        %v2085 = vrcp.pop %v2039
        %v2086 = vrcp.pop %v2042
        %v2087 = vrcp.pop %v2045
        %v2088 = vrcp.pop %v2048
        %v2089 = vrcp.pop %v2051
        %v2090 = vrcp.pop %v2054
        %v2091 = vrcp.pop %v2057
        %v2092 = vrcp.pop %v2060
        %v2093 = vrcp.pop %v2063
        %v2094 = vrcp.pop %v2066
        %v2095 = vrcp.pop %v2069
        %v2096 = vrcp.pop %v2072
        %v2097 = vrcp.pop %v2075
        %v2098 = vrcp.pop %v2078
        %v2099 = vrcp.pop %v2081
        %v2100 = vrcp.pop %v2084
        %v2101 = vmul.f32 %v1974, %v2085
        %v2102 = vmul.f32 %v1976, %v2085
        %v2103 = vmul.f32 %v1978, %v2086
        %v2104 = vmul.f32 %v1980, %v2086
        %v2105 = vmul.f32 %v1982, %v2087
        %v2106 = vmul.f32 %v1984, %v2087
        %v2107 = vmul.f32 %v1986, %v2088
        %v2108 = vmul.f32 %v1988, %v2088
        %v2109 = vmul.f32 %v1990, %v2089
        %v2110 = vmul.f32 %v1992, %v2089
        %v2111 = vmul.f32 %v1994, %v2090
        %v2112 = vmul.f32 %v1996, %v2090
        %v2113 = vmul.f32 %v1998, %v2091
        %v2114 = vmul.f32 %v2000, %v2091
        %v2115 = vmul.f32 %v2002, %v2092
        %v2116 = vmul.f32 %v2004, %v2092
        %v2117 = vmul.f32 %v2006, %v2093
        %v2118 = vmul.f32 %v2008, %v2093
        %v2119 = vmul.f32 %v2010, %v2094
        %v2120 = vmul.f32 %v2012, %v2094
        %v2121 = vmul.f32 %v2014, %v2095
        %v2122 = vmul.f32 %v2016, %v2095
        %v2123 = vmul.f32 %v2018, %v2096
        %v2124 = vmul.f32 %v2020, %v2096
        %v2125 = vmul.f32 %v2022, %v2097
        %v2126 = vmul.f32 %v2024, %v2097
        %v2127 = vmul.f32 %v2026, %v2098
        %v2128 = vmul.f32 %v2028, %v2098
        %v2129 = vmul.f32 %v2030, %v2099
        %v2130 = vmul.f32 %v2032, %v2099
        %v2131 = vmul.f32 %v2034, %v2100
        %v2132 = vmul.f32 %v2036, %v2100
        %v2133 = vpack.c.bf16 %v2103, %v2101
        %v2134 = vpack.c.bf16 %v2104, %v2102
        %v2135 = vpack.c.bf16 %v2107, %v2105
        %v2136 = vpack.c.bf16 %v2108, %v2106
        %v2137 = vpack.c.bf16 %v2111, %v2109
        %v2138 = vpack.c.bf16 %v2112, %v2110
        %v2139 = vpack.c.bf16 %v2115, %v2113
        %v2140 = vpack.c.bf16 %v2116, %v2114
        %v2141 = vpack.c.bf16 %v2119, %v2117
        %v2142 = vpack.c.bf16 %v2120, %v2118
        %v2143 = vpack.c.bf16 %v2123, %v2121
        %v2144 = vpack.c.bf16 %v2124, %v2122
        %v2145 = vpack.c.bf16 %v2127, %v2125
        %v2146 = vpack.c.bf16 %v2128, %v2126
        %v2147 = vpack.c.bf16 %v2131, %v2129
        %v2148 = vpack.c.bf16 %v2132, %v2130
        %v2165 = vunpack.c.l.b16 %v2133
        %v2166 = vunpack.c.l.b16 %v2134
        %v2167 = vunpack.c.h.b16 %v2133
        %v2168 = vunpack.c.h.b16 %v2134
        %v2169 = vunpack.c.l.b16 %v2135
        %v2170 = vunpack.c.l.b16 %v2136
        %v2171 = vunpack.c.h.b16 %v2135
        %v2172 = vunpack.c.h.b16 %v2136
        %v2173 = vunpack.c.l.b16 %v2137
        %v2174 = vunpack.c.l.b16 %v2138
        %v2175 = vunpack.c.h.b16 %v2137
        %v2176 = vunpack.c.h.b16 %v2138
        %v2177 = vunpack.c.l.b16 %v2139
        %v2178 = vunpack.c.l.b16 %v2140
        %v2179 = vunpack.c.h.b16 %v2139
        %v2180 = vunpack.c.h.b16 %v2140
        %v2181 = vunpack.c.l.b16 %v2141
        %v2182 = vunpack.c.l.b16 %v2142
        %v2183 = vunpack.c.h.b16 %v2141
        %v2184 = vunpack.c.h.b16 %v2142
        %v2185 = vunpack.c.l.b16 %v2143
        %v2186 = vunpack.c.l.b16 %v2144
        %v2187 = vunpack.c.h.b16 %v2143
        %v2188 = vunpack.c.h.b16 %v2144
        %v2189 = vunpack.c.l.b16 %v2145
        %v2190 = vunpack.c.l.b16 %v2146
        %v2191 = vunpack.c.h.b16 %v2145
        %v2192 = vunpack.c.h.b16 %v2146
        %v2193 = vunpack.c.l.b16 %v2147
        %v2194 = vunpack.c.l.b16 %v2148
        %v2195 = vunpack.c.h.b16 %v2147
        %v2196 = vunpack.c.h.b16 %v2148
        %v2197 = vpack.c.b16 %v2166, %v2165
        %v2198 = vpack.c.b16 %v2168, %v2167
        %v2199 = vpack.c.b16 %v2170, %v2169
        %v2200 = vpack.c.b16 %v2172, %v2171
        %v2201 = vpack.c.b16 %v2174, %v2173
        %v2202 = vpack.c.b16 %v2176, %v2175
        %v2203 = vpack.c.b16 %v2178, %v2177
        %v2204 = vpack.c.b16 %v2180, %v2179
        %v2205 = vpack.c.b16 %v2182, %v2181
        %v2206 = vpack.c.b16 %v2184, %v2183
        %v2207 = vpack.c.b16 %v2186, %v2185
        %v2208 = vpack.c.b16 %v2188, %v2187
        %v2209 = vpack.c.b16 %v2190, %v2189
        %v2210 = vpack.c.b16 %v2192, %v2191
        %v2211 = vpack.c.b16 %v2194, %v2193
        %v2212 = vpack.c.b16 %v2196, %v2195
        %2229 = vst [vmem:[#allocation2 + $0x8] sm:$0xff] %v2197
        %2230 = vst [vmem:[#allocation2 + $0x28] sm:$0xff] %v2198
        %2231 = vst [vmem:[#allocation2 + $0x48] sm:$0xff] %v2199
        %2232 = vst [vmem:[#allocation2 + $0x68] sm:$0xff] %v2200
        %2233 = vst [vmem:[#allocation2 + $0x88] sm:$0xff] %v2201
        %2234 = vst [vmem:[#allocation2 + $0xa8] sm:$0xff] %v2202
        %2235 = vst [vmem:[#allocation2 + $0xc8] sm:$0xff] %v2203
        %2236 = vst [vmem:[#allocation2 + $0xe8] sm:$0xff] %v2204
        %2237 = vst [vmem:[#allocation2 + $0x108] sm:$0xff] %v2205
        %2238 = vst [vmem:[#allocation2 + $0x128] sm:$0xff] %v2206
        %2239 = vst [vmem:[#allocation2 + $0x148] sm:$0xff] %v2207
        %2240 = vst [vmem:[#allocation2 + $0x168] sm:$0xff] %v2208
        %2241 = vst [vmem:[#allocation2 + $0x188] sm:$0xff] %v2209
        %2242 = vst [vmem:[#allocation2 + $0x1a8] sm:$0xff] %v2210
        %2243 = vst [vmem:[#allocation2 + $0x1c8] sm:$0xff] %v2211
        %2244 = vst [vmem:[#allocation2 + $0x1e8] sm:$0xff] %v2212
        %s2245 = scalar_lea.vmem %s643, 256 [#allocation4]
        %v2246 = vld [vmem:[%s2245] sm:$0xff]
        %v2247 = vld [vmem:[%s2245 + $0x8] sm:$0xff]
        %v2248 = vld [vmem:[%s2245 + $0x10] sm:$0xff]
        %v2249 = vld [vmem:[%s2245 + $0x18] sm:$0xff]
        %v2250 = vld [vmem:[%s2245 + $0x20] sm:$0xff]
        %v2251 = vld [vmem:[%s2245 + $0x28] sm:$0xff]
        %v2252 = vld [vmem:[%s2245 + $0x30] sm:$0xff]
        %v2253 = vld [vmem:[%s2245 + $0x38] sm:$0xff]
        %v2254 = vld [vmem:[%s2245 + $0x40] sm:$0xff]
        %v2255 = vld [vmem:[%s2245 + $0x48] sm:$0xff]
        %v2256 = vld [vmem:[%s2245 + $0x50] sm:$0xff]
        %v2257 = vld [vmem:[%s2245 + $0x58] sm:$0xff]
        %v2258 = vld [vmem:[%s2245 + $0x60] sm:$0xff]
        %v2259 = vld [vmem:[%s2245 + $0x68] sm:$0xff]
        %v2260 = vld [vmem:[%s2245 + $0x70] sm:$0xff]
        %v2261 = vld [vmem:[%s2245 + $0x78] sm:$0xff]
        %s2262 = scalar_lea.vmem %s1, 2
        %v2263 = vld [vmem:[%s2262] ss:$4 sm:$0x3]
        %2265 = vset.pattern.permute.xlu0 0
        %2266 = vperm.xlu0 %2265, %v2246
        %v2267 = vpop.permute.xlu0 %2266
        %2270 = vset.pattern.permute.xlu0 0
        %2271 = vperm.xlu0 %2270, %v2247
        %v2272 = vpop.permute.xlu0 %2271
        %2275 = vset.pattern.permute.xlu0 0
        %2276 = vperm.xlu0 %2275, %v2248
        %v2277 = vpop.permute.xlu0 %2276
        %2280 = vset.pattern.permute.xlu0 0
        %2281 = vperm.xlu0 %2280, %v2249
        %v2282 = vpop.permute.xlu0 %2281
        %2285 = vset.pattern.permute.xlu0 0
        %2286 = vperm.xlu0 %2285, %v2250
        %v2287 = vpop.permute.xlu0 %2286
        %2290 = vset.pattern.permute.xlu0 0
        %2291 = vperm.xlu0 %2290, %v2251
        %v2292 = vpop.permute.xlu0 %2291
        %2295 = vset.pattern.permute.xlu0 0
        %2296 = vperm.xlu0 %2295, %v2252
        %v2297 = vpop.permute.xlu0 %2296
        %2300 = vset.pattern.permute.xlu0 0
        %2301 = vperm.xlu0 %2300, %v2253
        %v2302 = vpop.permute.xlu0 %2301
        %2305 = vset.pattern.permute.xlu0 0
        %2306 = vperm.xlu0 %2305, %v2254
        %v2307 = vpop.permute.xlu0 %2306
        %2310 = vset.pattern.permute.xlu0 0
        %2311 = vperm.xlu0 %2310, %v2255
        %v2312 = vpop.permute.xlu0 %2311
        %2315 = vset.pattern.permute.xlu0 0
        %2316 = vperm.xlu0 %2315, %v2256
        %v2317 = vpop.permute.xlu0 %2316
        %2320 = vset.pattern.permute.xlu0 0
        %2321 = vperm.xlu0 %2320, %v2257
        %v2322 = vpop.permute.xlu0 %2321
        %2325 = vset.pattern.permute.xlu0 0
        %2326 = vperm.xlu0 %2325, %v2258
        %v2327 = vpop.permute.xlu0 %2326
        %2330 = vset.pattern.permute.xlu0 0
        %2331 = vperm.xlu0 %2330, %v2259
        %v2332 = vpop.permute.xlu0 %2331
        %2335 = vset.pattern.permute.xlu0 0
        %2336 = vperm.xlu0 %2335, %v2260
        %v2337 = vpop.permute.xlu0 %2336
        %2340 = vset.pattern.permute.xlu0 0
        %2341 = vperm.xlu0 %2340, %v2261
        %v2342 = vpop.permute.xlu0 %2341
        %v2345 = vlaneseq
        %v2346 = vshrl.u32 %v2345, 7
        %v2347 = vsub.s32 0, %v2346
        %v2348 = vrot.slane %v2263, %v2347
        %v2349 = vlaneseq
        %v2350 = vshrl.u32 %v2349, 7
        %v2351 = vsub.s32 1, %v2350
        %v2352 = vrot.slane %v2263, %v2351
        %v2355 = vadd.f32 %v2267, %v2348
        %v2356 = vadd.f32 %v2267, %v2352
        %v2357 = vadd.f32 %v2272, %v2348
        %v2358 = vadd.f32 %v2272, %v2352
        %v2359 = vadd.f32 %v2277, %v2348
        %v2360 = vadd.f32 %v2277, %v2352
        %v2361 = vadd.f32 %v2282, %v2348
        %v2362 = vadd.f32 %v2282, %v2352
        %v2363 = vadd.f32 %v2287, %v2348
        %v2364 = vadd.f32 %v2287, %v2352
        %v2365 = vadd.f32 %v2292, %v2348
        %v2366 = vadd.f32 %v2292, %v2352
        %v2367 = vadd.f32 %v2297, %v2348
        %v2368 = vadd.f32 %v2297, %v2352
        %v2369 = vadd.f32 %v2302, %v2348
        %v2370 = vadd.f32 %v2302, %v2352
        %v2371 = vadd.f32 %v2307, %v2348
        %v2372 = vadd.f32 %v2307, %v2352
        %v2373 = vadd.f32 %v2312, %v2348
        %v2374 = vadd.f32 %v2312, %v2352
        %v2375 = vadd.f32 %v2317, %v2348
        %v2376 = vadd.f32 %v2317, %v2352
        %v2377 = vadd.f32 %v2322, %v2348
        %v2378 = vadd.f32 %v2322, %v2352
        %v2379 = vadd.f32 %v2327, %v2348
        %v2380 = vadd.f32 %v2327, %v2352
        %v2381 = vadd.f32 %v2332, %v2348
        %v2382 = vadd.f32 %v2332, %v2352
        %v2383 = vadd.f32 %v2337, %v2348
        %v2384 = vadd.f32 %v2337, %v2352
        %v2385 = vadd.f32 %v2342, %v2348
        %v2386 = vadd.f32 %v2342, %v2352
        %v2387 = vmul.f32 %v2355, 0.2
        %v2388 = vmul.f32 %v2356, 0.2
        %v2389 = vmul.f32 %v2357, 0.2
        %v2390 = vmul.f32 %v2358, 0.2
        %v2391 = vmul.f32 %v2359, 0.2
        %v2392 = vmul.f32 %v2360, 0.2
        %v2393 = vmul.f32 %v2361, 0.2
        %v2394 = vmul.f32 %v2362, 0.2
        %v2395 = vmul.f32 %v2363, 0.2
        %v2396 = vmul.f32 %v2364, 0.2
        %v2397 = vmul.f32 %v2365, 0.2
        %v2398 = vmul.f32 %v2366, 0.2
        %v2399 = vmul.f32 %v2367, 0.2
        %v2400 = vmul.f32 %v2368, 0.2
        %v2401 = vmul.f32 %v2369, 0.2
        %v2402 = vmul.f32 %v2370, 0.2
        %v2403 = vmul.f32 %v2371, 0.2
        %v2404 = vmul.f32 %v2372, 0.2
        %v2405 = vmul.f32 %v2373, 0.2
        %v2406 = vmul.f32 %v2374, 0.2
        %v2407 = vmul.f32 %v2375, 0.2
        %v2408 = vmul.f32 %v2376, 0.2
        %v2409 = vmul.f32 %v2377, 0.2
        %v2410 = vmul.f32 %v2378, 0.2
        %v2411 = vmul.f32 %v2379, 0.2
        %v2412 = vmul.f32 %v2380, 0.2
        %v2413 = vmul.f32 %v2381, 0.2
        %v2414 = vmul.f32 %v2382, 0.2
        %v2415 = vmul.f32 %v2383, 0.2
        %v2416 = vmul.f32 %v2384, 0.2
        %v2417 = vmul.f32 %v2385, 0.2
        %v2418 = vmul.f32 %v2386, 0.2
        %v2419 = vmax.f32 %v2355, %v2387
        %v2420 = vmax.f32 %v2356, %v2388
        %v2421 = vmax.f32 %v2357, %v2389
        %v2422 = vmax.f32 %v2358, %v2390
        %v2423 = vmax.f32 %v2359, %v2391
        %v2424 = vmax.f32 %v2360, %v2392
        %v2425 = vmax.f32 %v2361, %v2393
        %v2426 = vmax.f32 %v2362, %v2394
        %v2427 = vmax.f32 %v2363, %v2395
        %v2428 = vmax.f32 %v2364, %v2396
        %v2429 = vmax.f32 %v2365, %v2397
        %v2430 = vmax.f32 %v2366, %v2398
        %v2431 = vmax.f32 %v2367, %v2399
        %v2432 = vmax.f32 %v2368, %v2400
        %v2433 = vmax.f32 %v2369, %v2401
        %v2434 = vmax.f32 %v2370, %v2402
        %v2435 = vmax.f32 %v2371, %v2403
        %v2436 = vmax.f32 %v2372, %v2404
        %v2437 = vmax.f32 %v2373, %v2405
        %v2438 = vmax.f32 %v2374, %v2406
        %v2439 = vmax.f32 %v2375, %v2407
        %v2440 = vmax.f32 %v2376, %v2408
        %v2441 = vmax.f32 %v2377, %v2409
        %v2442 = vmax.f32 %v2378, %v2410
        %v2443 = vmax.f32 %v2379, %v2411
        %v2444 = vmax.f32 %v2380, %v2412
        %v2445 = vmax.f32 %v2381, %v2413
        %v2446 = vmax.f32 %v2382, %v2414
        %v2447 = vmax.f32 %v2383, %v2415
        %v2448 = vmax.f32 %v2384, %v2416
        %v2449 = vmax.f32 %v2385, %v2417
        %v2450 = vmax.f32 %v2386, %v2418
        %s2451 = scalar_lea.vmem %s636, 128 [#allocation3]
        %v2452 = vld [vmem:[%s2451] sm:$0xff]
        %v2453 = vld [vmem:[%s2451 + $0x8] sm:$0xff]
        %v2454 = vld [vmem:[%s2451 + $0x10] sm:$0xff]
        %v2455 = vld [vmem:[%s2451 + $0x18] sm:$0xff]
        %v2456 = vld [vmem:[%s2451 + $0x20] sm:$0xff]
        %v2457 = vld [vmem:[%s2451 + $0x28] sm:$0xff]
        %v2458 = vld [vmem:[%s2451 + $0x30] sm:$0xff]
        %v2459 = vld [vmem:[%s2451 + $0x38] sm:$0xff]
        %vm2460 = vnez %v2452
        %vm2461 = vnez %v2453
        %vm2462 = vnez %v2454
        %vm2463 = vnez %v2455
        %vm2464 = vnez %v2456
        %vm2465 = vnez %v2457
        %vm2466 = vnez %v2458
        %vm2467 = vnez %v2459
        %v2468 = vsel %vm2460, 16843009, 0
        %v2469 = vsel %vm2461, 16843009, 0
        %v2470 = vsel %vm2462, 16843009, 0
        %v2471 = vsel %vm2463, 16843009, 0
        %v2472 = vsel %vm2464, 16843009, 0
        %v2473 = vsel %vm2465, 16843009, 0
        %v2474 = vsel %vm2466, 16843009, 0
        %v2475 = vsel %vm2467, 16843009, 0
        %v2476 = vunpack.c.0.s8 %v2468
        %v2477 = vunpack.c.0.s8 %v2469
        %v2478 = vunpack.c.1.s8 %v2468
        %v2479 = vunpack.c.1.s8 %v2469
        %v2480 = vunpack.c.2.s8 %v2468
        %v2481 = vunpack.c.2.s8 %v2469
        %v2482 = vunpack.c.3.s8 %v2468
        %v2483 = vunpack.c.3.s8 %v2469
        %v2484 = vunpack.c.0.s8 %v2470
        %v2485 = vunpack.c.0.s8 %v2471
        %v2486 = vunpack.c.1.s8 %v2470
        %v2487 = vunpack.c.1.s8 %v2471
        %v2488 = vunpack.c.2.s8 %v2470
        %v2489 = vunpack.c.2.s8 %v2471
        %v2490 = vunpack.c.3.s8 %v2470
        %v2491 = vunpack.c.3.s8 %v2471
        %v2492 = vunpack.c.0.s8 %v2472
        %v2493 = vunpack.c.0.s8 %v2473
        %v2494 = vunpack.c.1.s8 %v2472
        %v2495 = vunpack.c.1.s8 %v2473
        %v2496 = vunpack.c.2.s8 %v2472
        %v2497 = vunpack.c.2.s8 %v2473
        %v2498 = vunpack.c.3.s8 %v2472
        %v2499 = vunpack.c.3.s8 %v2473
        %v2500 = vunpack.c.0.s8 %v2474
        %v2501 = vunpack.c.0.s8 %v2475
        %v2502 = vunpack.c.1.s8 %v2474
        %v2503 = vunpack.c.1.s8 %v2475
        %v2504 = vunpack.c.2.s8 %v2474
        %v2505 = vunpack.c.2.s8 %v2475
        %v2506 = vunpack.c.3.s8 %v2474
        %v2507 = vunpack.c.3.s8 %v2475
        %v2508 = vpack.c.b16 %v2477, %v2476
        %v2509 = vpack.c.b8 %v2508, %v2508
        %v2510 = vpack.c.b16 %v2479, %v2478
        %v2511 = vpack.c.b8 %v2510, %v2510
        %v2512 = vpack.c.b16 %v2481, %v2480
        %v2513 = vpack.c.b8 %v2512, %v2512
        %v2514 = vpack.c.b16 %v2483, %v2482
        %v2515 = vpack.c.b8 %v2514, %v2514
        %v2516 = vpack.c.b16 %v2485, %v2484
        %v2517 = vpack.c.b8 %v2516, %v2516
        %v2518 = vpack.c.b16 %v2487, %v2486
        %v2519 = vpack.c.b8 %v2518, %v2518
        %v2520 = vpack.c.b16 %v2489, %v2488
        %v2521 = vpack.c.b8 %v2520, %v2520
        %v2522 = vpack.c.b16 %v2491, %v2490
        %v2523 = vpack.c.b8 %v2522, %v2522
        %v2524 = vpack.c.b16 %v2493, %v2492
        %v2525 = vpack.c.b8 %v2524, %v2524
        %v2526 = vpack.c.b16 %v2495, %v2494
        %v2527 = vpack.c.b8 %v2526, %v2526
        %v2528 = vpack.c.b16 %v2497, %v2496
        %v2529 = vpack.c.b8 %v2528, %v2528
        %v2530 = vpack.c.b16 %v2499, %v2498
        %v2531 = vpack.c.b8 %v2530, %v2530
        %v2532 = vpack.c.b16 %v2501, %v2500
        %v2533 = vpack.c.b8 %v2532, %v2532
        %v2534 = vpack.c.b16 %v2503, %v2502
        %v2535 = vpack.c.b8 %v2534, %v2534
        %v2536 = vpack.c.b16 %v2505, %v2504
        %v2537 = vpack.c.b8 %v2536, %v2536
        %v2538 = vpack.c.b16 %v2507, %v2506
        %v2539 = vpack.c.b8 %v2538, %v2538
        %vm2540 = vnez %v2509
        %vm2541 = vnez %v2511
        %vm2542 = vnez %v2513
        %vm2543 = vnez %v2515
        %vm2544 = vnez %v2517
        %vm2545 = vnez %v2519
        %vm2546 = vnez %v2521
        %vm2547 = vnez %v2523
        %vm2548 = vnez %v2525
        %vm2549 = vnez %v2527
        %vm2550 = vnez %v2529
        %vm2551 = vnez %v2531
        %vm2552 = vnez %v2533
        %vm2553 = vnez %v2535
        %vm2554 = vnez %v2537
        %vm2555 = vnez %v2539
        %v2556 = vsel %vm2540, 16843009, 0
        %v2557 = vsel %vm2541, 16843009, 0
        %v2558 = vsel %vm2542, 16843009, 0
        %v2559 = vsel %vm2543, 16843009, 0
        %v2560 = vsel %vm2544, 16843009, 0
        %v2561 = vsel %vm2545, 16843009, 0
        %v2562 = vsel %vm2546, 16843009, 0
        %v2563 = vsel %vm2547, 16843009, 0
        %v2564 = vsel %vm2548, 16843009, 0
        %v2565 = vsel %vm2549, 16843009, 0
        %v2566 = vsel %vm2550, 16843009, 0
        %v2567 = vsel %vm2551, 16843009, 0
        %v2568 = vsel %vm2552, 16843009, 0
        %v2569 = vsel %vm2553, 16843009, 0
        %v2570 = vsel %vm2554, 16843009, 0
        %v2571 = vsel %vm2555, 16843009, 0
        %v2572 = vunpack.c.0.s8 %v2556
        %v2573 = vunpack.c.1.s8 %v2556
        %v2574 = vunpack.c.0.s8 %v2557
        %v2575 = vunpack.c.1.s8 %v2557
        %v2576 = vunpack.c.0.s8 %v2558
        %v2577 = vunpack.c.1.s8 %v2558
        %v2578 = vunpack.c.0.s8 %v2559
        %v2579 = vunpack.c.1.s8 %v2559
        %v2580 = vunpack.c.0.s8 %v2560
        %v2581 = vunpack.c.1.s8 %v2560
        %v2582 = vunpack.c.0.s8 %v2561
        %v2583 = vunpack.c.1.s8 %v2561
        %v2584 = vunpack.c.0.s8 %v2562
        %v2585 = vunpack.c.1.s8 %v2562
        %v2586 = vunpack.c.0.s8 %v2563
        %v2587 = vunpack.c.1.s8 %v2563
        %v2588 = vunpack.c.0.s8 %v2564
        %v2589 = vunpack.c.1.s8 %v2564
        %v2590 = vunpack.c.0.s8 %v2565
        %v2591 = vunpack.c.1.s8 %v2565
        %v2592 = vunpack.c.0.s8 %v2566
        %v2593 = vunpack.c.1.s8 %v2566
        %v2594 = vunpack.c.0.s8 %v2567
        %v2595 = vunpack.c.1.s8 %v2567
        %v2596 = vunpack.c.0.s8 %v2568
        %v2597 = vunpack.c.1.s8 %v2568
        %v2598 = vunpack.c.0.s8 %v2569
        %v2599 = vunpack.c.1.s8 %v2569
        %v2600 = vunpack.c.0.s8 %v2570
        %v2601 = vunpack.c.1.s8 %v2570
        %v2602 = vunpack.c.0.s8 %v2571
        %v2603 = vunpack.c.1.s8 %v2571
        %vm2604 = vcmp.ne.s32.totalorder %v2572, 0
        %vm2605 = vcmp.ne.s32.totalorder %v2573, 0
        %vm2606 = vcmp.ne.s32.totalorder %v2574, 0
        %vm2607 = vcmp.ne.s32.totalorder %v2575, 0
        %vm2608 = vcmp.ne.s32.totalorder %v2576, 0
        %vm2609 = vcmp.ne.s32.totalorder %v2577, 0
        %vm2610 = vcmp.ne.s32.totalorder %v2578, 0
        %vm2611 = vcmp.ne.s32.totalorder %v2579, 0
        %vm2612 = vcmp.ne.s32.totalorder %v2580, 0
        %vm2613 = vcmp.ne.s32.totalorder %v2581, 0
        %vm2614 = vcmp.ne.s32.totalorder %v2582, 0
        %vm2615 = vcmp.ne.s32.totalorder %v2583, 0
        %vm2616 = vcmp.ne.s32.totalorder %v2584, 0
        %vm2617 = vcmp.ne.s32.totalorder %v2585, 0
        %vm2618 = vcmp.ne.s32.totalorder %v2586, 0
        %vm2619 = vcmp.ne.s32.totalorder %v2587, 0
        %vm2620 = vcmp.ne.s32.totalorder %v2588, 0
        %vm2621 = vcmp.ne.s32.totalorder %v2589, 0
        %vm2622 = vcmp.ne.s32.totalorder %v2590, 0
        %vm2623 = vcmp.ne.s32.totalorder %v2591, 0
        %vm2624 = vcmp.ne.s32.totalorder %v2592, 0
        %vm2625 = vcmp.ne.s32.totalorder %v2593, 0
        %vm2626 = vcmp.ne.s32.totalorder %v2594, 0
        %vm2627 = vcmp.ne.s32.totalorder %v2595, 0
        %vm2628 = vcmp.ne.s32.totalorder %v2596, 0
        %vm2629 = vcmp.ne.s32.totalorder %v2597, 0
        %vm2630 = vcmp.ne.s32.totalorder %v2598, 0
        %vm2631 = vcmp.ne.s32.totalorder %v2599, 0
        %vm2632 = vcmp.ne.s32.totalorder %v2600, 0
        %vm2633 = vcmp.ne.s32.totalorder %v2601, 0
        %vm2634 = vcmp.ne.s32.totalorder %v2602, 0
        %vm2635 = vcmp.ne.s32.totalorder %v2603, 0
        %v2636 = vsel %vm2604, %v2419, -1e+30
        %v2637 = vsel %vm2605, %v2420, -1e+30
        %v2638 = vsel %vm2606, %v2421, -1e+30
        %v2639 = vsel %vm2607, %v2422, -1e+30
        %v2640 = vsel %vm2608, %v2423, -1e+30
        %v2641 = vsel %vm2609, %v2424, -1e+30
        %v2642 = vsel %vm2610, %v2425, -1e+30
        %v2643 = vsel %vm2611, %v2426, -1e+30
        %v2644 = vsel %vm2612, %v2427, -1e+30
        %v2645 = vsel %vm2613, %v2428, -1e+30
        %v2646 = vsel %vm2614, %v2429, -1e+30
        %v2647 = vsel %vm2615, %v2430, -1e+30
        %v2648 = vsel %vm2616, %v2431, -1e+30
        %v2649 = vsel %vm2617, %v2432, -1e+30
        %v2650 = vsel %vm2618, %v2433, -1e+30
        %v2651 = vsel %vm2619, %v2434, -1e+30
        %v2652 = vsel %vm2620, %v2435, -1e+30
        %v2653 = vsel %vm2621, %v2436, -1e+30
        %v2654 = vsel %vm2622, %v2437, -1e+30
        %v2655 = vsel %vm2623, %v2438, -1e+30
        %v2656 = vsel %vm2624, %v2439, -1e+30
        %v2657 = vsel %vm2625, %v2440, -1e+30
        %v2658 = vsel %vm2626, %v2441, -1e+30
        %v2659 = vsel %vm2627, %v2442, -1e+30
        %v2660 = vsel %vm2628, %v2443, -1e+30
        %v2661 = vsel %vm2629, %v2444, -1e+30
        %v2662 = vsel %vm2630, %v2445, -1e+30
        %v2663 = vsel %vm2631, %v2446, -1e+30
        %v2664 = vsel %vm2632, %v2447, -1e+30
        %v2665 = vsel %vm2633, %v2448, -1e+30
        %v2666 = vsel %vm2634, %v2449, -1e+30
        %v2667 = vsel %vm2635, %v2450, -1e+30
        %v2668 = vmax.f32 %v2636, %v2637
        %2669 = vmax.xlane.f32.xlu0 %v2668
        %v2670 = vpop.xlane.xlu0 %2669
        %v2671 = vmax.f32 %v2638, %v2639
        %2672 = vmax.xlane.f32.xlu0 %v2671
        %v2673 = vpop.xlane.xlu0 %2672
        %v2674 = vmax.f32 %v2640, %v2641
        %2675 = vmax.xlane.f32.xlu0 %v2674
        %v2676 = vpop.xlane.xlu0 %2675
        %v2677 = vmax.f32 %v2642, %v2643
        %2678 = vmax.xlane.f32.xlu0 %v2677
        %v2679 = vpop.xlane.xlu0 %2678
        %v2680 = vmax.f32 %v2644, %v2645
        %2681 = vmax.xlane.f32.xlu0 %v2680
        %v2682 = vpop.xlane.xlu0 %2681
        %v2683 = vmax.f32 %v2646, %v2647
        %2684 = vmax.xlane.f32.xlu0 %v2683
        %v2685 = vpop.xlane.xlu0 %2684
        %v2686 = vmax.f32 %v2648, %v2649
        %2687 = vmax.xlane.f32.xlu0 %v2686
        %v2688 = vpop.xlane.xlu0 %2687
        %v2689 = vmax.f32 %v2650, %v2651
        %2690 = vmax.xlane.f32.xlu0 %v2689
        %v2691 = vpop.xlane.xlu0 %2690
        %v2692 = vmax.f32 %v2652, %v2653
        %2693 = vmax.xlane.f32.xlu0 %v2692
        %v2694 = vpop.xlane.xlu0 %2693
        %v2695 = vmax.f32 %v2654, %v2655
        %2696 = vmax.xlane.f32.xlu0 %v2695
        %v2697 = vpop.xlane.xlu0 %2696
        %v2698 = vmax.f32 %v2656, %v2657
        %2699 = vmax.xlane.f32.xlu0 %v2698
        %v2700 = vpop.xlane.xlu0 %2699
        %v2701 = vmax.f32 %v2658, %v2659
        %2702 = vmax.xlane.f32.xlu0 %v2701
        %v2703 = vpop.xlane.xlu0 %2702
        %v2704 = vmax.f32 %v2660, %v2661
        %2705 = vmax.xlane.f32.xlu0 %v2704
        %v2706 = vpop.xlane.xlu0 %2705
        %v2707 = vmax.f32 %v2662, %v2663
        %2708 = vmax.xlane.f32.xlu0 %v2707
        %v2709 = vpop.xlane.xlu0 %2708
        %v2710 = vmax.f32 %v2664, %v2665
        %2711 = vmax.xlane.f32.xlu0 %v2710
        %v2712 = vpop.xlane.xlu0 %2711
        %v2713 = vmax.f32 %v2666, %v2667
        %2714 = vmax.xlane.f32.xlu0 %v2713
        %v2715 = vpop.xlane.xlu0 %2714
        %v2716 = vsub.f32 %v2636, %v2670
        %v2717 = vsub.f32 %v2637, %v2670
        %v2718 = vsub.f32 %v2638, %v2673
        %v2719 = vsub.f32 %v2639, %v2673
        %v2720 = vsub.f32 %v2640, %v2676
        %v2721 = vsub.f32 %v2641, %v2676
        %v2722 = vsub.f32 %v2642, %v2679
        %v2723 = vsub.f32 %v2643, %v2679
        %v2724 = vsub.f32 %v2644, %v2682
        %v2725 = vsub.f32 %v2645, %v2682
        %v2726 = vsub.f32 %v2646, %v2685
        %v2727 = vsub.f32 %v2647, %v2685
        %v2728 = vsub.f32 %v2648, %v2688
        %v2729 = vsub.f32 %v2649, %v2688
        %v2730 = vsub.f32 %v2650, %v2691
        %v2731 = vsub.f32 %v2651, %v2691
        %v2732 = vsub.f32 %v2652, %v2694
        %v2733 = vsub.f32 %v2653, %v2694
        %v2734 = vsub.f32 %v2654, %v2697
        %v2735 = vsub.f32 %v2655, %v2697
        %v2736 = vsub.f32 %v2656, %v2700
        %v2737 = vsub.f32 %v2657, %v2700
        %v2738 = vsub.f32 %v2658, %v2703
        %v2739 = vsub.f32 %v2659, %v2703
        %v2740 = vsub.f32 %v2660, %v2706
        %v2741 = vsub.f32 %v2661, %v2706
        %v2742 = vsub.f32 %v2662, %v2709
        %v2743 = vsub.f32 %v2663, %v2709
        %v2744 = vsub.f32 %v2664, %v2712
        %v2745 = vsub.f32 %v2665, %v2712
        %v2746 = vsub.f32 %v2666, %v2715
        %v2747 = vsub.f32 %v2667, %v2715
        %v2748 = vmul.f32 %v2716, 1.442695
        %v2749 = vpow.pop %v2748
        %v2750 = vmul.f32 %v2717, 1.442695
        %v2751 = vpow.pop %v2750
        %v2752 = vmul.f32 %v2718, 1.442695
        %v2753 = vpow.pop %v2752
        %v2754 = vmul.f32 %v2719, 1.442695
        %v2755 = vpow.pop %v2754
        %v2756 = vmul.f32 %v2720, 1.442695
        %v2757 = vpow.pop %v2756
        %v2758 = vmul.f32 %v2721, 1.442695
        %v2759 = vpow.pop %v2758
        %v2760 = vmul.f32 %v2722, 1.442695
        %v2761 = vpow.pop %v2760
        %v2762 = vmul.f32 %v2723, 1.442695
        %v2763 = vpow.pop %v2762
        %v2764 = vmul.f32 %v2724, 1.442695
        %v2765 = vpow.pop %v2764
        %v2766 = vmul.f32 %v2725, 1.442695
        %v2767 = vpow.pop %v2766
        %v2768 = vmul.f32 %v2726, 1.442695
        %v2769 = vpow.pop %v2768
        %v2770 = vmul.f32 %v2727, 1.442695
        %v2771 = vpow.pop %v2770
        %v2772 = vmul.f32 %v2728, 1.442695
        %v2773 = vpow.pop %v2772
        %v2774 = vmul.f32 %v2729, 1.442695
        %v2775 = vpow.pop %v2774
        %v2776 = vmul.f32 %v2730, 1.442695
        %v2777 = vpow.pop %v2776
        %v2778 = vmul.f32 %v2731, 1.442695
        %v2779 = vpow.pop %v2778
        %v2780 = vmul.f32 %v2732, 1.442695
        %v2781 = vpow.pop %v2780
        %v2782 = vmul.f32 %v2733, 1.442695
        %v2783 = vpow.pop %v2782
        %v2784 = vmul.f32 %v2734, 1.442695
        %v2785 = vpow.pop %v2784
        %v2786 = vmul.f32 %v2735, 1.442695
        %v2787 = vpow.pop %v2786
        %v2788 = vmul.f32 %v2736, 1.442695
        %v2789 = vpow.pop %v2788
        %v2790 = vmul.f32 %v2737, 1.442695
        %v2791 = vpow.pop %v2790
        %v2792 = vmul.f32 %v2738, 1.442695
        %v2793 = vpow.pop %v2792
        %v2794 = vmul.f32 %v2739, 1.442695
        %v2795 = vpow.pop %v2794
        %v2796 = vmul.f32 %v2740, 1.442695
        %v2797 = vpow.pop %v2796
        %v2798 = vmul.f32 %v2741, 1.442695
        %v2799 = vpow.pop %v2798
        %v2800 = vmul.f32 %v2742, 1.442695
        %v2801 = vpow.pop %v2800
        %v2802 = vmul.f32 %v2743, 1.442695
        %v2803 = vpow.pop %v2802
        %v2804 = vmul.f32 %v2744, 1.442695
        %v2805 = vpow.pop %v2804
        %v2806 = vmul.f32 %v2745, 1.442695
        %v2807 = vpow.pop %v2806
        %v2808 = vmul.f32 %v2746, 1.442695
        %v2809 = vpow.pop %v2808
        %v2810 = vmul.f32 %v2747, 1.442695
        %v2811 = vpow.pop %v2810
        %v2812 = vadd.f32 %v2749, %v2751
        %2813 = vadd.xlane.f32.xlu0 %v2812
        %v2814 = vpop.xlane.xlu0 %2813
        %v2815 = vadd.f32 %v2753, %v2755
        %2816 = vadd.xlane.f32.xlu0 %v2815
        %v2817 = vpop.xlane.xlu0 %2816
        %v2818 = vadd.f32 %v2757, %v2759
        %2819 = vadd.xlane.f32.xlu0 %v2818
        %v2820 = vpop.xlane.xlu0 %2819
        %v2821 = vadd.f32 %v2761, %v2763
        %2822 = vadd.xlane.f32.xlu0 %v2821
        %v2823 = vpop.xlane.xlu0 %2822
        %v2824 = vadd.f32 %v2765, %v2767
        %2825 = vadd.xlane.f32.xlu0 %v2824
        %v2826 = vpop.xlane.xlu0 %2825
        %v2827 = vadd.f32 %v2769, %v2771
        %2828 = vadd.xlane.f32.xlu0 %v2827
        %v2829 = vpop.xlane.xlu0 %2828
        %v2830 = vadd.f32 %v2773, %v2775
        %2831 = vadd.xlane.f32.xlu0 %v2830
        %v2832 = vpop.xlane.xlu0 %2831
        %v2833 = vadd.f32 %v2777, %v2779
        %2834 = vadd.xlane.f32.xlu0 %v2833
        %v2835 = vpop.xlane.xlu0 %2834
        %v2836 = vadd.f32 %v2781, %v2783
        %2837 = vadd.xlane.f32.xlu0 %v2836
        %v2838 = vpop.xlane.xlu0 %2837
        %v2839 = vadd.f32 %v2785, %v2787
        %2840 = vadd.xlane.f32.xlu0 %v2839
        %v2841 = vpop.xlane.xlu0 %2840
        %v2842 = vadd.f32 %v2789, %v2791
        %2843 = vadd.xlane.f32.xlu0 %v2842
        %v2844 = vpop.xlane.xlu0 %2843
        %v2845 = vadd.f32 %v2793, %v2795
        %2846 = vadd.xlane.f32.xlu0 %v2845
        %v2847 = vpop.xlane.xlu0 %2846
        %v2848 = vadd.f32 %v2797, %v2799
        %2849 = vadd.xlane.f32.xlu0 %v2848
        %v2850 = vpop.xlane.xlu0 %2849
        %v2851 = vadd.f32 %v2801, %v2803
        %2852 = vadd.xlane.f32.xlu0 %v2851
        %v2853 = vpop.xlane.xlu0 %2852
        %v2854 = vadd.f32 %v2805, %v2807
        %2855 = vadd.xlane.f32.xlu0 %v2854
        %v2856 = vpop.xlane.xlu0 %2855
        %v2857 = vadd.f32 %v2809, %v2811
        %2858 = vadd.xlane.f32.xlu0 %v2857
        %v2859 = vpop.xlane.xlu0 %2858
        %v2860 = vrcp.pop %v2814
        %v2861 = vrcp.pop %v2817
        %v2862 = vrcp.pop %v2820
        %v2863 = vrcp.pop %v2823
        %v2864 = vrcp.pop %v2826
        %v2865 = vrcp.pop %v2829
        %v2866 = vrcp.pop %v2832
        %v2867 = vrcp.pop %v2835
        %v2868 = vrcp.pop %v2838
        %v2869 = vrcp.pop %v2841
        %v2870 = vrcp.pop %v2844
        %v2871 = vrcp.pop %v2847
        %v2872 = vrcp.pop %v2850
        %v2873 = vrcp.pop %v2853
        %v2874 = vrcp.pop %v2856
        %v2875 = vrcp.pop %v2859
        %v2876 = vmul.f32 %v2749, %v2860
        %v2877 = vmul.f32 %v2751, %v2860
        %v2878 = vmul.f32 %v2753, %v2861
        %v2879 = vmul.f32 %v2755, %v2861
        %v2880 = vmul.f32 %v2757, %v2862
        %v2881 = vmul.f32 %v2759, %v2862
        %v2882 = vmul.f32 %v2761, %v2863
        %v2883 = vmul.f32 %v2763, %v2863
        %v2884 = vmul.f32 %v2765, %v2864
        %v2885 = vmul.f32 %v2767, %v2864
        %v2886 = vmul.f32 %v2769, %v2865
        %v2887 = vmul.f32 %v2771, %v2865
        %v2888 = vmul.f32 %v2773, %v2866
        %v2889 = vmul.f32 %v2775, %v2866
        %v2890 = vmul.f32 %v2777, %v2867
        %v2891 = vmul.f32 %v2779, %v2867
        %v2892 = vmul.f32 %v2781, %v2868
        %v2893 = vmul.f32 %v2783, %v2868
        %v2894 = vmul.f32 %v2785, %v2869
        %v2895 = vmul.f32 %v2787, %v2869
        %v2896 = vmul.f32 %v2789, %v2870
        %v2897 = vmul.f32 %v2791, %v2870
        %v2898 = vmul.f32 %v2793, %v2871
        %v2899 = vmul.f32 %v2795, %v2871
        %v2900 = vmul.f32 %v2797, %v2872
        %v2901 = vmul.f32 %v2799, %v2872
        %v2902 = vmul.f32 %v2801, %v2873
        %v2903 = vmul.f32 %v2803, %v2873
        %v2904 = vmul.f32 %v2805, %v2874
        %v2905 = vmul.f32 %v2807, %v2874
        %v2906 = vmul.f32 %v2809, %v2875
        %v2907 = vmul.f32 %v2811, %v2875
        %v2908 = vpack.c.bf16 %v2878, %v2876
        %v2909 = vpack.c.bf16 %v2879, %v2877
        %v2910 = vpack.c.bf16 %v2882, %v2880
        %v2911 = vpack.c.bf16 %v2883, %v2881
        %v2912 = vpack.c.bf16 %v2886, %v2884
        %v2913 = vpack.c.bf16 %v2887, %v2885
        %v2914 = vpack.c.bf16 %v2890, %v2888
        %v2915 = vpack.c.bf16 %v2891, %v2889
        %v2916 = vpack.c.bf16 %v2894, %v2892
        %v2917 = vpack.c.bf16 %v2895, %v2893
        %v2918 = vpack.c.bf16 %v2898, %v2896
        %v2919 = vpack.c.bf16 %v2899, %v2897
        %v2920 = vpack.c.bf16 %v2902, %v2900
        %v2921 = vpack.c.bf16 %v2903, %v2901
        %v2922 = vpack.c.bf16 %v2906, %v2904
        %v2923 = vpack.c.bf16 %v2907, %v2905
        %v2940 = vunpack.c.l.b16 %v2908
        %v2941 = vunpack.c.l.b16 %v2909
        %v2942 = vunpack.c.h.b16 %v2908
        %v2943 = vunpack.c.h.b16 %v2909
        %v2944 = vunpack.c.l.b16 %v2910
        %v2945 = vunpack.c.l.b16 %v2911
        %v2946 = vunpack.c.h.b16 %v2910
        %v2947 = vunpack.c.h.b16 %v2911
        %v2948 = vunpack.c.l.b16 %v2912
        %v2949 = vunpack.c.l.b16 %v2913
        %v2950 = vunpack.c.h.b16 %v2912
        %v2951 = vunpack.c.h.b16 %v2913
        %v2952 = vunpack.c.l.b16 %v2914
        %v2953 = vunpack.c.l.b16 %v2915
        %v2954 = vunpack.c.h.b16 %v2914
        %v2955 = vunpack.c.h.b16 %v2915
        %v2956 = vunpack.c.l.b16 %v2916
        %v2957 = vunpack.c.l.b16 %v2917
        %v2958 = vunpack.c.h.b16 %v2916
        %v2959 = vunpack.c.h.b16 %v2917
        %v2960 = vunpack.c.l.b16 %v2918
        %v2961 = vunpack.c.l.b16 %v2919
        %v2962 = vunpack.c.h.b16 %v2918
        %v2963 = vunpack.c.h.b16 %v2919
        %v2964 = vunpack.c.l.b16 %v2920
        %v2965 = vunpack.c.l.b16 %v2921
        %v2966 = vunpack.c.h.b16 %v2920
        %v2967 = vunpack.c.h.b16 %v2921
        %v2968 = vunpack.c.l.b16 %v2922
        %v2969 = vunpack.c.l.b16 %v2923
        %v2970 = vunpack.c.h.b16 %v2922
        %v2971 = vunpack.c.h.b16 %v2923
        %v2972 = vpack.c.b16 %v2941, %v2940
        %v2973 = vpack.c.b16 %v2943, %v2942
        %v2974 = vpack.c.b16 %v2945, %v2944
        %v2975 = vpack.c.b16 %v2947, %v2946
        %v2976 = vpack.c.b16 %v2949, %v2948
        %v2977 = vpack.c.b16 %v2951, %v2950
        %v2978 = vpack.c.b16 %v2953, %v2952
        %v2979 = vpack.c.b16 %v2955, %v2954
        %v2980 = vpack.c.b16 %v2957, %v2956
        %v2981 = vpack.c.b16 %v2959, %v2958
        %v2982 = vpack.c.b16 %v2961, %v2960
        %v2983 = vpack.c.b16 %v2963, %v2962
        %v2984 = vpack.c.b16 %v2965, %v2964
        %v2985 = vpack.c.b16 %v2967, %v2966
        %v2986 = vpack.c.b16 %v2969, %v2968
        %v2987 = vpack.c.b16 %v2971, %v2970
        %3004 = vst [vmem:[#allocation2 + $0x10] sm:$0xff] %v2972
        %3005 = vst [vmem:[#allocation2 + $0x30] sm:$0xff] %v2973
        %3006 = vst [vmem:[#allocation2 + $0x50] sm:$0xff] %v2974
        %3007 = vst [vmem:[#allocation2 + $0x70] sm:$0xff] %v2975
        %3008 = vst [vmem:[#allocation2 + $0x90] sm:$0xff] %v2976
        %3009 = vst [vmem:[#allocation2 + $0xb0] sm:$0xff] %v2977
        %3010 = vst [vmem:[#allocation2 + $0xd0] sm:$0xff] %v2978
        %3011 = vst [vmem:[#allocation2 + $0xf0] sm:$0xff] %v2979
        %3012 = vst [vmem:[#allocation2 + $0x110] sm:$0xff] %v2980
        %3013 = vst [vmem:[#allocation2 + $0x130] sm:$0xff] %v2981
        %3014 = vst [vmem:[#allocation2 + $0x150] sm:$0xff] %v2982
        %3015 = vst [vmem:[#allocation2 + $0x170] sm:$0xff] %v2983
        %3016 = vst [vmem:[#allocation2 + $0x190] sm:$0xff] %v2984
        %3017 = vst [vmem:[#allocation2 + $0x1b0] sm:$0xff] %v2985
        %3018 = vst [vmem:[#allocation2 + $0x1d0] sm:$0xff] %v2986
        %3019 = vst [vmem:[#allocation2 + $0x1f0] sm:$0xff] %v2987
        %s3020 = scalar_lea.vmem %s643, 384 [#allocation4]
        %v3021 = vld [vmem:[%s3020] sm:$0xff]
        %v3022 = vld [vmem:[%s3020 + $0x8] sm:$0xff]
        %v3023 = vld [vmem:[%s3020 + $0x10] sm:$0xff]
        %v3024 = vld [vmem:[%s3020 + $0x18] sm:$0xff]
        %v3025 = vld [vmem:[%s3020 + $0x20] sm:$0xff]
        %v3026 = vld [vmem:[%s3020 + $0x28] sm:$0xff]
        %v3027 = vld [vmem:[%s3020 + $0x30] sm:$0xff]
        %v3028 = vld [vmem:[%s3020 + $0x38] sm:$0xff]
        %v3029 = vld [vmem:[%s3020 + $0x40] sm:$0xff]
        %v3030 = vld [vmem:[%s3020 + $0x48] sm:$0xff]
        %v3031 = vld [vmem:[%s3020 + $0x50] sm:$0xff]
        %v3032 = vld [vmem:[%s3020 + $0x58] sm:$0xff]
        %v3033 = vld [vmem:[%s3020 + $0x60] sm:$0xff]
        %v3034 = vld [vmem:[%s3020 + $0x68] sm:$0xff]
        %v3035 = vld [vmem:[%s3020 + $0x70] sm:$0xff]
        %v3036 = vld [vmem:[%s3020 + $0x78] sm:$0xff]
        %s3037 = scalar_lea.vmem %s1, 3
        %v3038 = vld [vmem:[%s3037] ss:$4 sm:$0x3]
        %3040 = vset.pattern.permute.xlu0 0
        %3041 = vperm.xlu0 %3040, %v3021
        %v3042 = vpop.permute.xlu0 %3041
        %3045 = vset.pattern.permute.xlu0 0
        %3046 = vperm.xlu0 %3045, %v3022
        %v3047 = vpop.permute.xlu0 %3046
        %3050 = vset.pattern.permute.xlu0 0
        %3051 = vperm.xlu0 %3050, %v3023
        %v3052 = vpop.permute.xlu0 %3051
        %3055 = vset.pattern.permute.xlu0 0
        %3056 = vperm.xlu0 %3055, %v3024
        %v3057 = vpop.permute.xlu0 %3056
        %3060 = vset.pattern.permute.xlu0 0
        %3061 = vperm.xlu0 %3060, %v3025
        %v3062 = vpop.permute.xlu0 %3061
        %3065 = vset.pattern.permute.xlu0 0
        %3066 = vperm.xlu0 %3065, %v3026
        %v3067 = vpop.permute.xlu0 %3066
        %3070 = vset.pattern.permute.xlu0 0
        %3071 = vperm.xlu0 %3070, %v3027
        %v3072 = vpop.permute.xlu0 %3071
        %3075 = vset.pattern.permute.xlu0 0
        %3076 = vperm.xlu0 %3075, %v3028
        %v3077 = vpop.permute.xlu0 %3076
        %3080 = vset.pattern.permute.xlu0 0
        %3081 = vperm.xlu0 %3080, %v3029
        %v3082 = vpop.permute.xlu0 %3081
        %3085 = vset.pattern.permute.xlu0 0
        %3086 = vperm.xlu0 %3085, %v3030
        %v3087 = vpop.permute.xlu0 %3086
        %3090 = vset.pattern.permute.xlu0 0
        %3091 = vperm.xlu0 %3090, %v3031
        %v3092 = vpop.permute.xlu0 %3091
        %3095 = vset.pattern.permute.xlu0 0
        %3096 = vperm.xlu0 %3095, %v3032
        %v3097 = vpop.permute.xlu0 %3096
        %3100 = vset.pattern.permute.xlu0 0
        %3101 = vperm.xlu0 %3100, %v3033
        %v3102 = vpop.permute.xlu0 %3101
        %3105 = vset.pattern.permute.xlu0 0
        %3106 = vperm.xlu0 %3105, %v3034
        %v3107 = vpop.permute.xlu0 %3106
        %3110 = vset.pattern.permute.xlu0 0
        %3111 = vperm.xlu0 %3110, %v3035
        %v3112 = vpop.permute.xlu0 %3111
        %3115 = vset.pattern.permute.xlu0 0
        %3116 = vperm.xlu0 %3115, %v3036
        %v3117 = vpop.permute.xlu0 %3116
        %v3120 = vlaneseq
        %v3121 = vshrl.u32 %v3120, 7
        %v3122 = vsub.s32 0, %v3121
        %v3123 = vrot.slane %v3038, %v3122
        %v3124 = vlaneseq
        %v3125 = vshrl.u32 %v3124, 7
        %v3126 = vsub.s32 1, %v3125
        %v3127 = vrot.slane %v3038, %v3126
        %v3130 = vadd.f32 %v3042, %v3123
        %v3131 = vadd.f32 %v3042, %v3127
        %v3132 = vadd.f32 %v3047, %v3123
        %v3133 = vadd.f32 %v3047, %v3127
        %v3134 = vadd.f32 %v3052, %v3123
        %v3135 = vadd.f32 %v3052, %v3127
        %v3136 = vadd.f32 %v3057, %v3123
        %v3137 = vadd.f32 %v3057, %v3127
        %v3138 = vadd.f32 %v3062, %v3123
        %v3139 = vadd.f32 %v3062, %v3127
        %v3140 = vadd.f32 %v3067, %v3123
        %v3141 = vadd.f32 %v3067, %v3127
        %v3142 = vadd.f32 %v3072, %v3123
        %v3143 = vadd.f32 %v3072, %v3127
        %v3144 = vadd.f32 %v3077, %v3123
        %v3145 = vadd.f32 %v3077, %v3127
        %v3146 = vadd.f32 %v3082, %v3123
        %v3147 = vadd.f32 %v3082, %v3127
        %v3148 = vadd.f32 %v3087, %v3123
        %v3149 = vadd.f32 %v3087, %v3127
        %v3150 = vadd.f32 %v3092, %v3123
        %v3151 = vadd.f32 %v3092, %v3127
        %v3152 = vadd.f32 %v3097, %v3123
        %v3153 = vadd.f32 %v3097, %v3127
        %v3154 = vadd.f32 %v3102, %v3123
        %v3155 = vadd.f32 %v3102, %v3127
        %v3156 = vadd.f32 %v3107, %v3123
        %v3157 = vadd.f32 %v3107, %v3127
        %v3158 = vadd.f32 %v3112, %v3123
        %v3159 = vadd.f32 %v3112, %v3127
        %v3160 = vadd.f32 %v3117, %v3123
        %v3161 = vadd.f32 %v3117, %v3127
        %v3162 = vmul.f32 %v3130, 0.2
        %v3163 = vmul.f32 %v3131, 0.2
        %v3164 = vmul.f32 %v3132, 0.2
        %v3165 = vmul.f32 %v3133, 0.2
        %v3166 = vmul.f32 %v3134, 0.2
        %v3167 = vmul.f32 %v3135, 0.2
        %v3168 = vmul.f32 %v3136, 0.2
        %v3169 = vmul.f32 %v3137, 0.2
        %v3170 = vmul.f32 %v3138, 0.2
        %v3171 = vmul.f32 %v3139, 0.2
        %v3172 = vmul.f32 %v3140, 0.2
        %v3173 = vmul.f32 %v3141, 0.2
        %v3174 = vmul.f32 %v3142, 0.2
        %v3175 = vmul.f32 %v3143, 0.2
        %v3176 = vmul.f32 %v3144, 0.2
        %v3177 = vmul.f32 %v3145, 0.2
        %v3178 = vmul.f32 %v3146, 0.2
        %v3179 = vmul.f32 %v3147, 0.2
        %v3180 = vmul.f32 %v3148, 0.2
        %v3181 = vmul.f32 %v3149, 0.2
        %v3182 = vmul.f32 %v3150, 0.2
        %v3183 = vmul.f32 %v3151, 0.2
        %v3184 = vmul.f32 %v3152, 0.2
        %v3185 = vmul.f32 %v3153, 0.2
        %v3186 = vmul.f32 %v3154, 0.2
        %v3187 = vmul.f32 %v3155, 0.2
        %v3188 = vmul.f32 %v3156, 0.2
        %v3189 = vmul.f32 %v3157, 0.2
        %v3190 = vmul.f32 %v3158, 0.2
        %v3191 = vmul.f32 %v3159, 0.2
        %v3192 = vmul.f32 %v3160, 0.2
        %v3193 = vmul.f32 %v3161, 0.2
        %v3194 = vmax.f32 %v3130, %v3162
        %v3195 = vmax.f32 %v3131, %v3163
        %v3196 = vmax.f32 %v3132, %v3164
        %v3197 = vmax.f32 %v3133, %v3165
        %v3198 = vmax.f32 %v3134, %v3166
        %v3199 = vmax.f32 %v3135, %v3167
        %v3200 = vmax.f32 %v3136, %v3168
        %v3201 = vmax.f32 %v3137, %v3169
        %v3202 = vmax.f32 %v3138, %v3170
        %v3203 = vmax.f32 %v3139, %v3171
        %v3204 = vmax.f32 %v3140, %v3172
        %v3205 = vmax.f32 %v3141, %v3173
        %v3206 = vmax.f32 %v3142, %v3174
        %v3207 = vmax.f32 %v3143, %v3175
        %v3208 = vmax.f32 %v3144, %v3176
        %v3209 = vmax.f32 %v3145, %v3177
        %v3210 = vmax.f32 %v3146, %v3178
        %v3211 = vmax.f32 %v3147, %v3179
        %v3212 = vmax.f32 %v3148, %v3180
        %v3213 = vmax.f32 %v3149, %v3181
        %v3214 = vmax.f32 %v3150, %v3182
        %v3215 = vmax.f32 %v3151, %v3183
        %v3216 = vmax.f32 %v3152, %v3184
        %v3217 = vmax.f32 %v3153, %v3185
        %v3218 = vmax.f32 %v3154, %v3186
        %v3219 = vmax.f32 %v3155, %v3187
        %v3220 = vmax.f32 %v3156, %v3188
        %v3221 = vmax.f32 %v3157, %v3189
        %v3222 = vmax.f32 %v3158, %v3190
        %v3223 = vmax.f32 %v3159, %v3191
        %v3224 = vmax.f32 %v3160, %v3192
        %v3225 = vmax.f32 %v3161, %v3193
        %s3226 = scalar_lea.vmem %s636, 192 [#allocation3]
        %v3227 = vld [vmem:[%s3226] sm:$0xff]
        %v3228 = vld [vmem:[%s3226 + $0x8] sm:$0xff]
        %v3229 = vld [vmem:[%s3226 + $0x10] sm:$0xff]
        %v3230 = vld [vmem:[%s3226 + $0x18] sm:$0xff]
        %v3231 = vld [vmem:[%s3226 + $0x20] sm:$0xff]
        %v3232 = vld [vmem:[%s3226 + $0x28] sm:$0xff]
        %v3233 = vld [vmem:[%s3226 + $0x30] sm:$0xff]
        %v3234 = vld [vmem:[%s3226 + $0x38] sm:$0xff]
        %vm3235 = vnez %v3227
        %vm3236 = vnez %v3228
        %vm3237 = vnez %v3229
        %vm3238 = vnez %v3230
        %vm3239 = vnez %v3231
        %vm3240 = vnez %v3232
        %vm3241 = vnez %v3233
        %vm3242 = vnez %v3234
        %v3243 = vsel %vm3235, 16843009, 0
        %v3244 = vsel %vm3236, 16843009, 0
        %v3245 = vsel %vm3237, 16843009, 0
        %v3246 = vsel %vm3238, 16843009, 0
        %v3247 = vsel %vm3239, 16843009, 0
        %v3248 = vsel %vm3240, 16843009, 0
        %v3249 = vsel %vm3241, 16843009, 0
        %v3250 = vsel %vm3242, 16843009, 0
        %v3251 = vunpack.c.0.s8 %v3243
        %v3252 = vunpack.c.0.s8 %v3244
        %v3253 = vunpack.c.1.s8 %v3243
        %v3254 = vunpack.c.1.s8 %v3244
        %v3255 = vunpack.c.2.s8 %v3243
        %v3256 = vunpack.c.2.s8 %v3244
        %v3257 = vunpack.c.3.s8 %v3243
        %v3258 = vunpack.c.3.s8 %v3244
        %v3259 = vunpack.c.0.s8 %v3245
        %v3260 = vunpack.c.0.s8 %v3246
        %v3261 = vunpack.c.1.s8 %v3245
        %v3262 = vunpack.c.1.s8 %v3246
        %v3263 = vunpack.c.2.s8 %v3245
        %v3264 = vunpack.c.2.s8 %v3246
        %v3265 = vunpack.c.3.s8 %v3245
        %v3266 = vunpack.c.3.s8 %v3246
        %v3267 = vunpack.c.0.s8 %v3247
        %v3268 = vunpack.c.0.s8 %v3248
        %v3269 = vunpack.c.1.s8 %v3247
        %v3270 = vunpack.c.1.s8 %v3248
        %v3271 = vunpack.c.2.s8 %v3247
        %v3272 = vunpack.c.2.s8 %v3248
        %v3273 = vunpack.c.3.s8 %v3247
        %v3274 = vunpack.c.3.s8 %v3248
        %v3275 = vunpack.c.0.s8 %v3249
        %v3276 = vunpack.c.0.s8 %v3250
        %v3277 = vunpack.c.1.s8 %v3249
        %v3278 = vunpack.c.1.s8 %v3250
        %v3279 = vunpack.c.2.s8 %v3249
        %v3280 = vunpack.c.2.s8 %v3250
        %v3281 = vunpack.c.3.s8 %v3249
        %v3282 = vunpack.c.3.s8 %v3250
        %v3283 = vpack.c.b16 %v3252, %v3251
        %v3284 = vpack.c.b8 %v3283, %v3283
        %v3285 = vpack.c.b16 %v3254, %v3253
        %v3286 = vpack.c.b8 %v3285, %v3285
        %v3287 = vpack.c.b16 %v3256, %v3255
        %v3288 = vpack.c.b8 %v3287, %v3287
        %v3289 = vpack.c.b16 %v3258, %v3257
        %v3290 = vpack.c.b8 %v3289, %v3289
        %v3291 = vpack.c.b16 %v3260, %v3259
        %v3292 = vpack.c.b8 %v3291, %v3291
        %v3293 = vpack.c.b16 %v3262, %v3261
        %v3294 = vpack.c.b8 %v3293, %v3293
        %v3295 = vpack.c.b16 %v3264, %v3263
        %v3296 = vpack.c.b8 %v3295, %v3295
        %v3297 = vpack.c.b16 %v3266, %v3265
        %v3298 = vpack.c.b8 %v3297, %v3297
        %v3299 = vpack.c.b16 %v3268, %v3267
        %v3300 = vpack.c.b8 %v3299, %v3299
        %v3301 = vpack.c.b16 %v3270, %v3269
        %v3302 = vpack.c.b8 %v3301, %v3301
        %v3303 = vpack.c.b16 %v3272, %v3271
        %v3304 = vpack.c.b8 %v3303, %v3303
        %v3305 = vpack.c.b16 %v3274, %v3273
        %v3306 = vpack.c.b8 %v3305, %v3305
        %v3307 = vpack.c.b16 %v3276, %v3275
        %v3308 = vpack.c.b8 %v3307, %v3307
        %v3309 = vpack.c.b16 %v3278, %v3277
        %v3310 = vpack.c.b8 %v3309, %v3309
        %v3311 = vpack.c.b16 %v3280, %v3279
        %v3312 = vpack.c.b8 %v3311, %v3311
        %v3313 = vpack.c.b16 %v3282, %v3281
        %v3314 = vpack.c.b8 %v3313, %v3313
        %vm3315 = vnez %v3284
        %vm3316 = vnez %v3286
        %vm3317 = vnez %v3288
        %vm3318 = vnez %v3290
        %vm3319 = vnez %v3292
        %vm3320 = vnez %v3294
        %vm3321 = vnez %v3296
        %vm3322 = vnez %v3298
        %vm3323 = vnez %v3300
        %vm3324 = vnez %v3302
        %vm3325 = vnez %v3304
        %vm3326 = vnez %v3306
        %vm3327 = vnez %v3308
        %vm3328 = vnez %v3310
        %vm3329 = vnez %v3312
        %vm3330 = vnez %v3314
        %v3331 = vsel %vm3315, 16843009, 0
        %v3332 = vsel %vm3316, 16843009, 0
        %v3333 = vsel %vm3317, 16843009, 0
        %v3334 = vsel %vm3318, 16843009, 0
        %v3335 = vsel %vm3319, 16843009, 0
        %v3336 = vsel %vm3320, 16843009, 0
        %v3337 = vsel %vm3321, 16843009, 0
        %v3338 = vsel %vm3322, 16843009, 0
        %v3339 = vsel %vm3323, 16843009, 0
        %v3340 = vsel %vm3324, 16843009, 0
        %v3341 = vsel %vm3325, 16843009, 0
        %v3342 = vsel %vm3326, 16843009, 0
        %v3343 = vsel %vm3327, 16843009, 0
        %v3344 = vsel %vm3328, 16843009, 0
        %v3345 = vsel %vm3329, 16843009, 0
        %v3346 = vsel %vm3330, 16843009, 0
        %v3347 = vunpack.c.0.s8 %v3331
        %v3348 = vunpack.c.1.s8 %v3331
        %v3349 = vunpack.c.0.s8 %v3332
        %v3350 = vunpack.c.1.s8 %v3332
        %v3351 = vunpack.c.0.s8 %v3333
        %v3352 = vunpack.c.1.s8 %v3333
        %v3353 = vunpack.c.0.s8 %v3334
        %v3354 = vunpack.c.1.s8 %v3334
        %v3355 = vunpack.c.0.s8 %v3335
        %v3356 = vunpack.c.1.s8 %v3335
        %v3357 = vunpack.c.0.s8 %v3336
        %v3358 = vunpack.c.1.s8 %v3336
        %v3359 = vunpack.c.0.s8 %v3337
        %v3360 = vunpack.c.1.s8 %v3337
        %v3361 = vunpack.c.0.s8 %v3338
        %v3362 = vunpack.c.1.s8 %v3338
        %v3363 = vunpack.c.0.s8 %v3339
        %v3364 = vunpack.c.1.s8 %v3339
        %v3365 = vunpack.c.0.s8 %v3340
        %v3366 = vunpack.c.1.s8 %v3340
        %v3367 = vunpack.c.0.s8 %v3341
        %v3368 = vunpack.c.1.s8 %v3341
        %v3369 = vunpack.c.0.s8 %v3342
        %v3370 = vunpack.c.1.s8 %v3342
        %v3371 = vunpack.c.0.s8 %v3343
        %v3372 = vunpack.c.1.s8 %v3343
        %v3373 = vunpack.c.0.s8 %v3344
        %v3374 = vunpack.c.1.s8 %v3344
        %v3375 = vunpack.c.0.s8 %v3345
        %v3376 = vunpack.c.1.s8 %v3345
        %v3377 = vunpack.c.0.s8 %v3346
        %v3378 = vunpack.c.1.s8 %v3346
        %vm3379 = vcmp.ne.s32.totalorder %v3347, 0
        %vm3380 = vcmp.ne.s32.totalorder %v3348, 0
        %vm3381 = vcmp.ne.s32.totalorder %v3349, 0
        %vm3382 = vcmp.ne.s32.totalorder %v3350, 0
        %vm3383 = vcmp.ne.s32.totalorder %v3351, 0
        %vm3384 = vcmp.ne.s32.totalorder %v3352, 0
        %vm3385 = vcmp.ne.s32.totalorder %v3353, 0
        %vm3386 = vcmp.ne.s32.totalorder %v3354, 0
        %vm3387 = vcmp.ne.s32.totalorder %v3355, 0
        %vm3388 = vcmp.ne.s32.totalorder %v3356, 0
        %vm3389 = vcmp.ne.s32.totalorder %v3357, 0
        %vm3390 = vcmp.ne.s32.totalorder %v3358, 0
        %vm3391 = vcmp.ne.s32.totalorder %v3359, 0
        %vm3392 = vcmp.ne.s32.totalorder %v3360, 0
        %vm3393 = vcmp.ne.s32.totalorder %v3361, 0
        %vm3394 = vcmp.ne.s32.totalorder %v3362, 0
        %vm3395 = vcmp.ne.s32.totalorder %v3363, 0
        %vm3396 = vcmp.ne.s32.totalorder %v3364, 0
        %vm3397 = vcmp.ne.s32.totalorder %v3365, 0
        %vm3398 = vcmp.ne.s32.totalorder %v3366, 0
        %vm3399 = vcmp.ne.s32.totalorder %v3367, 0
        %vm3400 = vcmp.ne.s32.totalorder %v3368, 0
        %vm3401 = vcmp.ne.s32.totalorder %v3369, 0
        %vm3402 = vcmp.ne.s32.totalorder %v3370, 0
        %vm3403 = vcmp.ne.s32.totalorder %v3371, 0
        %vm3404 = vcmp.ne.s32.totalorder %v3372, 0
        %vm3405 = vcmp.ne.s32.totalorder %v3373, 0
        %vm3406 = vcmp.ne.s32.totalorder %v3374, 0
        %vm3407 = vcmp.ne.s32.totalorder %v3375, 0
        %vm3408 = vcmp.ne.s32.totalorder %v3376, 0
        %vm3409 = vcmp.ne.s32.totalorder %v3377, 0
        %vm3410 = vcmp.ne.s32.totalorder %v3378, 0
        %v3411 = vsel %vm3379, %v3194, -1e+30
        %v3412 = vsel %vm3380, %v3195, -1e+30
        %v3413 = vsel %vm3381, %v3196, -1e+30
        %v3414 = vsel %vm3382, %v3197, -1e+30
        %v3415 = vsel %vm3383, %v3198, -1e+30
        %v3416 = vsel %vm3384, %v3199, -1e+30
        %v3417 = vsel %vm3385, %v3200, -1e+30
        %v3418 = vsel %vm3386, %v3201, -1e+30
        %v3419 = vsel %vm3387, %v3202, -1e+30
        %v3420 = vsel %vm3388, %v3203, -1e+30
        %v3421 = vsel %vm3389, %v3204, -1e+30
        %v3422 = vsel %vm3390, %v3205, -1e+30
        %v3423 = vsel %vm3391, %v3206, -1e+30
        %v3424 = vsel %vm3392, %v3207, -1e+30
        %v3425 = vsel %vm3393, %v3208, -1e+30
        %v3426 = vsel %vm3394, %v3209, -1e+30
        %v3427 = vsel %vm3395, %v3210, -1e+30
        %v3428 = vsel %vm3396, %v3211, -1e+30
        %v3429 = vsel %vm3397, %v3212, -1e+30
        %v3430 = vsel %vm3398, %v3213, -1e+30
        %v3431 = vsel %vm3399, %v3214, -1e+30
        %v3432 = vsel %vm3400, %v3215, -1e+30
        %v3433 = vsel %vm3401, %v3216, -1e+30
        %v3434 = vsel %vm3402, %v3217, -1e+30
        %v3435 = vsel %vm3403, %v3218, -1e+30
        %v3436 = vsel %vm3404, %v3219, -1e+30
        %v3437 = vsel %vm3405, %v3220, -1e+30
        %v3438 = vsel %vm3406, %v3221, -1e+30
        %v3439 = vsel %vm3407, %v3222, -1e+30
        %v3440 = vsel %vm3408, %v3223, -1e+30
        %v3441 = vsel %vm3409, %v3224, -1e+30
        %v3442 = vsel %vm3410, %v3225, -1e+30
        %v3443 = vmax.f32 %v3411, %v3412
        %3444 = vmax.xlane.f32.xlu0 %v3443
        %v3445 = vpop.xlane.xlu0 %3444
        %v3446 = vmax.f32 %v3413, %v3414
        %3447 = vmax.xlane.f32.xlu0 %v3446
        %v3448 = vpop.xlane.xlu0 %3447
        %v3449 = vmax.f32 %v3415, %v3416
        %3450 = vmax.xlane.f32.xlu0 %v3449
        %v3451 = vpop.xlane.xlu0 %3450
        %v3452 = vmax.f32 %v3417, %v3418
        %3453 = vmax.xlane.f32.xlu0 %v3452
        %v3454 = vpop.xlane.xlu0 %3453
        %v3455 = vmax.f32 %v3419, %v3420
        %3456 = vmax.xlane.f32.xlu0 %v3455
        %v3457 = vpop.xlane.xlu0 %3456
        %v3458 = vmax.f32 %v3421, %v3422
        %3459 = vmax.xlane.f32.xlu0 %v3458
        %v3460 = vpop.xlane.xlu0 %3459
        %v3461 = vmax.f32 %v3423, %v3424
        %3462 = vmax.xlane.f32.xlu0 %v3461
        %v3463 = vpop.xlane.xlu0 %3462
        %v3464 = vmax.f32 %v3425, %v3426
        %3465 = vmax.xlane.f32.xlu0 %v3464
        %v3466 = vpop.xlane.xlu0 %3465
        %v3467 = vmax.f32 %v3427, %v3428
        %3468 = vmax.xlane.f32.xlu0 %v3467
        %v3469 = vpop.xlane.xlu0 %3468
        %v3470 = vmax.f32 %v3429, %v3430
        %3471 = vmax.xlane.f32.xlu0 %v3470
        %v3472 = vpop.xlane.xlu0 %3471
        %v3473 = vmax.f32 %v3431, %v3432
        %3474 = vmax.xlane.f32.xlu0 %v3473
        %v3475 = vpop.xlane.xlu0 %3474
        %v3476 = vmax.f32 %v3433, %v3434
        %3477 = vmax.xlane.f32.xlu0 %v3476
        %v3478 = vpop.xlane.xlu0 %3477
        %v3479 = vmax.f32 %v3435, %v3436
        %3480 = vmax.xlane.f32.xlu0 %v3479
        %v3481 = vpop.xlane.xlu0 %3480
        %v3482 = vmax.f32 %v3437, %v3438
        %3483 = vmax.xlane.f32.xlu0 %v3482
        %v3484 = vpop.xlane.xlu0 %3483
        %v3485 = vmax.f32 %v3439, %v3440
        %3486 = vmax.xlane.f32.xlu0 %v3485
        %v3487 = vpop.xlane.xlu0 %3486
        %v3488 = vmax.f32 %v3441, %v3442
        %3489 = vmax.xlane.f32.xlu0 %v3488
        %v3490 = vpop.xlane.xlu0 %3489
        %v3491 = vsub.f32 %v3411, %v3445
        %v3492 = vsub.f32 %v3412, %v3445
        %v3493 = vsub.f32 %v3413, %v3448
        %v3494 = vsub.f32 %v3414, %v3448
        %v3495 = vsub.f32 %v3415, %v3451
        %v3496 = vsub.f32 %v3416, %v3451
        %v3497 = vsub.f32 %v3417, %v3454
        %v3498 = vsub.f32 %v3418, %v3454
        %v3499 = vsub.f32 %v3419, %v3457
        %v3500 = vsub.f32 %v3420, %v3457
        %v3501 = vsub.f32 %v3421, %v3460
        %v3502 = vsub.f32 %v3422, %v3460
        %v3503 = vsub.f32 %v3423, %v3463
        %v3504 = vsub.f32 %v3424, %v3463
        %v3505 = vsub.f32 %v3425, %v3466
        %v3506 = vsub.f32 %v3426, %v3466
        %v3507 = vsub.f32 %v3427, %v3469
        %v3508 = vsub.f32 %v3428, %v3469
        %v3509 = vsub.f32 %v3429, %v3472
        %v3510 = vsub.f32 %v3430, %v3472
        %v3511 = vsub.f32 %v3431, %v3475
        %v3512 = vsub.f32 %v3432, %v3475
        %v3513 = vsub.f32 %v3433, %v3478
        %v3514 = vsub.f32 %v3434, %v3478
        %v3515 = vsub.f32 %v3435, %v3481
        %v3516 = vsub.f32 %v3436, %v3481
        %v3517 = vsub.f32 %v3437, %v3484
        %v3518 = vsub.f32 %v3438, %v3484
        %v3519 = vsub.f32 %v3439, %v3487
        %v3520 = vsub.f32 %v3440, %v3487
        %v3521 = vsub.f32 %v3441, %v3490
        %v3522 = vsub.f32 %v3442, %v3490
        %v3523 = vmul.f32 %v3491, 1.442695
        %v3524 = vpow.pop %v3523
        %v3525 = vmul.f32 %v3492, 1.442695
        %v3526 = vpow.pop %v3525
        %v3527 = vmul.f32 %v3493, 1.442695
        %v3528 = vpow.pop %v3527
        %v3529 = vmul.f32 %v3494, 1.442695
        %v3530 = vpow.pop %v3529
        %v3531 = vmul.f32 %v3495, 1.442695
        %v3532 = vpow.pop %v3531
        %v3533 = vmul.f32 %v3496, 1.442695
        %v3534 = vpow.pop %v3533
        %v3535 = vmul.f32 %v3497, 1.442695
        %v3536 = vpow.pop %v3535
        %v3537 = vmul.f32 %v3498, 1.442695
        %v3538 = vpow.pop %v3537
        %v3539 = vmul.f32 %v3499, 1.442695
        %v3540 = vpow.pop %v3539
        %v3541 = vmul.f32 %v3500, 1.442695
        %v3542 = vpow.pop %v3541
        %v3543 = vmul.f32 %v3501, 1.442695
        %v3544 = vpow.pop %v3543
        %v3545 = vmul.f32 %v3502, 1.442695
        %v3546 = vpow.pop %v3545
        %v3547 = vmul.f32 %v3503, 1.442695
        %v3548 = vpow.pop %v3547
        %v3549 = vmul.f32 %v3504, 1.442695
        %v3550 = vpow.pop %v3549
        %v3551 = vmul.f32 %v3505, 1.442695
        %v3552 = vpow.pop %v3551
        %v3553 = vmul.f32 %v3506, 1.442695
        %v3554 = vpow.pop %v3553
        %v3555 = vmul.f32 %v3507, 1.442695
        %v3556 = vpow.pop %v3555
        %v3557 = vmul.f32 %v3508, 1.442695
        %v3558 = vpow.pop %v3557
        %v3559 = vmul.f32 %v3509, 1.442695
        %v3560 = vpow.pop %v3559
        %v3561 = vmul.f32 %v3510, 1.442695
        %v3562 = vpow.pop %v3561
        %v3563 = vmul.f32 %v3511, 1.442695
        %v3564 = vpow.pop %v3563
        %v3565 = vmul.f32 %v3512, 1.442695
        %v3566 = vpow.pop %v3565
        %v3567 = vmul.f32 %v3513, 1.442695
        %v3568 = vpow.pop %v3567
        %v3569 = vmul.f32 %v3514, 1.442695
        %v3570 = vpow.pop %v3569
        %v3571 = vmul.f32 %v3515, 1.442695
        %v3572 = vpow.pop %v3571
        %v3573 = vmul.f32 %v3516, 1.442695
        %v3574 = vpow.pop %v3573
        %v3575 = vmul.f32 %v3517, 1.442695
        %v3576 = vpow.pop %v3575
        %v3577 = vmul.f32 %v3518, 1.442695
        %v3578 = vpow.pop %v3577
        %v3579 = vmul.f32 %v3519, 1.442695
        %v3580 = vpow.pop %v3579
        %v3581 = vmul.f32 %v3520, 1.442695
        %v3582 = vpow.pop %v3581
        %v3583 = vmul.f32 %v3521, 1.442695
        %v3584 = vpow.pop %v3583
        %v3585 = vmul.f32 %v3522, 1.442695
        %v3586 = vpow.pop %v3585
        %v3587 = vadd.f32 %v3524, %v3526
        %3588 = vadd.xlane.f32.xlu0 %v3587
        %v3589 = vpop.xlane.xlu0 %3588
        %v3590 = vadd.f32 %v3528, %v3530
        %3591 = vadd.xlane.f32.xlu0 %v3590
        %v3592 = vpop.xlane.xlu0 %3591
        %v3593 = vadd.f32 %v3532, %v3534
        %3594 = vadd.xlane.f32.xlu0 %v3593
        %v3595 = vpop.xlane.xlu0 %3594
        %v3596 = vadd.f32 %v3536, %v3538
        %3597 = vadd.xlane.f32.xlu0 %v3596
        %v3598 = vpop.xlane.xlu0 %3597
        %v3599 = vadd.f32 %v3540, %v3542
        %3600 = vadd.xlane.f32.xlu0 %v3599
        %v3601 = vpop.xlane.xlu0 %3600
        %v3602 = vadd.f32 %v3544, %v3546
        %3603 = vadd.xlane.f32.xlu0 %v3602
        %v3604 = vpop.xlane.xlu0 %3603
        %v3605 = vadd.f32 %v3548, %v3550
        %3606 = vadd.xlane.f32.xlu0 %v3605
        %v3607 = vpop.xlane.xlu0 %3606
        %v3608 = vadd.f32 %v3552, %v3554
        %3609 = vadd.xlane.f32.xlu0 %v3608
        %v3610 = vpop.xlane.xlu0 %3609
        %v3611 = vadd.f32 %v3556, %v3558
        %3612 = vadd.xlane.f32.xlu0 %v3611
        %v3613 = vpop.xlane.xlu0 %3612
        %v3614 = vadd.f32 %v3560, %v3562
        %3615 = vadd.xlane.f32.xlu0 %v3614
        %v3616 = vpop.xlane.xlu0 %3615
        %v3617 = vadd.f32 %v3564, %v3566
        %3618 = vadd.xlane.f32.xlu0 %v3617
        %v3619 = vpop.xlane.xlu0 %3618
        %v3620 = vadd.f32 %v3568, %v3570
        %3621 = vadd.xlane.f32.xlu0 %v3620
        %v3622 = vpop.xlane.xlu0 %3621
        %v3623 = vadd.f32 %v3572, %v3574
        %3624 = vadd.xlane.f32.xlu0 %v3623
        %v3625 = vpop.xlane.xlu0 %3624
        %v3626 = vadd.f32 %v3576, %v3578
        %3627 = vadd.xlane.f32.xlu0 %v3626
        %v3628 = vpop.xlane.xlu0 %3627
        %v3629 = vadd.f32 %v3580, %v3582
        %3630 = vadd.xlane.f32.xlu0 %v3629
        %v3631 = vpop.xlane.xlu0 %3630
        %v3632 = vadd.f32 %v3584, %v3586
        %3633 = vadd.xlane.f32.xlu0 %v3632
        %v3634 = vpop.xlane.xlu0 %3633
        %v3635 = vrcp.pop %v3589
        %v3636 = vrcp.pop %v3592
        %v3637 = vrcp.pop %v3595
        %v3638 = vrcp.pop %v3598
        %v3639 = vrcp.pop %v3601
        %v3640 = vrcp.pop %v3604
        %v3641 = vrcp.pop %v3607
        %v3642 = vrcp.pop %v3610
        %v3643 = vrcp.pop %v3613
        %v3644 = vrcp.pop %v3616
        %v3645 = vrcp.pop %v3619
        %v3646 = vrcp.pop %v3622
        %v3647 = vrcp.pop %v3625
        %v3648 = vrcp.pop %v3628
        %v3649 = vrcp.pop %v3631
        %v3650 = vrcp.pop %v3634
        %v3651 = vmul.f32 %v3524, %v3635
        %v3652 = vmul.f32 %v3526, %v3635
        %v3653 = vmul.f32 %v3528, %v3636
        %v3654 = vmul.f32 %v3530, %v3636
        %v3655 = vmul.f32 %v3532, %v3637
        %v3656 = vmul.f32 %v3534, %v3637
        %v3657 = vmul.f32 %v3536, %v3638
        %v3658 = vmul.f32 %v3538, %v3638
        %v3659 = vmul.f32 %v3540, %v3639
        %v3660 = vmul.f32 %v3542, %v3639
        %v3661 = vmul.f32 %v3544, %v3640
        %v3662 = vmul.f32 %v3546, %v3640
        %v3663 = vmul.f32 %v3548, %v3641
        %v3664 = vmul.f32 %v3550, %v3641
        %v3665 = vmul.f32 %v3552, %v3642
        %v3666 = vmul.f32 %v3554, %v3642
        %v3667 = vmul.f32 %v3556, %v3643
        %v3668 = vmul.f32 %v3558, %v3643
        %v3669 = vmul.f32 %v3560, %v3644
        %v3670 = vmul.f32 %v3562, %v3644
        %v3671 = vmul.f32 %v3564, %v3645
        %v3672 = vmul.f32 %v3566, %v3645
        %v3673 = vmul.f32 %v3568, %v3646
        %v3674 = vmul.f32 %v3570, %v3646
        %v3675 = vmul.f32 %v3572, %v3647
        %v3676 = vmul.f32 %v3574, %v3647
        %v3677 = vmul.f32 %v3576, %v3648
        %v3678 = vmul.f32 %v3578, %v3648
        %v3679 = vmul.f32 %v3580, %v3649
        %v3680 = vmul.f32 %v3582, %v3649
        %v3681 = vmul.f32 %v3584, %v3650
        %v3682 = vmul.f32 %v3586, %v3650
        %v3683 = vpack.c.bf16 %v3653, %v3651
        %v3684 = vpack.c.bf16 %v3654, %v3652
        %v3685 = vpack.c.bf16 %v3657, %v3655
        %v3686 = vpack.c.bf16 %v3658, %v3656
        %v3687 = vpack.c.bf16 %v3661, %v3659
        %v3688 = vpack.c.bf16 %v3662, %v3660
        %v3689 = vpack.c.bf16 %v3665, %v3663
        %v3690 = vpack.c.bf16 %v3666, %v3664
        %v3691 = vpack.c.bf16 %v3669, %v3667
        %v3692 = vpack.c.bf16 %v3670, %v3668
        %v3693 = vpack.c.bf16 %v3673, %v3671
        %v3694 = vpack.c.bf16 %v3674, %v3672
        %v3695 = vpack.c.bf16 %v3677, %v3675
        %v3696 = vpack.c.bf16 %v3678, %v3676
        %v3697 = vpack.c.bf16 %v3681, %v3679
        %v3698 = vpack.c.bf16 %v3682, %v3680
        %v3715 = vunpack.c.l.b16 %v3683
        %v3716 = vunpack.c.l.b16 %v3684
        %v3717 = vunpack.c.h.b16 %v3683
        %v3718 = vunpack.c.h.b16 %v3684
        %v3719 = vunpack.c.l.b16 %v3685
        %v3720 = vunpack.c.l.b16 %v3686
        %v3721 = vunpack.c.h.b16 %v3685
        %v3722 = vunpack.c.h.b16 %v3686
        %v3723 = vunpack.c.l.b16 %v3687
        %v3724 = vunpack.c.l.b16 %v3688
        %v3725 = vunpack.c.h.b16 %v3687
        %v3726 = vunpack.c.h.b16 %v3688
        %v3727 = vunpack.c.l.b16 %v3689
        %v3728 = vunpack.c.l.b16 %v3690
        %v3729 = vunpack.c.h.b16 %v3689
        %v3730 = vunpack.c.h.b16 %v3690
        %v3731 = vunpack.c.l.b16 %v3691
        %v3732 = vunpack.c.l.b16 %v3692
        %v3733 = vunpack.c.h.b16 %v3691
        %v3734 = vunpack.c.h.b16 %v3692
        %v3735 = vunpack.c.l.b16 %v3693
        %v3736 = vunpack.c.l.b16 %v3694
        %v3737 = vunpack.c.h.b16 %v3693
        %v3738 = vunpack.c.h.b16 %v3694
        %v3739 = vunpack.c.l.b16 %v3695
        %v3740 = vunpack.c.l.b16 %v3696
        %v3741 = vunpack.c.h.b16 %v3695
        %v3742 = vunpack.c.h.b16 %v3696
        %v3743 = vunpack.c.l.b16 %v3697
        %v3744 = vunpack.c.l.b16 %v3698
        %v3745 = vunpack.c.h.b16 %v3697
        %v3746 = vunpack.c.h.b16 %v3698
        %v3747 = vpack.c.b16 %v3716, %v3715
        %v3748 = vpack.c.b16 %v3718, %v3717
        %v3749 = vpack.c.b16 %v3720, %v3719
        %v3750 = vpack.c.b16 %v3722, %v3721
        %v3751 = vpack.c.b16 %v3724, %v3723
        %v3752 = vpack.c.b16 %v3726, %v3725
        %v3753 = vpack.c.b16 %v3728, %v3727
        %v3754 = vpack.c.b16 %v3730, %v3729
        %v3755 = vpack.c.b16 %v3732, %v3731
        %v3756 = vpack.c.b16 %v3734, %v3733
        %v3757 = vpack.c.b16 %v3736, %v3735
        %v3758 = vpack.c.b16 %v3738, %v3737
        %v3759 = vpack.c.b16 %v3740, %v3739
        %v3760 = vpack.c.b16 %v3742, %v3741
        %v3761 = vpack.c.b16 %v3744, %v3743
        %v3762 = vpack.c.b16 %v3746, %v3745
        %3779 = vst [vmem:[#allocation2 + $0x18] sm:$0xff] %v3747
        %3780 = vst [vmem:[#allocation2 + $0x38] sm:$0xff] %v3748
        %3781 = vst [vmem:[#allocation2 + $0x58] sm:$0xff] %v3749
        %3782 = vst [vmem:[#allocation2 + $0x78] sm:$0xff] %v3750
        %3783 = vst [vmem:[#allocation2 + $0x98] sm:$0xff] %v3751
        %3784 = vst [vmem:[#allocation2 + $0xb8] sm:$0xff] %v3752
        %3785 = vst [vmem:[#allocation2 + $0xd8] sm:$0xff] %v3753
        %3786 = vst [vmem:[#allocation2 + $0xf8] sm:$0xff] %v3754
        %3787 = vst [vmem:[#allocation2 + $0x118] sm:$0xff] %v3755
        %3788 = vst [vmem:[#allocation2 + $0x138] sm:$0xff] %v3756
        %3789 = vst [vmem:[#allocation2 + $0x158] sm:$0xff] %v3757
        %3790 = vst [vmem:[#allocation2 + $0x178] sm:$0xff] %v3758
        %3791 = vst [vmem:[#allocation2 + $0x198] sm:$0xff] %v3759
        %3792 = vst [vmem:[#allocation2 + $0x1b8] sm:$0xff] %v3760
        %3793 = vst [vmem:[#allocation2 + $0x1d8] sm:$0xff] %v3761
        %3794 = vst [vmem:[#allocation2 + $0x1f8] sm:$0xff] %v3762
        %v3795 = vld [vmem:[%s687] sm:$0xff]
        %v3796 = vld [vmem:[%s687 + $0x8] sm:$0xff]
        %v3797 = vld [vmem:[%s687 + $0x10] sm:$0xff]
        %v3798 = vld [vmem:[%s687 + $0x18] sm:$0xff]
        %v3799 = vld [vmem:[%s687 + $0x20] sm:$0xff]
        %v3800 = vld [vmem:[%s687 + $0x28] sm:$0xff]
        %v3801 = vld [vmem:[%s687 + $0x30] sm:$0xff]
        %v3802 = vld [vmem:[%s687 + $0x38] sm:$0xff]
        %v3803 = vld [vmem:[%s687 + $0x40] sm:$0xff]
        %v3804 = vld [vmem:[%s687 + $0x48] sm:$0xff]
        %v3805 = vld [vmem:[%s687 + $0x50] sm:$0xff]
        %v3806 = vld [vmem:[%s687 + $0x58] sm:$0xff]
        %v3807 = vld [vmem:[%s687 + $0x60] sm:$0xff]
        %v3808 = vld [vmem:[%s687 + $0x68] sm:$0xff]
        %v3809 = vld [vmem:[%s687 + $0x70] sm:$0xff]
        %v3810 = vld [vmem:[%s687 + $0x78] sm:$0xff]
        %v3811 = vld [vmem:[#allocation2] sm:$0xff]
        %v3812 = vld [vmem:[#allocation2 + $0x8] sm:$0xff]
        %v3813 = vld [vmem:[#allocation2 + $0x10] sm:$0xff]
        %v3814 = vld [vmem:[#allocation2 + $0x18] sm:$0xff]
        %v3815 = vld [vmem:[#allocation2 + $0x20] sm:$0xff]
        %v3816 = vld [vmem:[#allocation2 + $0x28] sm:$0xff]
        %v3817 = vld [vmem:[#allocation2 + $0x30] sm:$0xff]
        %v3818 = vld [vmem:[#allocation2 + $0x38] sm:$0xff]
        %v3819 = vld [vmem:[#allocation2 + $0x40] sm:$0xff]
        %v3820 = vld [vmem:[#allocation2 + $0x48] sm:$0xff]
        %v3821 = vld [vmem:[#allocation2 + $0x50] sm:$0xff]
        %v3822 = vld [vmem:[#allocation2 + $0x58] sm:$0xff]
        %v3823 = vld [vmem:[#allocation2 + $0x60] sm:$0xff]
        %v3824 = vld [vmem:[#allocation2 + $0x68] sm:$0xff]
        %v3825 = vld [vmem:[#allocation2 + $0x70] sm:$0xff]
        %v3826 = vld [vmem:[#allocation2 + $0x78] sm:$0xff]
        %v3827 = vld [vmem:[#allocation2 + $0x80] sm:$0xff]
        %v3828 = vld [vmem:[#allocation2 + $0x88] sm:$0xff]
        %v3829 = vld [vmem:[#allocation2 + $0x90] sm:$0xff]
        %v3830 = vld [vmem:[#allocation2 + $0x98] sm:$0xff]
        %v3831 = vld [vmem:[#allocation2 + $0xa0] sm:$0xff]
        %v3832 = vld [vmem:[#allocation2 + $0xa8] sm:$0xff]
        %v3833 = vld [vmem:[#allocation2 + $0xb0] sm:$0xff]
        %v3834 = vld [vmem:[#allocation2 + $0xb8] sm:$0xff]
        %v3835 = vld [vmem:[#allocation2 + $0xc0] sm:$0xff]
        %v3836 = vld [vmem:[#allocation2 + $0xc8] sm:$0xff]
        %v3837 = vld [vmem:[#allocation2 + $0xd0] sm:$0xff]
        %v3838 = vld [vmem:[#allocation2 + $0xd8] sm:$0xff]
        %v3839 = vld [vmem:[#allocation2 + $0xe0] sm:$0xff]
        %v3840 = vld [vmem:[#allocation2 + $0xe8] sm:$0xff]
        %v3841 = vld [vmem:[#allocation2 + $0xf0] sm:$0xff]
        %v3842 = vld [vmem:[#allocation2 + $0xf8] sm:$0xff]
        %v3843 = vld [vmem:[#allocation2 + $0x100] sm:$0xff]
        %v3844 = vld [vmem:[#allocation2 + $0x108] sm:$0xff]
        %v3845 = vld [vmem:[#allocation2 + $0x110] sm:$0xff]
        %v3846 = vld [vmem:[#allocation2 + $0x118] sm:$0xff]
        %v3847 = vld [vmem:[#allocation2 + $0x120] sm:$0xff]
        %v3848 = vld [vmem:[#allocation2 + $0x128] sm:$0xff]
        %v3849 = vld [vmem:[#allocation2 + $0x130] sm:$0xff]
        %v3850 = vld [vmem:[#allocation2 + $0x138] sm:$0xff]
        %v3851 = vld [vmem:[#allocation2 + $0x140] sm:$0xff]
        %v3852 = vld [vmem:[#allocation2 + $0x148] sm:$0xff]
        %v3853 = vld [vmem:[#allocation2 + $0x150] sm:$0xff]
        %v3854 = vld [vmem:[#allocation2 + $0x158] sm:$0xff]
        %v3855 = vld [vmem:[#allocation2 + $0x160] sm:$0xff]
        %v3856 = vld [vmem:[#allocation2 + $0x168] sm:$0xff]
        %v3857 = vld [vmem:[#allocation2 + $0x170] sm:$0xff]
        %v3858 = vld [vmem:[#allocation2 + $0x178] sm:$0xff]
        %v3859 = vld [vmem:[#allocation2 + $0x180] sm:$0xff]
        %v3860 = vld [vmem:[#allocation2 + $0x188] sm:$0xff]
        %v3861 = vld [vmem:[#allocation2 + $0x190] sm:$0xff]
        %v3862 = vld [vmem:[#allocation2 + $0x198] sm:$0xff]
        %v3863 = vld [vmem:[#allocation2 + $0x1a0] sm:$0xff]
        %v3864 = vld [vmem:[#allocation2 + $0x1a8] sm:$0xff]
        %v3865 = vld [vmem:[#allocation2 + $0x1b0] sm:$0xff]
        %v3866 = vld [vmem:[#allocation2 + $0x1b8] sm:$0xff]
        %v3867 = vld [vmem:[#allocation2 + $0x1c0] sm:$0xff]
        %v3868 = vld [vmem:[#allocation2 + $0x1c8] sm:$0xff]
        %v3869 = vld [vmem:[#allocation2 + $0x1d0] sm:$0xff]
        %v3870 = vld [vmem:[#allocation2 + $0x1d8] sm:$0xff]
        %v3871 = vld [vmem:[#allocation2 + $0x1e0] sm:$0xff]
        %v3872 = vld [vmem:[#allocation2 + $0x1e8] sm:$0xff]
        %v3873 = vld [vmem:[#allocation2 + $0x1f0] sm:$0xff]
        %v3874 = vld [vmem:[#allocation2 + $0x1f8] sm:$0xff]
        %v3875 = vld [vmem:[%s4] sm:$0xf]
        %v3876 = vld [vmem:[%s4 + $0x4] sm:$0xf]
        %v3877 = vld [vmem:[%s4 + $0x8] sm:$0xf]
        %v3878 = vld [vmem:[%s4 + $0xc] sm:$0xf]
        %v3879 = vld [vmem:[%s4 + $0x10] sm:$0xf]
        %v3880 = vld [vmem:[%s4 + $0x14] sm:$0xf]
        %v3881 = vld [vmem:[%s4 + $0x18] sm:$0xf]
        %v3882 = vld [vmem:[%s4 + $0x1c] sm:$0xf]
        %v3883 = vld [vmem:[%s4 + $0x20] sm:$0xf]
        %v3884 = vld [vmem:[%s4 + $0x24] sm:$0xf]
        %v3885 = vld [vmem:[%s4 + $0x28] sm:$0xf]
        %v3886 = vld [vmem:[%s4 + $0x2c] sm:$0xf]
        %v3887 = vld [vmem:[%s4 + $0x30] sm:$0xf]
        %v3888 = vld [vmem:[%s4 + $0x34] sm:$0xf]
        %v3889 = vld [vmem:[%s4 + $0x38] sm:$0xf]
        %v3890 = vld [vmem:[%s4 + $0x3c] sm:$0xf]
        %v3891 = vld [vmem:[%s4 + $0x40] sm:$0xf]
        %v3892 = vld [vmem:[%s4 + $0x44] sm:$0xf]
        %v3893 = vld [vmem:[%s4 + $0x48] sm:$0xf]
        %v3894 = vld [vmem:[%s4 + $0x4c] sm:$0xf]
        %v3895 = vld [vmem:[%s4 + $0x50] sm:$0xf]
        %v3896 = vld [vmem:[%s4 + $0x54] sm:$0xf]
        %v3897 = vld [vmem:[%s4 + $0x58] sm:$0xf]
        %v3898 = vld [vmem:[%s4 + $0x5c] sm:$0xf]
        %v3899 = vld [vmem:[%s4 + $0x60] sm:$0xf]
        %v3900 = vld [vmem:[%s4 + $0x64] sm:$0xf]
        %v3901 = vld [vmem:[%s4 + $0x68] sm:$0xf]
        %v3902 = vld [vmem:[%s4 + $0x6c] sm:$0xf]
        %v3903 = vld [vmem:[%s4 + $0x70] sm:$0xf]
        %v3904 = vld [vmem:[%s4 + $0x74] sm:$0xf]
        %v3905 = vld [vmem:[%s4 + $0x78] sm:$0xf]
        %v3906 = vld [vmem:[%s4 + $0x7c] sm:$0xf]
        %v3907 = vld [vmem:[%s4 + $0x80] sm:$0xf]
        %v3908 = vld [vmem:[%s4 + $0x84] sm:$0xf]
        %v3909 = vld [vmem:[%s4 + $0x88] sm:$0xf]
        %v3910 = vld [vmem:[%s4 + $0x8c] sm:$0xf]
        %v3911 = vld [vmem:[%s4 + $0x90] sm:$0xf]
        %v3912 = vld [vmem:[%s4 + $0x94] sm:$0xf]
        %v3913 = vld [vmem:[%s4 + $0x98] sm:$0xf]
        %v3914 = vld [vmem:[%s4 + $0x9c] sm:$0xf]
        %v3915 = vld [vmem:[%s4 + $0xa0] sm:$0xf]
        %v3916 = vld [vmem:[%s4 + $0xa4] sm:$0xf]
        %v3917 = vld [vmem:[%s4 + $0xa8] sm:$0xf]
        %v3918 = vld [vmem:[%s4 + $0xac] sm:$0xf]
        %v3919 = vld [vmem:[%s4 + $0xb0] sm:$0xf]
        %v3920 = vld [vmem:[%s4 + $0xb4] sm:$0xf]
        %v3921 = vld [vmem:[%s4 + $0xb8] sm:$0xf]
        %v3922 = vld [vmem:[%s4 + $0xbc] sm:$0xf]
        %v3923 = vld [vmem:[%s4 + $0xc0] sm:$0xf]
        %v3924 = vld [vmem:[%s4 + $0xc4] sm:$0xf]
        %v3925 = vld [vmem:[%s4 + $0xc8] sm:$0xf]
        %v3926 = vld [vmem:[%s4 + $0xcc] sm:$0xf]
        %v3927 = vld [vmem:[%s4 + $0xd0] sm:$0xf]
        %v3928 = vld [vmem:[%s4 + $0xd4] sm:$0xf]
        %v3929 = vld [vmem:[%s4 + $0xd8] sm:$0xf]
        %v3930 = vld [vmem:[%s4 + $0xdc] sm:$0xf]
        %v3931 = vld [vmem:[%s4 + $0xe0] sm:$0xf]
        %v3932 = vld [vmem:[%s4 + $0xe4] sm:$0xf]
        %v3933 = vld [vmem:[%s4 + $0xe8] sm:$0xf]
        %v3934 = vld [vmem:[%s4 + $0xec] sm:$0xf]
        %v3935 = vld [vmem:[%s4 + $0xf0] sm:$0xf]
        %v3936 = vld [vmem:[%s4 + $0xf4] sm:$0xf]
        %v3937 = vld [vmem:[%s4 + $0xf8] sm:$0xf]
        %v3938 = vld [vmem:[%s4 + $0xfc] sm:$0xf]
        %v3939 = vld [vmem:[%s4 + $0x100] sm:$0xf]
        %v3940 = vld [vmem:[%s4 + $0x104] sm:$0xf]
        %v3941 = vld [vmem:[%s4 + $0x108] sm:$0xf]
        %v3942 = vld [vmem:[%s4 + $0x10c] sm:$0xf]
        %v3943 = vld [vmem:[%s4 + $0x110] sm:$0xf]
        %v3944 = vld [vmem:[%s4 + $0x114] sm:$0xf]
        %v3945 = vld [vmem:[%s4 + $0x118] sm:$0xf]
        %v3946 = vld [vmem:[%s4 + $0x11c] sm:$0xf]
        %v3947 = vld [vmem:[%s4 + $0x120] sm:$0xf]
        %v3948 = vld [vmem:[%s4 + $0x124] sm:$0xf]
        %v3949 = vld [vmem:[%s4 + $0x128] sm:$0xf]
        %v3950 = vld [vmem:[%s4 + $0x12c] sm:$0xf]
        %v3951 = vld [vmem:[%s4 + $0x130] sm:$0xf]
        %v3952 = vld [vmem:[%s4 + $0x134] sm:$0xf]
        %v3953 = vld [vmem:[%s4 + $0x138] sm:$0xf]
        %v3954 = vld [vmem:[%s4 + $0x13c] sm:$0xf]
        %v3955 = vld [vmem:[%s4 + $0x140] sm:$0xf]
        %v3956 = vld [vmem:[%s4 + $0x144] sm:$0xf]
        %v3957 = vld [vmem:[%s4 + $0x148] sm:$0xf]
        %v3958 = vld [vmem:[%s4 + $0x14c] sm:$0xf]
        %v3959 = vld [vmem:[%s4 + $0x150] sm:$0xf]
        %v3960 = vld [vmem:[%s4 + $0x154] sm:$0xf]
        %v3961 = vld [vmem:[%s4 + $0x158] sm:$0xf]
        %v3962 = vld [vmem:[%s4 + $0x15c] sm:$0xf]
        %v3963 = vld [vmem:[%s4 + $0x160] sm:$0xf]
        %v3964 = vld [vmem:[%s4 + $0x164] sm:$0xf]
        %v3965 = vld [vmem:[%s4 + $0x168] sm:$0xf]
        %v3966 = vld [vmem:[%s4 + $0x16c] sm:$0xf]
        %v3967 = vld [vmem:[%s4 + $0x170] sm:$0xf]
        %v3968 = vld [vmem:[%s4 + $0x174] sm:$0xf]
        %v3969 = vld [vmem:[%s4 + $0x178] sm:$0xf]
        %v3970 = vld [vmem:[%s4 + $0x17c] sm:$0xf]
        %v3971 = vld [vmem:[%s4 + $0x180] sm:$0xf]
        %v3972 = vld [vmem:[%s4 + $0x184] sm:$0xf]
        %v3973 = vld [vmem:[%s4 + $0x188] sm:$0xf]
        %v3974 = vld [vmem:[%s4 + $0x18c] sm:$0xf]
        %v3975 = vld [vmem:[%s4 + $0x190] sm:$0xf]
        %v3976 = vld [vmem:[%s4 + $0x194] sm:$0xf]
        %v3977 = vld [vmem:[%s4 + $0x198] sm:$0xf]
        %v3978 = vld [vmem:[%s4 + $0x19c] sm:$0xf]
        %v3979 = vld [vmem:[%s4 + $0x1a0] sm:$0xf]
        %v3980 = vld [vmem:[%s4 + $0x1a4] sm:$0xf]
        %v3981 = vld [vmem:[%s4 + $0x1a8] sm:$0xf]
        %v3982 = vld [vmem:[%s4 + $0x1ac] sm:$0xf]
        %v3983 = vld [vmem:[%s4 + $0x1b0] sm:$0xf]
        %v3984 = vld [vmem:[%s4 + $0x1b4] sm:$0xf]
        %v3985 = vld [vmem:[%s4 + $0x1b8] sm:$0xf]
        %v3986 = vld [vmem:[%s4 + $0x1bc] sm:$0xf]
        %v3987 = vld [vmem:[%s4 + $0x1c0] sm:$0xf]
        %v3988 = vld [vmem:[%s4 + $0x1c4] sm:$0xf]
        %v3989 = vld [vmem:[%s4 + $0x1c8] sm:$0xf]
        %v3990 = vld [vmem:[%s4 + $0x1cc] sm:$0xf]
        %v3991 = vld [vmem:[%s4 + $0x1d0] sm:$0xf]
        %v3992 = vld [vmem:[%s4 + $0x1d4] sm:$0xf]
        %v3993 = vld [vmem:[%s4 + $0x1d8] sm:$0xf]
        %v3994 = vld [vmem:[%s4 + $0x1dc] sm:$0xf]
        %v3995 = vld [vmem:[%s4 + $0x1e0] sm:$0xf]
        %v3996 = vld [vmem:[%s4 + $0x1e4] sm:$0xf]
        %v3997 = vld [vmem:[%s4 + $0x1e8] sm:$0xf]
        %v3998 = vld [vmem:[%s4 + $0x1ec] sm:$0xf]
        %v3999 = vld [vmem:[%s4 + $0x1f0] sm:$0xf]
        %v4000 = vld [vmem:[%s4 + $0x1f4] sm:$0xf]
        %v4001 = vld [vmem:[%s4 + $0x1f8] sm:$0xf]
        %v4002 = vld [vmem:[%s4 + $0x1fc] sm:$0xf]
        %v4067 = vunpack.c.l.b16 %v3811
        %v4068 = vunpack.c.h.b16 %v3811
        %v4069 = vunpack.c.l.b16 %v3812
        %v4070 = vunpack.c.h.b16 %v3812
        %v4071 = vunpack.c.l.b16 %v3813
        %v4072 = vunpack.c.h.b16 %v3813
        %v4073 = vunpack.c.l.b16 %v3814
        %v4074 = vunpack.c.h.b16 %v3814
        %v4075 = vunpack.c.l.b16 %v3815
        %v4076 = vunpack.c.h.b16 %v3815
        %v4077 = vunpack.c.l.b16 %v3816
        %v4078 = vunpack.c.h.b16 %v3816
        %v4079 = vunpack.c.l.b16 %v3817
        %v4080 = vunpack.c.h.b16 %v3817
        %v4081 = vunpack.c.l.b16 %v3818
        %v4082 = vunpack.c.h.b16 %v3818
        %v4083 = vunpack.c.l.b16 %v3819
        %v4084 = vunpack.c.h.b16 %v3819
        %v4085 = vunpack.c.l.b16 %v3820
        %v4086 = vunpack.c.h.b16 %v3820
        %v4087 = vunpack.c.l.b16 %v3821
        %v4088 = vunpack.c.h.b16 %v3821
        %v4089 = vunpack.c.l.b16 %v3822
        %v4090 = vunpack.c.h.b16 %v3822
        %v4091 = vunpack.c.l.b16 %v3823
        %v4092 = vunpack.c.h.b16 %v3823
        %v4093 = vunpack.c.l.b16 %v3824
        %v4094 = vunpack.c.h.b16 %v3824
        %v4095 = vunpack.c.l.b16 %v3825
        %v4096 = vunpack.c.h.b16 %v3825
        %v4097 = vunpack.c.l.b16 %v3826
        %v4098 = vunpack.c.h.b16 %v3826
        %v4099 = vunpack.c.l.b16 %v3827
        %v4100 = vunpack.c.h.b16 %v3827
        %v4101 = vunpack.c.l.b16 %v3828
        %v4102 = vunpack.c.h.b16 %v3828
        %v4103 = vunpack.c.l.b16 %v3829
        %v4104 = vunpack.c.h.b16 %v3829
        %v4105 = vunpack.c.l.b16 %v3830
        %v4106 = vunpack.c.h.b16 %v3830
        %v4107 = vunpack.c.l.b16 %v3831
        %v4108 = vunpack.c.h.b16 %v3831
        %v4109 = vunpack.c.l.b16 %v3832
        %v4110 = vunpack.c.h.b16 %v3832
        %v4111 = vunpack.c.l.b16 %v3833
        %v4112 = vunpack.c.h.b16 %v3833
        %v4113 = vunpack.c.l.b16 %v3834
        %v4114 = vunpack.c.h.b16 %v3834
        %v4115 = vunpack.c.l.b16 %v3835
        %v4116 = vunpack.c.h.b16 %v3835
        %v4117 = vunpack.c.l.b16 %v3836
        %v4118 = vunpack.c.h.b16 %v3836
        %v4119 = vunpack.c.l.b16 %v3837
        %v4120 = vunpack.c.h.b16 %v3837
        %v4121 = vunpack.c.l.b16 %v3838
        %v4122 = vunpack.c.h.b16 %v3838
        %v4123 = vunpack.c.l.b16 %v3839
        %v4124 = vunpack.c.h.b16 %v3839
        %v4125 = vunpack.c.l.b16 %v3840
        %v4126 = vunpack.c.h.b16 %v3840
        %v4127 = vunpack.c.l.b16 %v3841
        %v4128 = vunpack.c.h.b16 %v3841
        %v4129 = vunpack.c.l.b16 %v3842
        %v4130 = vunpack.c.h.b16 %v3842
        %v4131 = vunpack.c.l.b16 %v3843
        %v4132 = vunpack.c.h.b16 %v3843
        %v4133 = vunpack.c.l.b16 %v3844
        %v4134 = vunpack.c.h.b16 %v3844
        %v4135 = vunpack.c.l.b16 %v3845
        %v4136 = vunpack.c.h.b16 %v3845
        %v4137 = vunpack.c.l.b16 %v3846
        %v4138 = vunpack.c.h.b16 %v3846
        %v4139 = vunpack.c.l.b16 %v3847
        %v4140 = vunpack.c.h.b16 %v3847
        %v4141 = vunpack.c.l.b16 %v3848
        %v4142 = vunpack.c.h.b16 %v3848
        %v4143 = vunpack.c.l.b16 %v3849
        %v4144 = vunpack.c.h.b16 %v3849
        %v4145 = vunpack.c.l.b16 %v3850
        %v4146 = vunpack.c.h.b16 %v3850
        %v4147 = vunpack.c.l.b16 %v3851
        %v4148 = vunpack.c.h.b16 %v3851
        %v4149 = vunpack.c.l.b16 %v3852
        %v4150 = vunpack.c.h.b16 %v3852
        %v4151 = vunpack.c.l.b16 %v3853
        %v4152 = vunpack.c.h.b16 %v3853
        %v4153 = vunpack.c.l.b16 %v3854
        %v4154 = vunpack.c.h.b16 %v3854
        %v4155 = vunpack.c.l.b16 %v3855
        %v4156 = vunpack.c.h.b16 %v3855
        %v4157 = vunpack.c.l.b16 %v3856
        %v4158 = vunpack.c.h.b16 %v3856
        %v4159 = vunpack.c.l.b16 %v3857
        %v4160 = vunpack.c.h.b16 %v3857
        %v4161 = vunpack.c.l.b16 %v3858
        %v4162 = vunpack.c.h.b16 %v3858
        %v4163 = vunpack.c.l.b16 %v3859
        %v4164 = vunpack.c.h.b16 %v3859
        %v4165 = vunpack.c.l.b16 %v3860
        %v4166 = vunpack.c.h.b16 %v3860
        %v4167 = vunpack.c.l.b16 %v3861
        %v4168 = vunpack.c.h.b16 %v3861
        %v4169 = vunpack.c.l.b16 %v3862
        %v4170 = vunpack.c.h.b16 %v3862
        %v4171 = vunpack.c.l.b16 %v3863
        %v4172 = vunpack.c.h.b16 %v3863
        %v4173 = vunpack.c.l.b16 %v3864
        %v4174 = vunpack.c.h.b16 %v3864
        %v4175 = vunpack.c.l.b16 %v3865
        %v4176 = vunpack.c.h.b16 %v3865
        %v4177 = vunpack.c.l.b16 %v3866
        %v4178 = vunpack.c.h.b16 %v3866
        %v4179 = vunpack.c.l.b16 %v3867
        %v4180 = vunpack.c.h.b16 %v3867
        %v4181 = vunpack.c.l.b16 %v3868
        %v4182 = vunpack.c.h.b16 %v3868
        %v4183 = vunpack.c.l.b16 %v3869
        %v4184 = vunpack.c.h.b16 %v3869
        %v4185 = vunpack.c.l.b16 %v3870
        %v4186 = vunpack.c.h.b16 %v3870
        %v4187 = vunpack.c.l.b16 %v3871
        %v4188 = vunpack.c.h.b16 %v3871
        %v4189 = vunpack.c.l.b16 %v3872
        %v4190 = vunpack.c.h.b16 %v3872
        %v4191 = vunpack.c.l.b16 %v3873
        %v4192 = vunpack.c.h.b16 %v3873
        %v4193 = vunpack.c.l.b16 %v3874
        %v4194 = vunpack.c.h.b16 %v3874
        %v4195 = vpack.c.b16 %v4075, %v4067
        %v4196 = vpack.c.b16 %v4076, %v4068
        %v4197 = vpack.c.b16 %v4077, %v4069
        %v4198 = vpack.c.b16 %v4078, %v4070
        %v4199 = vpack.c.b16 %v4079, %v4071
        %v4200 = vpack.c.b16 %v4080, %v4072
        %v4201 = vpack.c.b16 %v4081, %v4073
        %v4202 = vpack.c.b16 %v4082, %v4074
        %v4203 = vpack.c.b16 %v4091, %v4083
        %v4204 = vpack.c.b16 %v4092, %v4084
        %v4205 = vpack.c.b16 %v4093, %v4085
        %v4206 = vpack.c.b16 %v4094, %v4086
        %v4207 = vpack.c.b16 %v4095, %v4087
        %v4208 = vpack.c.b16 %v4096, %v4088
        %v4209 = vpack.c.b16 %v4097, %v4089
        %v4210 = vpack.c.b16 %v4098, %v4090
        %v4211 = vpack.c.b16 %v4107, %v4099
        %v4212 = vpack.c.b16 %v4108, %v4100
        %v4213 = vpack.c.b16 %v4109, %v4101
        %v4214 = vpack.c.b16 %v4110, %v4102
        %v4215 = vpack.c.b16 %v4111, %v4103
        %v4216 = vpack.c.b16 %v4112, %v4104
        %v4217 = vpack.c.b16 %v4113, %v4105
        %v4218 = vpack.c.b16 %v4114, %v4106
        %v4219 = vpack.c.b16 %v4123, %v4115
        %v4220 = vpack.c.b16 %v4124, %v4116
        %v4221 = vpack.c.b16 %v4125, %v4117
        %v4222 = vpack.c.b16 %v4126, %v4118
        %v4223 = vpack.c.b16 %v4127, %v4119
        %v4224 = vpack.c.b16 %v4128, %v4120
        %v4225 = vpack.c.b16 %v4129, %v4121
        %v4226 = vpack.c.b16 %v4130, %v4122
        %v4227 = vpack.c.b16 %v4139, %v4131
        %v4228 = vpack.c.b16 %v4140, %v4132
        %v4229 = vpack.c.b16 %v4141, %v4133
        %v4230 = vpack.c.b16 %v4142, %v4134
        %v4231 = vpack.c.b16 %v4143, %v4135
        %v4232 = vpack.c.b16 %v4144, %v4136
        %v4233 = vpack.c.b16 %v4145, %v4137
        %v4234 = vpack.c.b16 %v4146, %v4138
        %v4235 = vpack.c.b16 %v4155, %v4147
        %v4236 = vpack.c.b16 %v4156, %v4148
        %v4237 = vpack.c.b16 %v4157, %v4149
        %v4238 = vpack.c.b16 %v4158, %v4150
        %v4239 = vpack.c.b16 %v4159, %v4151
        %v4240 = vpack.c.b16 %v4160, %v4152
        %v4241 = vpack.c.b16 %v4161, %v4153
        %v4242 = vpack.c.b16 %v4162, %v4154
        %v4243 = vpack.c.b16 %v4171, %v4163
        %v4244 = vpack.c.b16 %v4172, %v4164
        %v4245 = vpack.c.b16 %v4173, %v4165
        %v4246 = vpack.c.b16 %v4174, %v4166
        %v4247 = vpack.c.b16 %v4175, %v4167
        %v4248 = vpack.c.b16 %v4176, %v4168
        %v4249 = vpack.c.b16 %v4177, %v4169
        %v4250 = vpack.c.b16 %v4178, %v4170
        %v4251 = vpack.c.b16 %v4187, %v4179
        %v4252 = vpack.c.b16 %v4188, %v4180
        %v4253 = vpack.c.b16 %v4189, %v4181
        %v4254 = vpack.c.b16 %v4190, %v4182
        %v4255 = vpack.c.b16 %v4191, %v4183
        %v4256 = vpack.c.b16 %v4192, %v4184
        %v4257 = vpack.c.b16 %v4193, %v4185
        %v4258 = vpack.c.b16 %v4194, %v4186
        %v4451 = vunpack.c.l.b16 %v3875
        %v4452 = vunpack.c.l.b16 %v3876
        %v4453 = vunpack.c.l.b16 %v3877
        %v4454 = vunpack.c.l.b16 %v3878
        %v4455 = vunpack.c.l.b16 %v3879
        %v4456 = vunpack.c.l.b16 %v3880
        %v4457 = vunpack.c.l.b16 %v3881
        %v4458 = vunpack.c.l.b16 %v3882
        %v4459 = vunpack.c.l.b16 %v3883
        %v4460 = vunpack.c.l.b16 %v3884
        %v4461 = vunpack.c.l.b16 %v3885
        %v4462 = vunpack.c.l.b16 %v3886
        %v4463 = vunpack.c.l.b16 %v3887
        %v4464 = vunpack.c.l.b16 %v3888
        %v4465 = vunpack.c.l.b16 %v3889
        %v4466 = vunpack.c.l.b16 %v3890
        %v4467 = vunpack.c.l.b16 %v3891
        %v4468 = vunpack.c.l.b16 %v3892
        %v4469 = vunpack.c.l.b16 %v3893
        %v4470 = vunpack.c.l.b16 %v3894
        %v4471 = vunpack.c.l.b16 %v3895
        %v4472 = vunpack.c.l.b16 %v3896
        %v4473 = vunpack.c.l.b16 %v3897
        %v4474 = vunpack.c.l.b16 %v3898
        %v4475 = vunpack.c.l.b16 %v3899
        %v4476 = vunpack.c.l.b16 %v3900
        %v4477 = vunpack.c.l.b16 %v3901
        %v4478 = vunpack.c.l.b16 %v3902
        %v4479 = vunpack.c.l.b16 %v3903
        %v4480 = vunpack.c.l.b16 %v3904
        %v4481 = vunpack.c.l.b16 %v3905
        %v4482 = vunpack.c.l.b16 %v3906
        %v4483 = vunpack.c.l.b16 %v3907
        %v4484 = vunpack.c.l.b16 %v3908
        %v4485 = vunpack.c.l.b16 %v3909
        %v4486 = vunpack.c.l.b16 %v3910
        %v4487 = vunpack.c.l.b16 %v3911
        %v4488 = vunpack.c.l.b16 %v3912
        %v4489 = vunpack.c.l.b16 %v3913
        %v4490 = vunpack.c.l.b16 %v3914
        %v4491 = vunpack.c.l.b16 %v3915
        %v4492 = vunpack.c.l.b16 %v3916
        %v4493 = vunpack.c.l.b16 %v3917
        %v4494 = vunpack.c.l.b16 %v3918
        %v4495 = vunpack.c.l.b16 %v3919
        %v4496 = vunpack.c.l.b16 %v3920
        %v4497 = vunpack.c.l.b16 %v3921
        %v4498 = vunpack.c.l.b16 %v3922
        %v4499 = vunpack.c.l.b16 %v3923
        %v4500 = vunpack.c.l.b16 %v3924
        %v4501 = vunpack.c.l.b16 %v3925
        %v4502 = vunpack.c.l.b16 %v3926
        %v4503 = vunpack.c.l.b16 %v3927
        %v4504 = vunpack.c.l.b16 %v3928
        %v4505 = vunpack.c.l.b16 %v3929
        %v4506 = vunpack.c.l.b16 %v3930
        %v4507 = vunpack.c.l.b16 %v3931
        %v4508 = vunpack.c.l.b16 %v3932
        %v4509 = vunpack.c.l.b16 %v3933
        %v4510 = vunpack.c.l.b16 %v3934
        %v4511 = vunpack.c.l.b16 %v3935
        %v4512 = vunpack.c.l.b16 %v3936
        %v4513 = vunpack.c.l.b16 %v3937
        %v4514 = vunpack.c.l.b16 %v3938
        %v4515 = vunpack.c.l.b16 %v3939
        %v4516 = vunpack.c.l.b16 %v3940
        %v4517 = vunpack.c.l.b16 %v3941
        %v4518 = vunpack.c.l.b16 %v3942
        %v4519 = vunpack.c.l.b16 %v3943
        %v4520 = vunpack.c.l.b16 %v3944
        %v4521 = vunpack.c.l.b16 %v3945
        %v4522 = vunpack.c.l.b16 %v3946
        %v4523 = vunpack.c.l.b16 %v3947
        %v4524 = vunpack.c.l.b16 %v3948
        %v4525 = vunpack.c.l.b16 %v3949
        %v4526 = vunpack.c.l.b16 %v3950
        %v4527 = vunpack.c.l.b16 %v3951
        %v4528 = vunpack.c.l.b16 %v3952
        %v4529 = vunpack.c.l.b16 %v3953
        %v4530 = vunpack.c.l.b16 %v3954
        %v4531 = vunpack.c.l.b16 %v3955
        %v4532 = vunpack.c.l.b16 %v3956
        %v4533 = vunpack.c.l.b16 %v3957
        %v4534 = vunpack.c.l.b16 %v3958
        %v4535 = vunpack.c.l.b16 %v3959
        %v4536 = vunpack.c.l.b16 %v3960
        %v4537 = vunpack.c.l.b16 %v3961
        %v4538 = vunpack.c.l.b16 %v3962
        %v4539 = vunpack.c.l.b16 %v3963
        %v4540 = vunpack.c.l.b16 %v3964
        %v4541 = vunpack.c.l.b16 %v3965
        %v4542 = vunpack.c.l.b16 %v3966
        %v4543 = vunpack.c.l.b16 %v3967
        %v4544 = vunpack.c.l.b16 %v3968
        %v4545 = vunpack.c.l.b16 %v3969
        %v4546 = vunpack.c.l.b16 %v3970
        %v4547 = vunpack.c.l.b16 %v3971
        %v4548 = vunpack.c.l.b16 %v3972
        %v4549 = vunpack.c.l.b16 %v3973
        %v4550 = vunpack.c.l.b16 %v3974
        %v4551 = vunpack.c.l.b16 %v3975
        %v4552 = vunpack.c.l.b16 %v3976
        %v4553 = vunpack.c.l.b16 %v3977
        %v4554 = vunpack.c.l.b16 %v3978
        %v4555 = vunpack.c.l.b16 %v3979
        %v4556 = vunpack.c.l.b16 %v3980
        %v4557 = vunpack.c.l.b16 %v3981
        %v4558 = vunpack.c.l.b16 %v3982
        %v4559 = vunpack.c.l.b16 %v3983
        %v4560 = vunpack.c.l.b16 %v3984
        %v4561 = vunpack.c.l.b16 %v3985
        %v4562 = vunpack.c.l.b16 %v3986
        %v4563 = vunpack.c.l.b16 %v3987
        %v4564 = vunpack.c.l.b16 %v3988
        %v4565 = vunpack.c.l.b16 %v3989
        %v4566 = vunpack.c.l.b16 %v3990
        %v4567 = vunpack.c.l.b16 %v3991
        %v4568 = vunpack.c.l.b16 %v3992
        %v4569 = vunpack.c.l.b16 %v3993
        %v4570 = vunpack.c.l.b16 %v3994
        %v4571 = vunpack.c.l.b16 %v3995
        %v4572 = vunpack.c.l.b16 %v3996
        %v4573 = vunpack.c.l.b16 %v3997
        %v4574 = vunpack.c.l.b16 %v3998
        %v4575 = vunpack.c.l.b16 %v3999
        %v4576 = vunpack.c.l.b16 %v4000
        %v4577 = vunpack.c.l.b16 %v4001
        %v4578 = vunpack.c.l.b16 %v4002
        %v4579 = vpack.c.b16 %v4452, %v4451
        %v4580 = vpack.c.b16 %v4454, %v4453
        %v4581 = vpack.c.b16 %v4456, %v4455
        %v4582 = vpack.c.b16 %v4458, %v4457
        %v4583 = vpack.c.b16 %v4460, %v4459
        %v4584 = vpack.c.b16 %v4462, %v4461
        %v4585 = vpack.c.b16 %v4464, %v4463
        %v4586 = vpack.c.b16 %v4466, %v4465
        %v4587 = vpack.c.b16 %v4468, %v4467
        %v4588 = vpack.c.b16 %v4470, %v4469
        %v4589 = vpack.c.b16 %v4472, %v4471
        %v4590 = vpack.c.b16 %v4474, %v4473
        %v4591 = vpack.c.b16 %v4476, %v4475
        %v4592 = vpack.c.b16 %v4478, %v4477
        %v4593 = vpack.c.b16 %v4480, %v4479
        %v4594 = vpack.c.b16 %v4482, %v4481
        %v4595 = vpack.c.b16 %v4484, %v4483
        %v4596 = vpack.c.b16 %v4486, %v4485
        %v4597 = vpack.c.b16 %v4488, %v4487
        %v4598 = vpack.c.b16 %v4490, %v4489
        %v4599 = vpack.c.b16 %v4492, %v4491
        %v4600 = vpack.c.b16 %v4494, %v4493
        %v4601 = vpack.c.b16 %v4496, %v4495
        %v4602 = vpack.c.b16 %v4498, %v4497
        %v4603 = vpack.c.b16 %v4500, %v4499
        %v4604 = vpack.c.b16 %v4502, %v4501
        %v4605 = vpack.c.b16 %v4504, %v4503
        %v4606 = vpack.c.b16 %v4506, %v4505
        %v4607 = vpack.c.b16 %v4508, %v4507
        %v4608 = vpack.c.b16 %v4510, %v4509
        %v4609 = vpack.c.b16 %v4512, %v4511
        %v4610 = vpack.c.b16 %v4514, %v4513
        %v4611 = vpack.c.b16 %v4516, %v4515
        %v4612 = vpack.c.b16 %v4518, %v4517
        %v4613 = vpack.c.b16 %v4520, %v4519
        %v4614 = vpack.c.b16 %v4522, %v4521
        %v4615 = vpack.c.b16 %v4524, %v4523
        %v4616 = vpack.c.b16 %v4526, %v4525
        %v4617 = vpack.c.b16 %v4528, %v4527
        %v4618 = vpack.c.b16 %v4530, %v4529
        %v4619 = vpack.c.b16 %v4532, %v4531
        %v4620 = vpack.c.b16 %v4534, %v4533
        %v4621 = vpack.c.b16 %v4536, %v4535
        %v4622 = vpack.c.b16 %v4538, %v4537
        %v4623 = vpack.c.b16 %v4540, %v4539
        %v4624 = vpack.c.b16 %v4542, %v4541
        %v4625 = vpack.c.b16 %v4544, %v4543
        %v4626 = vpack.c.b16 %v4546, %v4545
        %v4627 = vpack.c.b16 %v4548, %v4547
        %v4628 = vpack.c.b16 %v4550, %v4549
        %v4629 = vpack.c.b16 %v4552, %v4551
        %v4630 = vpack.c.b16 %v4554, %v4553
        %v4631 = vpack.c.b16 %v4556, %v4555
        %v4632 = vpack.c.b16 %v4558, %v4557
        %v4633 = vpack.c.b16 %v4560, %v4559
        %v4634 = vpack.c.b16 %v4562, %v4561
        %v4635 = vpack.c.b16 %v4564, %v4563
        %v4636 = vpack.c.b16 %v4566, %v4565
        %v4637 = vpack.c.b16 %v4568, %v4567
        %v4638 = vpack.c.b16 %v4570, %v4569
        %v4639 = vpack.c.b16 %v4572, %v4571
        %v4640 = vpack.c.b16 %v4574, %v4573
        %v4641 = vpack.c.b16 %v4576, %v4575
        %v4642 = vpack.c.b16 %v4578, %v4577
        %4707 = vmatprep.subr.bf16.mxu0 0
        %4708 = vmatpush1.bf16.msra.mxu0 %v4586
        %4709 = vmatprep.subr.bf16.mxu0 0
        %4710 = vmatpush1.bf16.msra.mxu0 %v4585
        %4711 = vmatprep.subr.bf16.mxu0 0
        %4712 = vmatpush1.bf16.msra.mxu0 %v4584
        %4713 = vmatprep.subr.bf16.mxu0 0
        %4714 = vmatpush1.bf16.msra.mxu0 %v4583
        %4715 = vmatprep.subr.bf16.mxu0 0
        %4716 = vmatpush1.bf16.msra.mxu0 %v4582
        %4717 = vmatprep.subr.bf16.mxu0 0
        %4718 = vmatpush1.bf16.msra.mxu0 %v4581
        %4719 = vmatprep.subr.bf16.mxu0 0
        %4720 = vmatpush1.bf16.msra.mxu0 %v4580
        %4721 = vmatprep.subr.bf16.mxu0 0
        %4722 = vmatpush1.bf16.msra.mxu0 %v4579
        %4723 = vmatprep.subr.bf16.mxu0 0
        %4724 = vmatpush2.bf16.msra.mxu0 %v4594
        %4725 = vmatprep.subr.bf16.mxu0 0
        %4726 = vmatpush2.bf16.msra.mxu0 %v4593
        %4727 = vmatprep.subr.bf16.mxu0 0
        %4728 = vmatpush2.bf16.msra.mxu0 %v4592
        %4729 = vmatprep.subr.bf16.mxu0 0
        %4730 = vmatpush2.bf16.msra.mxu0 %v4591
        %4731 = vmatprep.subr.bf16.mxu0 0
        %4732 = vmatpush2.bf16.msra.mxu0 %v4590
        %4733 = vmatprep.subr.bf16.mxu0 0
        %4734 = vmatpush2.bf16.msra.mxu0 %v4589
        %4735 = vmatprep.subr.bf16.mxu0 0
        %4736 = vmatpush2.bf16.msra.mxu0 %v4588
        %4737 = vmatprep.subr.bf16.mxu0 0
        %4738 = vmatpush2.bf16.msra.mxu0 %v4587
        %4739 = vmatprep.mubr.bf16.mxu0 %v4196
        %4740 = vmatmul.mubr.bf16.gmra.mxu0 %v4195
        %v4741 = vpop.f32.mrf.mxu0
        %v4742 = vadd.f32 0.0, %v4741
        %v4743 = vpop.f32.mrf.mxu0
        %v4744 = vpop.f32.mrf.mxu0
        %v4745 = vadd.f32 0.0, %v4744
        %v4746 = vpop.f32.mrf.mxu0
        %4747 = vmatprep.mubr.bf16.mxu0 %v4204
        %4748 = vmatmul.mubr.bf16.gmra.mxu0 %v4203
        %v4749 = vpop.f32.mrf.mxu0
        %v4750 = vadd.f32 0.0, %v4749
        %v4751 = vpop.f32.mrf.mxu0
        %v4752 = vpop.f32.mrf.mxu0
        %v4753 = vadd.f32 0.0, %v4752
        %v4754 = vpop.f32.mrf.mxu0
        %4755 = vmatprep.mubr.bf16.mxu0 %v4212
        %4756 = vmatmul.mubr.bf16.gmra.mxu0 %v4211
        %v4757 = vpop.f32.mrf.mxu0
        %v4758 = vadd.f32 0.0, %v4757
        %v4759 = vpop.f32.mrf.mxu0
        %v4760 = vpop.f32.mrf.mxu0
        %v4761 = vadd.f32 0.0, %v4760
        %v4762 = vpop.f32.mrf.mxu0
        %4763 = vmatprep.mubr.bf16.mxu0 %v4220
        %4764 = vmatmul.mubr.bf16.gmra.mxu0 %v4219
        %v4765 = vpop.f32.mrf.mxu0
        %v4766 = vadd.f32 0.0, %v4765
        %v4767 = vpop.f32.mrf.mxu0
        %v4768 = vpop.f32.mrf.mxu0
        %v4769 = vadd.f32 0.0, %v4768
        %v4770 = vpop.f32.mrf.mxu0
        %4771 = vmatprep.mubr.bf16.mxu0 %v4228
        %4772 = vmatmul.mubr.bf16.gmra.mxu0 %v4227
        %v4773 = vpop.f32.mrf.mxu0
        %v4774 = vadd.f32 0.0, %v4773
        %v4775 = vpop.f32.mrf.mxu0
        %v4776 = vpop.f32.mrf.mxu0
        %v4777 = vadd.f32 0.0, %v4776
        %v4778 = vpop.f32.mrf.mxu0
        %4779 = vmatprep.mubr.bf16.mxu0 %v4236
        %4780 = vmatmul.mubr.bf16.gmra.mxu0 %v4235
        %v4781 = vpop.f32.mrf.mxu0
        %v4782 = vadd.f32 0.0, %v4781
        %v4783 = vpop.f32.mrf.mxu0
        %v4784 = vpop.f32.mrf.mxu0
        %v4785 = vadd.f32 0.0, %v4784
        %v4786 = vpop.f32.mrf.mxu0
        %4787 = vmatprep.mubr.bf16.mxu0 %v4244
        %4788 = vmatmul.mubr.bf16.gmra.mxu0 %v4243
        %v4789 = vpop.f32.mrf.mxu0
        %v4790 = vadd.f32 0.0, %v4789
        %v4791 = vpop.f32.mrf.mxu0
        %v4792 = vpop.f32.mrf.mxu0
        %v4793 = vadd.f32 0.0, %v4792
        %v4794 = vpop.f32.mrf.mxu0
        %4795 = vmatprep.mubr.bf16.mxu0 %v4252
        %4796 = vmatmul.mubr.bf16.gmra.mxu0 %v4251
        %v4797 = vpop.f32.mrf.mxu0
        %v4798 = vadd.f32 0.0, %v4797
        %v4799 = vpop.f32.mrf.mxu0
        %v4800 = vpop.f32.mrf.mxu0
        %v4801 = vadd.f32 0.0, %v4800
        %v4802 = vpop.f32.mrf.mxu0
        %4803 = vdwg.mxu0
        %4804 = vmatprep.subr.bf16.mxu0 0
        %4805 = vmatpush1.bf16.msra.mxu0 %v4602
        %4806 = vmatprep.subr.bf16.mxu0 0
        %4807 = vmatpush1.bf16.msra.mxu0 %v4601
        %4808 = vmatprep.subr.bf16.mxu0 0
        %4809 = vmatpush1.bf16.msra.mxu0 %v4600
        %4810 = vmatprep.subr.bf16.mxu0 0
        %4811 = vmatpush1.bf16.msra.mxu0 %v4599
        %4812 = vmatprep.subr.bf16.mxu0 0
        %4813 = vmatpush1.bf16.msra.mxu0 %v4598
        %4814 = vmatprep.subr.bf16.mxu0 0
        %4815 = vmatpush1.bf16.msra.mxu0 %v4597
        %4816 = vmatprep.subr.bf16.mxu0 0
        %4817 = vmatpush1.bf16.msra.mxu0 %v4596
        %4818 = vmatprep.subr.bf16.mxu0 0
        %4819 = vmatpush1.bf16.msra.mxu0 %v4595
        %4820 = vmatprep.subr.bf16.mxu0 0
        %4821 = vmatpush2.bf16.msra.mxu0 %v4610
        %4822 = vmatprep.subr.bf16.mxu0 0
        %4823 = vmatpush2.bf16.msra.mxu0 %v4609
        %4824 = vmatprep.subr.bf16.mxu0 0
        %4825 = vmatpush2.bf16.msra.mxu0 %v4608
        %4826 = vmatprep.subr.bf16.mxu0 0
        %4827 = vmatpush2.bf16.msra.mxu0 %v4607
        %4828 = vmatprep.subr.bf16.mxu0 0
        %4829 = vmatpush2.bf16.msra.mxu0 %v4606
        %4830 = vmatprep.subr.bf16.mxu0 0
        %4831 = vmatpush2.bf16.msra.mxu0 %v4605
        %4832 = vmatprep.subr.bf16.mxu0 0
        %4833 = vmatpush2.bf16.msra.mxu0 %v4604
        %4834 = vmatprep.subr.bf16.mxu0 0
        %4835 = vmatpush2.bf16.msra.mxu0 %v4603
        %4836 = vmatprep.mubr.bf16.mxu0 %v4198
        %4837 = vmatmul.mubr.bf16.gmra.mxu0 %v4197
        %v4838 = vpop.f32.mrf.mxu0
        %v4839 = vadd.f32 %v4742, %v4838
        %v4840 = vpop.f32.mrf.mxu0
        %v4841 = vpop.f32.mrf.mxu0
        %v4842 = vadd.f32 %v4745, %v4841
        %v4843 = vpop.f32.mrf.mxu0
        %4844 = vmatprep.mubr.bf16.mxu0 %v4206
        %4845 = vmatmul.mubr.bf16.gmra.mxu0 %v4205
        %v4846 = vpop.f32.mrf.mxu0
        %v4847 = vadd.f32 %v4750, %v4846
        %v4848 = vpop.f32.mrf.mxu0
        %v4849 = vpop.f32.mrf.mxu0
        %v4850 = vadd.f32 %v4753, %v4849
        %v4851 = vpop.f32.mrf.mxu0
        %4852 = vmatprep.mubr.bf16.mxu0 %v4214
        %4853 = vmatmul.mubr.bf16.gmra.mxu0 %v4213
        %v4854 = vpop.f32.mrf.mxu0
        %v4855 = vadd.f32 %v4758, %v4854
        %v4856 = vpop.f32.mrf.mxu0
        %v4857 = vpop.f32.mrf.mxu0
        %v4858 = vadd.f32 %v4761, %v4857
        %v4859 = vpop.f32.mrf.mxu0
        %4860 = vmatprep.mubr.bf16.mxu0 %v4222
        %4861 = vmatmul.mubr.bf16.gmra.mxu0 %v4221
        %v4862 = vpop.f32.mrf.mxu0
        %v4863 = vadd.f32 %v4766, %v4862
        %v4864 = vpop.f32.mrf.mxu0
        %v4865 = vpop.f32.mrf.mxu0
        %v4866 = vadd.f32 %v4769, %v4865
        %v4867 = vpop.f32.mrf.mxu0
        %4868 = vmatprep.mubr.bf16.mxu0 %v4230
        %4869 = vmatmul.mubr.bf16.gmra.mxu0 %v4229
        %v4870 = vpop.f32.mrf.mxu0
        %v4871 = vadd.f32 %v4774, %v4870
        %v4872 = vpop.f32.mrf.mxu0
        %v4873 = vpop.f32.mrf.mxu0
        %v4874 = vadd.f32 %v4777, %v4873
        %v4875 = vpop.f32.mrf.mxu0
        %4876 = vmatprep.mubr.bf16.mxu0 %v4238
        %4877 = vmatmul.mubr.bf16.gmra.mxu0 %v4237
        %v4878 = vpop.f32.mrf.mxu0
        %v4879 = vadd.f32 %v4782, %v4878
        %v4880 = vpop.f32.mrf.mxu0
        %v4881 = vpop.f32.mrf.mxu0
        %v4882 = vadd.f32 %v4785, %v4881
        %v4883 = vpop.f32.mrf.mxu0
        %4884 = vmatprep.mubr.bf16.mxu0 %v4246
        %4885 = vmatmul.mubr.bf16.gmra.mxu0 %v4245
        %v4886 = vpop.f32.mrf.mxu0
        %v4887 = vadd.f32 %v4790, %v4886
        %v4888 = vpop.f32.mrf.mxu0
        %v4889 = vpop.f32.mrf.mxu0
        %v4890 = vadd.f32 %v4793, %v4889
        %v4891 = vpop.f32.mrf.mxu0
        %4892 = vmatprep.mubr.bf16.mxu0 %v4254
        %4893 = vmatmul.mubr.bf16.gmra.mxu0 %v4253
        %v4894 = vpop.f32.mrf.mxu0
        %v4895 = vadd.f32 %v4798, %v4894
        %v4896 = vpop.f32.mrf.mxu0
        %v4897 = vpop.f32.mrf.mxu0
        %v4898 = vadd.f32 %v4801, %v4897
        %v4899 = vpop.f32.mrf.mxu0
        %4900 = vdwg.mxu0
        %4901 = vmatprep.subr.bf16.mxu0 0
        %4902 = vmatpush1.bf16.msra.mxu0 %v4618
        %4903 = vmatprep.subr.bf16.mxu0 0
        %4904 = vmatpush1.bf16.msra.mxu0 %v4617
        %4905 = vmatprep.subr.bf16.mxu0 0
        %4906 = vmatpush1.bf16.msra.mxu0 %v4616
        %4907 = vmatprep.subr.bf16.mxu0 0
        %4908 = vmatpush1.bf16.msra.mxu0 %v4615
        %4909 = vmatprep.subr.bf16.mxu0 0
        %4910 = vmatpush1.bf16.msra.mxu0 %v4614
        %4911 = vmatprep.subr.bf16.mxu0 0
        %4912 = vmatpush1.bf16.msra.mxu0 %v4613
        %4913 = vmatprep.subr.bf16.mxu0 0
        %4914 = vmatpush1.bf16.msra.mxu0 %v4612
        %4915 = vmatprep.subr.bf16.mxu0 0
        %4916 = vmatpush1.bf16.msra.mxu0 %v4611
        %4917 = vmatprep.subr.bf16.mxu0 0
        %4918 = vmatpush2.bf16.msra.mxu0 %v4626
        %4919 = vmatprep.subr.bf16.mxu0 0
        %4920 = vmatpush2.bf16.msra.mxu0 %v4625
        %4921 = vmatprep.subr.bf16.mxu0 0
        %4922 = vmatpush2.bf16.msra.mxu0 %v4624
        %4923 = vmatprep.subr.bf16.mxu0 0
        %4924 = vmatpush2.bf16.msra.mxu0 %v4623
        %4925 = vmatprep.subr.bf16.mxu0 0
        %4926 = vmatpush2.bf16.msra.mxu0 %v4622
        %4927 = vmatprep.subr.bf16.mxu0 0
        %4928 = vmatpush2.bf16.msra.mxu0 %v4621
        %4929 = vmatprep.subr.bf16.mxu0 0
        %4930 = vmatpush2.bf16.msra.mxu0 %v4620
        %4931 = vmatprep.subr.bf16.mxu0 0
        %4932 = vmatpush2.bf16.msra.mxu0 %v4619
        %4933 = vmatprep.mubr.bf16.mxu0 %v4200
        %4934 = vmatmul.mubr.bf16.gmra.mxu0 %v4199
        %v4935 = vpop.f32.mrf.mxu0
        %v4936 = vadd.f32 %v4839, %v4935
        %v4937 = vpop.f32.mrf.mxu0
        %v4938 = vpop.f32.mrf.mxu0
        %v4939 = vadd.f32 %v4842, %v4938
        %v4940 = vpop.f32.mrf.mxu0
        %4941 = vmatprep.mubr.bf16.mxu0 %v4208
        %4942 = vmatmul.mubr.bf16.gmra.mxu0 %v4207
        %v4943 = vpop.f32.mrf.mxu0
        %v4944 = vadd.f32 %v4847, %v4943
        %v4945 = vpop.f32.mrf.mxu0
        %v4946 = vpop.f32.mrf.mxu0
        %v4947 = vadd.f32 %v4850, %v4946
        %v4948 = vpop.f32.mrf.mxu0
        %4949 = vmatprep.mubr.bf16.mxu0 %v4216
        %4950 = vmatmul.mubr.bf16.gmra.mxu0 %v4215
        %v4951 = vpop.f32.mrf.mxu0
        %v4952 = vadd.f32 %v4855, %v4951
        %v4953 = vpop.f32.mrf.mxu0
        %v4954 = vpop.f32.mrf.mxu0
        %v4955 = vadd.f32 %v4858, %v4954
        %v4956 = vpop.f32.mrf.mxu0
        %4957 = vmatprep.mubr.bf16.mxu0 %v4224
        %4958 = vmatmul.mubr.bf16.gmra.mxu0 %v4223
        %v4959 = vpop.f32.mrf.mxu0
        %v4960 = vadd.f32 %v4863, %v4959
        %v4961 = vpop.f32.mrf.mxu0
        %v4962 = vpop.f32.mrf.mxu0
        %v4963 = vadd.f32 %v4866, %v4962
        %v4964 = vpop.f32.mrf.mxu0
        %4965 = vmatprep.mubr.bf16.mxu0 %v4232
        %4966 = vmatmul.mubr.bf16.gmra.mxu0 %v4231
        %v4967 = vpop.f32.mrf.mxu0
        %v4968 = vadd.f32 %v4871, %v4967
        %v4969 = vpop.f32.mrf.mxu0
        %v4970 = vpop.f32.mrf.mxu0
        %v4971 = vadd.f32 %v4874, %v4970
        %v4972 = vpop.f32.mrf.mxu0
        %4973 = vmatprep.mubr.bf16.mxu0 %v4240
        %4974 = vmatmul.mubr.bf16.gmra.mxu0 %v4239
        %v4975 = vpop.f32.mrf.mxu0
        %v4976 = vadd.f32 %v4879, %v4975
        %v4977 = vpop.f32.mrf.mxu0
        %v4978 = vpop.f32.mrf.mxu0
        %v4979 = vadd.f32 %v4882, %v4978
        %v4980 = vpop.f32.mrf.mxu0
        %4981 = vmatprep.mubr.bf16.mxu0 %v4248
        %4982 = vmatmul.mubr.bf16.gmra.mxu0 %v4247
        %v4983 = vpop.f32.mrf.mxu0
        %v4984 = vadd.f32 %v4887, %v4983
        %v4985 = vpop.f32.mrf.mxu0
        %v4986 = vpop.f32.mrf.mxu0
        %v4987 = vadd.f32 %v4890, %v4986
        %v4988 = vpop.f32.mrf.mxu0
        %4989 = vmatprep.mubr.bf16.mxu0 %v4256
        %4990 = vmatmul.mubr.bf16.gmra.mxu0 %v4255
        %v4991 = vpop.f32.mrf.mxu0
        %v4992 = vadd.f32 %v4895, %v4991
        %v4993 = vpop.f32.mrf.mxu0
        %v4994 = vpop.f32.mrf.mxu0
        %v4995 = vadd.f32 %v4898, %v4994
        %v4996 = vpop.f32.mrf.mxu0
        %4997 = vdwg.mxu0
        %4998 = vmatprep.subr.bf16.mxu0 0
        %4999 = vmatpush1.bf16.msra.mxu0 %v4634
        %5000 = vmatprep.subr.bf16.mxu0 0
        %5001 = vmatpush1.bf16.msra.mxu0 %v4633
        %5002 = vmatprep.subr.bf16.mxu0 0
        %5003 = vmatpush1.bf16.msra.mxu0 %v4632
        %5004 = vmatprep.subr.bf16.mxu0 0
        %5005 = vmatpush1.bf16.msra.mxu0 %v4631
        %5006 = vmatprep.subr.bf16.mxu0 0
        %5007 = vmatpush1.bf16.msra.mxu0 %v4630
        %5008 = vmatprep.subr.bf16.mxu0 0
        %5009 = vmatpush1.bf16.msra.mxu0 %v4629
        %5010 = vmatprep.subr.bf16.mxu0 0
        %5011 = vmatpush1.bf16.msra.mxu0 %v4628
        %5012 = vmatprep.subr.bf16.mxu0 0
        %5013 = vmatpush1.bf16.msra.mxu0 %v4627
        %5014 = vmatprep.subr.bf16.mxu0 0
        %5015 = vmatpush2.bf16.msra.mxu0 %v4642
        %5016 = vmatprep.subr.bf16.mxu0 0
        %5017 = vmatpush2.bf16.msra.mxu0 %v4641
        %5018 = vmatprep.subr.bf16.mxu0 0
        %5019 = vmatpush2.bf16.msra.mxu0 %v4640
        %5020 = vmatprep.subr.bf16.mxu0 0
        %5021 = vmatpush2.bf16.msra.mxu0 %v4639
        %5022 = vmatprep.subr.bf16.mxu0 0
        %5023 = vmatpush2.bf16.msra.mxu0 %v4638
        %5024 = vmatprep.subr.bf16.mxu0 0
        %5025 = vmatpush2.bf16.msra.mxu0 %v4637
        %5026 = vmatprep.subr.bf16.mxu0 0
        %5027 = vmatpush2.bf16.msra.mxu0 %v4636
        %5028 = vmatprep.subr.bf16.mxu0 0
        %5029 = vmatpush2.bf16.msra.mxu0 %v4635
        %5030 = vmatprep.mubr.bf16.mxu0 %v4202
        %5031 = vmatmul.mubr.bf16.gmra.mxu0 %v4201
        %v5032 = vpop.f32.mrf.mxu0
        %v5033 = vadd.f32 %v4936, %v5032
        %v5034 = vpop.f32.mrf.mxu0
        %v5035 = vpop.f32.mrf.mxu0
        %v5036 = vadd.f32 %v4939, %v5035
        %v5037 = vpop.f32.mrf.mxu0
        %5038 = vmatprep.mubr.bf16.mxu0 %v4210
        %5039 = vmatmul.mubr.bf16.gmra.mxu0 %v4209
        %v5040 = vpop.f32.mrf.mxu0
        %v5041 = vadd.f32 %v4944, %v5040
        %v5042 = vpop.f32.mrf.mxu0
        %v5043 = vpop.f32.mrf.mxu0
        %v5044 = vadd.f32 %v4947, %v5043
        %v5045 = vpop.f32.mrf.mxu0
        %5046 = vmatprep.mubr.bf16.mxu0 %v4218
        %5047 = vmatmul.mubr.bf16.gmra.mxu0 %v4217
        %v5048 = vpop.f32.mrf.mxu0
        %v5049 = vadd.f32 %v4952, %v5048
        %v5050 = vpop.f32.mrf.mxu0
        %v5051 = vpop.f32.mrf.mxu0
        %v5052 = vadd.f32 %v4955, %v5051
        %v5053 = vpop.f32.mrf.mxu0
        %5054 = vmatprep.mubr.bf16.mxu0 %v4226
        %5055 = vmatmul.mubr.bf16.gmra.mxu0 %v4225
        %v5056 = vpop.f32.mrf.mxu0
        %v5057 = vadd.f32 %v4960, %v5056
        %v5058 = vpop.f32.mrf.mxu0
        %v5059 = vpop.f32.mrf.mxu0
        %v5060 = vadd.f32 %v4963, %v5059
        %v5061 = vpop.f32.mrf.mxu0
        %5062 = vmatprep.mubr.bf16.mxu0 %v4234
        %5063 = vmatmul.mubr.bf16.gmra.mxu0 %v4233
        %v5064 = vpop.f32.mrf.mxu0
        %v5065 = vadd.f32 %v4968, %v5064
        %v5066 = vpop.f32.mrf.mxu0
        %v5067 = vpop.f32.mrf.mxu0
        %v5068 = vadd.f32 %v4971, %v5067
        %v5069 = vpop.f32.mrf.mxu0
        %5070 = vmatprep.mubr.bf16.mxu0 %v4242
        %5071 = vmatmul.mubr.bf16.gmra.mxu0 %v4241
        %v5072 = vpop.f32.mrf.mxu0
        %v5073 = vadd.f32 %v4976, %v5072
        %v5074 = vpop.f32.mrf.mxu0
        %v5075 = vpop.f32.mrf.mxu0
        %v5076 = vadd.f32 %v4979, %v5075
        %v5077 = vpop.f32.mrf.mxu0
        %5078 = vmatprep.mubr.bf16.mxu0 %v4250
        %5079 = vmatmul.mubr.bf16.gmra.mxu0 %v4249
        %v5080 = vpop.f32.mrf.mxu0
        %v5081 = vadd.f32 %v4984, %v5080
        %v5082 = vpop.f32.mrf.mxu0
        %v5083 = vpop.f32.mrf.mxu0
        %v5084 = vadd.f32 %v4987, %v5083
        %v5085 = vpop.f32.mrf.mxu0
        %5086 = vmatprep.mubr.bf16.mxu0 %v4258
        %5087 = vmatmul.mubr.bf16.gmra.mxu0 %v4257
        %v5088 = vpop.f32.mrf.mxu0
        %v5089 = vadd.f32 %v4992, %v5088
        %v5090 = vpop.f32.mrf.mxu0
        %v5091 = vpop.f32.mrf.mxu0
        %v5092 = vadd.f32 %v4995, %v5091
        %v5093 = vpop.f32.mrf.mxu0
        %5094 = vdwg.mxu0
        %v5095 = vadd.f32 %v3795, %v5033
        %v5096 = vadd.f32 %v3796, %v5036
        %v5097 = vadd.f32 %v3797, %v5041
        %v5098 = vadd.f32 %v3798, %v5044
        %v5099 = vadd.f32 %v3799, %v5049
        %v5100 = vadd.f32 %v3800, %v5052
        %v5101 = vadd.f32 %v3801, %v5057
        %v5102 = vadd.f32 %v3802, %v5060
        %v5103 = vadd.f32 %v3803, %v5065
        %v5104 = vadd.f32 %v3804, %v5068
        %v5105 = vadd.f32 %v3805, %v5073
        %v5106 = vadd.f32 %v3806, %v5076
        %v5107 = vadd.f32 %v3807, %v5081
        %v5108 = vadd.f32 %v3808, %v5084
        %v5109 = vadd.f32 %v3809, %v5089
        %v5110 = vadd.f32 %v3810, %v5092
        %v5111 = vtanh.pop %v5095
        %v5112 = vtanh.pop %v5096
        %v5113 = vtanh.pop %v5097
        %v5114 = vtanh.pop %v5098
        %v5115 = vtanh.pop %v5099
        %v5116 = vtanh.pop %v5100
        %v5117 = vtanh.pop %v5101
        %v5118 = vtanh.pop %v5102
        %v5119 = vtanh.pop %v5103
        %v5120 = vtanh.pop %v5104
        %v5121 = vtanh.pop %v5105
        %v5122 = vtanh.pop %v5106
        %v5123 = vtanh.pop %v5107
        %v5124 = vtanh.pop %v5108
        %v5125 = vtanh.pop %v5109
        %v5126 = vtanh.pop %v5110
        %v5127 = vpack.c.bf16 %v5112, %v5111
        %v5128 = vpack.c.bf16 %v5114, %v5113
        %v5129 = vpack.c.bf16 %v5116, %v5115
        %v5130 = vpack.c.bf16 %v5118, %v5117
        %v5131 = vpack.c.bf16 %v5120, %v5119
        %v5132 = vpack.c.bf16 %v5122, %v5121
        %v5133 = vpack.c.bf16 %v5124, %v5123
        %v5134 = vpack.c.bf16 %v5126, %v5125
        %v5135 = vld [vmem:[%s5] sm:$0xf]
        %v5136 = vld [vmem:[%s5 + $0x4] sm:$0xf]
        %v5137 = vld [vmem:[%s5 + $0x8] sm:$0xf]
        %v5138 = vld [vmem:[%s5 + $0xc] sm:$0xf]
        %v5139 = vld [vmem:[%s6] sm:$0x1]
        %v5141 = vlaneseq
        %v5142 = vshrl.u32 %v5141, 7
        %v5143 = vsub.s32 0, %v5142
        %v5144 = vrot.slane %v5139, %v5143
        %v5150 = vunpack.c.l.b16 %v5135
        %v5151 = vunpack.c.l.b16 %v5136
        %v5152 = vunpack.c.l.b16 %v5137
        %v5153 = vunpack.c.l.b16 %v5138
        %v5154 = vpack.c.b16 %v5151, %v5150
        %v5155 = vpack.c.b16 %v5153, %v5152
        %vm5158 = vcmask 261120
        %v5160 = vsel %vm5158, %v5127, 0
        %v5163 = vsel %vm5158, %v5128, 0
        %v5166 = vsel %vm5158, %v5129, 0
        %v5169 = vsel %vm5158, %v5130, 0
        %v5172 = vsel %vm5158, %v5131, 0
        %v5175 = vsel %vm5158, %v5132, 0
        %v5178 = vsel %vm5158, %v5133, 0
        %v5181 = vsel %vm5158, %v5134, 0
        %5183 = vmatprep.subr.bf16.mxu0 0
        %5184 = vmatpush1.bf16.msra.mxu0 0
        %5185 = vmatprep.subr.bf16.mxu0 0
        %5186 = vmatpush1.bf16.msra.mxu0 0
        %5187 = vmatprep.subr.bf16.mxu0 0
        %5188 = vmatpush1.bf16.msra.mxu0 0
        %5189 = vmatprep.subr.bf16.mxu0 0
        %5190 = vmatpush1.bf16.msra.mxu0 0
        %5191 = vmatprep.subr.bf16.mxu0 0
        %5192 = vmatpush1.bf16.msra.mxu0 0
        %5193 = vmatprep.subr.bf16.mxu0 0
        %5194 = vmatpush1.bf16.msra.mxu0 0
        %5195 = vmatprep.subr.bf16.mxu0 0
        %5196 = vmatpush1.bf16.msra.mxu0 %v5155
        %5197 = vmatprep.subr.bf16.mxu0 0
        %5198 = vmatpush1.bf16.msra.mxu0 %v5154
        %5199 = vmatprep.subr.bf16.mxu0 0
        %5200 = vmatpush2.bf16.msra.mxu0 0
        %5201 = vmatprep.subr.bf16.mxu0 0
        %5202 = vmatpush2.bf16.msra.mxu0 0
        %5203 = vmatprep.subr.bf16.mxu0 0
        %5204 = vmatpush2.bf16.msra.mxu0 0
        %5205 = vmatprep.subr.bf16.mxu0 0
        %5206 = vmatpush2.bf16.msra.mxu0 0
        %5207 = vmatprep.subr.bf16.mxu0 0
        %5208 = vmatpush2.bf16.msra.mxu0 0
        %5209 = vmatprep.subr.bf16.mxu0 0
        %5210 = vmatpush2.bf16.msra.mxu0 0
        %5211 = vmatprep.subr.bf16.mxu0 0
        %5212 = vmatpush2.bf16.msra.mxu0 0
        %5213 = vmatprep.subr.bf16.mxu0 0
        %5214 = vmatpush2.bf16.msra.mxu0 0
        %5215 = vmatprep.mubr.bf16.mxu0 0
        %5216 = vmatmul.mubr.bf16.gmra.mxu0 %v5160
        %v5217 = vpop.f32.mrf.mxu0
        %v5218 = vadd.f32 %v5144, %v5217
        %v5219 = vpop.f32.mrf.mxu0
        %v5220 = vpop.f32.mrf.mxu0
        %v5221 = vadd.f32 %v5144, %v5220
        %v5222 = vpop.f32.mrf.mxu0
        %5223 = vmatprep.mubr.bf16.mxu0 0
        %5224 = vmatmul.mubr.bf16.gmra.mxu0 %v5163
        %v5225 = vpop.f32.mrf.mxu0
        %v5226 = vadd.f32 %v5144, %v5225
        %v5227 = vpop.f32.mrf.mxu0
        %v5228 = vpop.f32.mrf.mxu0
        %v5229 = vadd.f32 %v5144, %v5228
        %v5230 = vpop.f32.mrf.mxu0
        %5231 = vmatprep.mubr.bf16.mxu0 0
        %5232 = vmatmul.mubr.bf16.gmra.mxu0 %v5166
        %v5233 = vpop.f32.mrf.mxu0
        %v5234 = vadd.f32 %v5144, %v5233
        %v5235 = vpop.f32.mrf.mxu0
        %v5236 = vpop.f32.mrf.mxu0
        %v5237 = vadd.f32 %v5144, %v5236
        %v5238 = vpop.f32.mrf.mxu0
        %5239 = vmatprep.mubr.bf16.mxu0 0
        %5240 = vmatmul.mubr.bf16.gmra.mxu0 %v5169
        %v5241 = vpop.f32.mrf.mxu0
        %v5242 = vadd.f32 %v5144, %v5241
        %v5243 = vpop.f32.mrf.mxu0
        %v5244 = vpop.f32.mrf.mxu0
        %v5245 = vadd.f32 %v5144, %v5244
        %v5246 = vpop.f32.mrf.mxu0
        %5247 = vmatprep.mubr.bf16.mxu0 0
        %5248 = vmatmul.mubr.bf16.gmra.mxu0 %v5172
        %v5249 = vpop.f32.mrf.mxu0
        %v5250 = vadd.f32 %v5144, %v5249
        %v5251 = vpop.f32.mrf.mxu0
        %v5252 = vpop.f32.mrf.mxu0
        %v5253 = vadd.f32 %v5144, %v5252
        %v5254 = vpop.f32.mrf.mxu0
        %5255 = vmatprep.mubr.bf16.mxu0 0
        %5256 = vmatmul.mubr.bf16.gmra.mxu0 %v5175
        %v5257 = vpop.f32.mrf.mxu0
        %v5258 = vadd.f32 %v5144, %v5257
        %v5259 = vpop.f32.mrf.mxu0
        %v5260 = vpop.f32.mrf.mxu0
        %v5261 = vadd.f32 %v5144, %v5260
        %v5262 = vpop.f32.mrf.mxu0
        %5263 = vmatprep.mubr.bf16.mxu0 0
        %5264 = vmatmul.mubr.bf16.gmra.mxu0 %v5178
        %v5265 = vpop.f32.mrf.mxu0
        %v5266 = vadd.f32 %v5144, %v5265
        %v5267 = vpop.f32.mrf.mxu0
        %v5268 = vpop.f32.mrf.mxu0
        %v5269 = vadd.f32 %v5144, %v5268
        %v5270 = vpop.f32.mrf.mxu0
        %5271 = vmatprep.mubr.bf16.mxu0 0
        %5272 = vmatmul.mubr.bf16.gmra.mxu0 %v5181
        %v5273 = vpop.f32.mrf.mxu0
        %v5274 = vadd.f32 %v5144, %v5273
        %v5275 = vpop.f32.mrf.mxu0
        %v5276 = vpop.f32.mrf.mxu0
        %v5277 = vadd.f32 %v5144, %v5276
        %v5278 = vpop.f32.mrf.mxu0
        %5279 = vdwg.mxu0
        %5280 = vst.msk [vmem:[%s693] sm:$0xff] %vm5158, %v5218
        %5281 = vst.msk [vmem:[%s693 + $0x8] sm:$0xff] %vm5158, %v5221
        %5282 = vst.msk [vmem:[%s693 + $0x10] sm:$0xff] %vm5158, %v5226
        %5283 = vst.msk [vmem:[%s693 + $0x18] sm:$0xff] %vm5158, %v5229
        %5284 = vst.msk [vmem:[%s693 + $0x20] sm:$0xff] %vm5158, %v5234
        %5285 = vst.msk [vmem:[%s693 + $0x28] sm:$0xff] %vm5158, %v5237
        %5286 = vst.msk [vmem:[%s693 + $0x30] sm:$0xff] %vm5158, %v5242
        %5287 = vst.msk [vmem:[%s693 + $0x38] sm:$0xff] %vm5158, %v5245
        %5288 = vst.msk [vmem:[%s693 + $0x40] sm:$0xff] %vm5158, %v5250
        %5289 = vst.msk [vmem:[%s693 + $0x48] sm:$0xff] %vm5158, %v5253
        %5290 = vst.msk [vmem:[%s693 + $0x50] sm:$0xff] %vm5158, %v5258
        %5291 = vst.msk [vmem:[%s693 + $0x58] sm:$0xff] %vm5158, %v5261
        %5292 = vst.msk [vmem:[%s693 + $0x60] sm:$0xff] %vm5158, %v5266
        %5293 = vst.msk [vmem:[%s693 + $0x68] sm:$0xff] %vm5158, %v5269
        %5294 = vst.msk [vmem:[%s693 + $0x70] sm:$0xff] %vm5158, %v5274
        %5295 = vst.msk [vmem:[%s693 + $0x78] sm:$0xff] %vm5158, %v5277
        %s5296 = smul.u32 16, %s18
        %p5297 = scmp.lt.s32.totalorder %s5296, 31
        %s5298 = scalar_select %p5297, %s5296, 31
        %s5299 = smul.addr %s5298, 8
        %s5300 = scalar_lea.vmem %s7, %s5299
        // Predicated region
        $region110: #{sdr_layer_pallas.1} parent=100 // pred_check
          %p5301 = pneg %p198
        $region111: #{sdr_layer_pallas.1} parent=100 // pred_check_branch
          %5303 = sbr.rel (%p5301) target = $region113
        $region112: #{sdr_layer_pallas.1} parent=100 // pred_region
          %s5304 = smul.u32 16, %s18
        $region113: #{sdr_layer_pallas.1} parent=100 // pred_fallthru
          _
      $region101: #{sdr_layer_pallas.1} parent=5 // pred_fallthru
        _
      %p5305 = scmp.le.s32.totalorder 2, %s13
      // Predicated region
      $region114: #{sdr_layer_pallas.1} parent=5 // pred_check
        %p5306 = pneg %p5305
      $region115: #{sdr_layer_pallas.1} parent=5 // pred_check_branch
        %5308 = sbr.rel (%p5306) target = $region117
      $region116: #{sdr_layer_pallas.1} parent=5 // pred_region
        %s5309 = ssub.s32 %s13, 2
        // Predicated region
        $region118: #{sdr_layer_pallas.1} parent=116 // pred_check
          %p5310 = pneg %p204
        $region119: #{sdr_layer_pallas.1} parent=116 // pred_check_branch
          %5312 = sbr.rel (%p5310) target = $region121
        $region120: #{sdr_layer_pallas.1} parent=116 // pred_region
          %s5313 = smul.u32 16, %s19
          %p5314 = scmp.lt.s32.totalorder %s5313, 31
          %s5315 = scalar_select %p5314, %s5313, 31
          %s5316 = smul.addr %s5315, 8
          %s5317 = scalar_lea.vmem %s7, %s5316
        $region121: #{sdr_layer_pallas.1} parent=116 // pred_fallthru
          _
      $region117: #{sdr_layer_pallas.1} parent=5 // pred_fallthru
        _
    $region6: #{sdr_layer_pallas.1} parent=1 // loop_footer
      %s17 = sadd.s32 1, %s13
    $region7: #{sdr_layer_pallas.1} parent=1 // loop_footer_branch
      %12 = sbr.rel target = $region3
    $region8: #{sdr_layer_pallas.1} parent=1 // loop_exit
      _

</llo_original>
